<compile_context>
chip_gen: v6e
topology: v6e:2x2x1
jax: 0.10.0
libtpu: 0.0.40
codegen_flags: <defaults>
</compile_context>

<pallas_src>
import functools
import math

import jax
import jax.numpy as jnp
from jax.experimental import pallas as pl
from jax.experimental.pallas import tpu as pltpu

# ---------------- config (small, consistent with the module) ----------------
NODE_SIZE = 16
HIDDEN_NODE_SIZE = 16          # must equal NODE_SIZE (see note above)
FE_OUT = 32
FE_HID = 128
HIDDEN_SIZE = 32
NUM_GRU_LAYERS = 2
ITERS = 2
NUM_HITS = 8
ALPHA = 0.2
BATCH = 2


# ---------------------------------------------------------------------------
# Fully fused forward kernel: one grid step == one batch element through both
# message-passing iterations (edge MLP + 2-layer GRU + fn2).
# ---------------------------------------------------------------------------
def _simple_gru_kernel(
        x_ref,
        w1a_ref, w1b_ref, w1c_ref, b1_ref, w2_ref, b2_ref,   # edge MLP, stacked over ITERS
        wx0a_ref, wx0b_ref, bx0_ref, wh0_ref, bh0_ref,       # GRU layer 0
        wx1_ref, bx1_ref, wh1_ref, bh1_ref,                  # GRU layer 1
        fn2w_ref, fn2b_ref,                                  # fn2
        out_ref,
        *, alpha, n, d, fe_out, hidden, iters):
    f32 = jnp.float32
    x = x_ref[0]                                   # (N, D)
    h0 = jnp.zeros((n, hidden), f32)               # initHidden: zeros, persists across iters
    h1 = jnp.zeros((n, hidden), f32)

    def gru_update(gx, gh, h):
        r = jax.nn.sigmoid(gx[:, :hidden] + gh[:, :hidden])
        z = jax.nn.sigmoid(gx[:, hidden:2 * hidden] + gh[:, hidden:2 * hidden])
        ng = jnp.tanh(gx[:, 2 * hidden:] + r * gh[:, 2 * hidden:])
        return ng + z * (h - ng)

    for it in range(iters):                        # static unroll (ITERS == 2)
        # ---- edge / message block -------------------------------------------
        # pairs[i*N+j] = [x_i | x_j | ||x_j[:2]-x_i[:2]||]; fe1 is applied via the
        # split weight as three MXU matmuls on a full (N*N)-row LHS (no lane
        # concat, no (N,N,128) broadcast-add chain on the VPU).
        x_i = jnp.broadcast_to(x[:, None, :], (n, n, d)).reshape(n * n, d)
        x_j = jnp.broadcast_to(x[None, :, :], (n, n, d)).reshape(n * n, d)
        diff = x_j[:, :2] - x_i[:, :2]
        nrm = jnp.sqrt(jnp.sum(diff * diff, axis=1, keepdims=True))       # (N*N, 1)

        e1 = (jnp.dot(x_i, w1a_ref[it], preferred_element_type=f32)
              + jnp.dot(x_j, w1b_ref[it], preferred_element_type=f32)
              + nrm * w1c_ref[it]
              + b1_ref[it])                                                # (N*N, 128)
        e1 = jnp.where(e1 > 0, e1, alpha * e1)                             # leaky_relu
        e2 = jnp.dot(e1, w2_ref[it], preferred_element_type=f32) + b2_ref[it]
        e2 = jnp.where(e2 > 0, e2, alpha * e2)                             # (N*N, FE)
        av = jnp.sum(e2.reshape(n, n, fe_out), axis=1)                     # (N, FE), sum over j

        # ---- GRU layer 0 (input = [av | x] via split weights, no concat) ----
        gx = (jnp.dot(av, wx0a_ref[...], preferred_element_type=f32)
              + jnp.dot(x, wx0b_ref[...], preferred_element_type=f32)
              + bx0_ref[...])
        gh = jnp.dot(h0, wh0_ref[...], preferred_element_type=f32) + bh0_ref[...]
        h0 = gru_update(gx, gh, h0)

        # ---- GRU layer 1 -----------------------------------------------------
        gx = jnp.dot(h0, wx1_ref[...], preferred_element_type=f32) + bx1_ref[...]
        gh = jnp.dot(h1, wh1_ref[...], preferred_element_type=f32) + bh1_ref[...]
        h1 = gru_update(gx, gh, h1)

        # ---- fn2 + tanh --------------------------------------------------------
        x = jnp.tanh(jnp.dot(h1, fn2w_ref[...], preferred_element_type=f32)
                     + fn2b_ref[...])                                      # (N, node)

    out_ref[0] = x


def _const_map(ndim):
    zeros = (0,) * ndim
    return lambda b: zeros


def _weight_spec(arr):
    # Whole-array block with a constant index map: the block index never changes
    # over the batch grid, so Pallas keeps the weight VMEM-resident (no per-step DMA).
    return pl.BlockSpec(arr.shape, _const_map(arr.ndim))


def pack_params(params):
    """Re-pack natural (per-layer) params into the fused kernel's operand list."""
    D = HIDDEN_NODE_SIZE
    fe = params["fe"]
    w1a = jnp.stack([W1[:D] for (W1, _, _, _) in fe])              # (I, D, 128)   x_i part
    w1b = jnp.stack([W1[D:2 * D] for (W1, _, _, _) in fe])         # (I, D, 128)   x_j part
    w1c = jnp.stack([W1[2 * D:2 * D + 1] for (W1, _, _, _) in fe])  # (I, 1, 128)  norm part
    b1 = jnp.stack([b1 for (_, b1, _, _) in fe])                   # (I, 1, 128)
    w2 = jnp.stack([W2 for (_, _, W2, _) in fe])                   # (I, 128, FE)
    b2 = jnp.stack([b2 for (_, _, _, b2) in fe])                   # (I, 1, FE)
    (wx0, bx0, wh0, bh0), (wx1, bx1, wh1, bh1) = params["gru"]
    wx0a, wx0b = wx0[:FE_OUT], wx0[FE_OUT:]                        # split xcat = [av | x]
    return (w1a, w1b, w1c, b1, w2, b2,
            wx0a, wx0b, bx0, wh0, bh0,
            wx1, bx1, wh1, bh1,
            params["fn2_w"], params["fn2_b"])


def simple_gru_forward(x, params):
    B, N, D = x.shape
    assert D == HIDDEN_NODE_SIZE and NODE_SIZE == HIDDEN_NODE_SIZE
    assert NUM_GRU_LAYERS == 2
    ops = pack_params(params)
    kernel = functools.partial(
        _simple_gru_kernel, alpha=ALPHA, n=N, d=D, fe_out=FE_OUT,
        hidden=HIDDEN_SIZE, iters=ITERS)
    return pl.pallas_call(
        kernel,
        out_shape=jax.ShapeDtypeStruct((B, N, NODE_SIZE), jnp.float32),
        grid=(B,),
        in_specs=[pl.BlockSpec((1, N, D), lambda b: (b, 0, 0))]
                 + [_weight_spec(w) for w in ops],
        out_specs=pl.BlockSpec((1, N, NODE_SIZE), lambda b: (b, 0, 0)),
        compiler_params=pltpu.CompilerParams(
            dimension_semantics=("parallel",),        # v7x: one batch element per TensorCore
            vmem_limit_bytes=8 * 1024 * 1024),        # everything resident; modest cap
    )(x, *ops)


# ---------------------------------------------------------------------------
# Pure-JAX reference (mirrors the PyTorch ops exactly) for a sanity check.
# ---------------------------------------------------------------------------
def _leaky(v, alpha):
    return jnp.where(v > 0, v, alpha * v)


def reference_forward(x, params):
    B, N, D = x.shape
    hidden = jnp.zeros((NUM_GRU_LAYERS, B * N, HIDDEN_SIZE), jnp.float32)
    for i in range(ITERS):
        W1, b1, W2, b2 = params["fe"][i]
        x1 = jnp.repeat(x, N, axis=1)                                  # x.repeat(1,1,N).view(...)
        x2 = jnp.tile(x, (1, N, 1))                                    # x.repeat(1,N,1)
        norms = jnp.linalg.norm(x2[:, :, :2] - x1[:, :, :2], axis=2)[..., None]
        pairs = jnp.concatenate([x1, x2, norms], axis=2).reshape(B * N * N, 2 * D + 1)
        av = _leaky(pairs @ W1 + b1[0], ALPHA)
        av = _leaky(av @ W2 + b2[0], ALPHA)
        av = jnp.sum(av.reshape(B, N, N, FE_OUT), axis=2)
        xcat = jnp.concatenate([av, x], axis=2).reshape(B * N, FE_OUT + D)

        layer_in = xcat
        new_hidden = []
        for l in range(NUM_GRU_LAYERS):
            wx, bx, wh, bh = params["gru"][l]
            gx = layer_in @ wx + bx[0]
            gh = hidden[l] @ wh + bh[0]
            H = HIDDEN_SIZE
            r = jax.nn.sigmoid(gx[:, :H] + gh[:, :H])
            z = jax.nn.sigmoid(gx[:, H:2 * H] + gh[:, H:2 * H])
            ng = jnp.tanh(gx[:, 2 * H:] + r * gh[:, 2 * H:])
            h_new = ng + z * (hidden[l] - ng)
            new_hidden.append(h_new)
            layer_in = h_new
        hidden = jnp.stack(new_hidden, axis=0)

        out = jnp.tanh(layer_in @ params["fn2_w"] + params["fn2_b"][0])
        x = out.reshape(B, N, HIDDEN_NODE_SIZE)
    return x[:, :, :NODE_SIZE]


# ---------------------------------------------------------------------------
# Deterministic parameter init (shapes from Simple_GRU.__init__)
# ---------------------------------------------------------------------------
def init_params(key):
    keys = iter(jax.random.split(key, 32))

    def u(shape, bound):
        return jax.random.uniform(next(keys), shape, jnp.float32, -bound, bound)

    D = HIDDEN_NODE_SIZE
    fe = []
    for _ in range(ITERS):
        s1 = (2 * NODE_SIZE + 1) ** -0.5
        s2 = FE_HID ** -0.5
        fe.append((u((2 * D + 1, FE_HID), s1),        # fe1: Linear(2*node_size+1, 128)
                   u((1, FE_HID), s1),
                   u((FE_HID, FE_OUT), s2),           # fe2: Linear(128, fe_out_size)
                   u((1, FE_OUT), s2)))

    gru = []
    s = 1.0 / math.sqrt(HIDDEN_SIZE)
    for l in range(NUM_GRU_LAYERS):
        in_dim = FE_OUT + NODE_SIZE if l == 0 else HIDDEN_SIZE
        gru.append((u((in_dim, 3 * HIDDEN_SIZE), s), u((1, 3 * HIDDEN_SIZE), s),
                    u((HIDDEN_SIZE, 3 * HIDDEN_SIZE), s), u((1, 3 * HIDDEN_SIZE), s)))

    sn = 1.0 / math.sqrt(HIDDEN_SIZE)
    return {"fe": fe, "gru": gru,
            "fn2_w": u((HIDDEN_SIZE, NODE_SIZE), sn),  # fn2: Linear(hidden_size, node_size)
            "fn2_b": u((1, NODE_SIZE), sn)}


if __name__ == "__main__":
    key = jax.random.PRNGKey(0)
    pkey, xkey = jax.random.split(key)
    params = init_params(pkey)
    x = jax.random.normal(xkey, (BATCH, NUM_HITS, HIDDEN_NODE_SIZE), jnp.float32)

    out = jax.jit(simple_gru_forward)(x, params)
    out = jax.block_until_ready(out)

    ref = reference_forward(x, params)
    assert out.shape == (BATCH, NUM_HITS, NODE_SIZE)
    assert jnp.allclose(out, ref, atol=1e-4, rtol=1e-4)
    print("KERNEL_OK")
</pallas_src>

<mosaic_0001>
module attributes {stable_mosaic.version = 11 : i64} {
  func.func @_simple_gru_kernel(%arg0: i32, %arg1: memref<1x8x16xf32, #tpu.memory_space<vmem>>, %arg2: memref<2x16x128xf32, #tpu.memory_space<vmem>>, %arg3: memref<2x16x128xf32, #tpu.memory_space<vmem>>, %arg4: memref<2x1x128xf32, #tpu.memory_space<vmem>>, %arg5: memref<2x1x128xf32, #tpu.memory_space<vmem>>, %arg6: memref<2x128x32xf32, #tpu.memory_space<vmem>>, %arg7: memref<2x1x32xf32, #tpu.memory_space<vmem>>, %arg8: memref<32x96xf32, #tpu.memory_space<vmem>>, %arg9: memref<16x96xf32, #tpu.memory_space<vmem>>, %arg10: memref<1x96xf32, #tpu.memory_space<vmem>>, %arg11: memref<32x96xf32, #tpu.memory_space<vmem>>, %arg12: memref<1x96xf32, #tpu.memory_space<vmem>>, %arg13: memref<32x96xf32, #tpu.memory_space<vmem>>, %arg14: memref<1x96xf32, #tpu.memory_space<vmem>>, %arg15: memref<32x96xf32, #tpu.memory_space<vmem>>, %arg16: memref<1x96xf32, #tpu.memory_space<vmem>>, %arg17: memref<32x16xf32, #tpu.memory_space<vmem>>, %arg18: memref<1x16xf32, #tpu.memory_space<vmem>>, %arg19: memref<1x8x16xf32, #tpu.memory_space<vmem>>) attributes {dimension_semantics = [#tpu.dimension_semantics<parallel>], iteration_bounds = array<i64: 2>, scalar_prefetch = 0 : i64, scratch_operands = 0 : i64, tpu.core_type = #tpu.core_type<tc>, window_params = [{transform_indices = @transform_0, window_bounds = array<i64: 1, 8, 16>}, {pipeline_mode = #tpu.pipeline_mode<synchronous>, transform_indices = @transform_1, window_bounds = array<i64: 2, 16, 128>}, {pipeline_mode = #tpu.pipeline_mode<synchronous>, transform_indices = @transform_2, window_bounds = array<i64: 2, 16, 128>}, {pipeline_mode = #tpu.pipeline_mode<synchronous>, transform_indices = @transform_3, window_bounds = array<i64: 2, 1, 128>}, {pipeline_mode = #tpu.pipeline_mode<synchronous>, transform_indices = @transform_4, window_bounds = array<i64: 2, 1, 128>}, {pipeline_mode = #tpu.pipeline_mode<synchronous>, transform_indices = @transform_5, window_bounds = array<i64: 2, 128, 32>}, {pipeline_mode = #tpu.pipeline_mode<synchronous>, transform_indices = @transform_6, window_bounds = array<i64: 2, 1, 32>}, {pipeline_mode = #tpu.pipeline_mode<synchronous>, transform_indices = @transform_7, window_bounds = array<i64: 32, 96>}, {pipeline_mode = #tpu.pipeline_mode<synchronous>, transform_indices = @transform_8, window_bounds = array<i64: 16, 96>}, {pipeline_mode = #tpu.pipeline_mode<synchronous>, transform_indices = @transform_9, window_bounds = array<i64: 1, 96>}, {pipeline_mode = #tpu.pipeline_mode<synchronous>, transform_indices = @transform_10, window_bounds = array<i64: 32, 96>}, {pipeline_mode = #tpu.pipeline_mode<synchronous>, transform_indices = @transform_11, window_bounds = array<i64: 1, 96>}, {pipeline_mode = #tpu.pipeline_mode<synchronous>, transform_indices = @transform_12, window_bounds = array<i64: 32, 96>}, {pipeline_mode = #tpu.pipeline_mode<synchronous>, transform_indices = @transform_13, window_bounds = array<i64: 1, 96>}, {pipeline_mode = #tpu.pipeline_mode<synchronous>, transform_indices = @transform_14, window_bounds = array<i64: 32, 96>}, {pipeline_mode = #tpu.pipeline_mode<synchronous>, transform_indices = @transform_15, window_bounds = array<i64: 1, 96>}, {pipeline_mode = #tpu.pipeline_mode<synchronous>, transform_indices = @transform_16, window_bounds = array<i64: 32, 16>}, {pipeline_mode = #tpu.pipeline_mode<synchronous>, transform_indices = @transform_17, window_bounds = array<i64: 1, 16>}, {transform_indices = @transform_18, window_bounds = array<i64: 1, 8, 16>}]} {
    %c0 = arith.constant 0 : index
    %c0_0 = arith.constant 0 : index
    %c0_1 = arith.constant 0 : index
    %0 = vector.load %arg1[%c0, %c0_0, %c0_1] : memref<1x8x16xf32, #tpu.memory_space<vmem>>, vector<1x8x16xf32>
    %1 = vector.shape_cast %0 : vector<1x8x16xf32> to vector<8x16xf32>
    %cst = arith.constant 0.000000e+00 : f32
    %2 = vector.broadcast %cst : f32 to vector<8x32xf32>
    %cst_2 = arith.constant 0.000000e+00 : f32
    %3 = vector.broadcast %cst_2 : f32 to vector<8x32xf32>
    %4 = vector.shape_cast %1 : vector<8x16xf32> to vector<8x1x16xf32>
    %5 = vector.shape_cast %4 : vector<8x1x16xf32> to vector<8x1x16xf32>
    %6 = vector.broadcast %5 : vector<8x1x16xf32> to vector<8x8x16xf32>
    %7 = vector.shape_cast %6 : vector<8x8x16xf32> to vector<64x16xf32>
    %8 = vector.shape_cast %1 : vector<8x16xf32> to vector<1x8x16xf32>
    %9 = vector.shape_cast %8 : vector<1x8x16xf32> to vector<1x8x16xf32>
    %10 = vector.broadcast %9 : vector<1x8x16xf32> to vector<8x8x16xf32>
    %11 = vector.shape_cast %10 : vector<8x8x16xf32> to vector<64x16xf32>
    %12 = vector.extract_strided_slice %11 {offsets = [0, 0], sizes = [64, 2], strides = [1, 1]} : vector<64x16xf32> to vector<64x2xf32>
    %13 = vector.extract_strided_slice %7 {offsets = [0, 0], sizes = [64, 2], strides = [1, 1]} : vector<64x16xf32> to vector<64x2xf32>
    %14 = arith.subf %12, %13 : vector<64x2xf32>
    %15 = arith.mulf %14, %14 : vector<64x2xf32>
    %cst_3 = arith.constant dense<0.000000e+00> : vector<64xf32>
    %16 = vector.multi_reduction <add>, %15, %cst_3 [1] : vector<64x2xf32> to vector<64xf32>
    %17 = vector.shape_cast %16 : vector<64xf32> to vector<64x1xf32>
    %18 = math.sqrt %17 : vector<64x1xf32>
    %c0_4 = arith.constant 0 : index
    %c0_5 = arith.constant 0 : index
    %c0_6 = arith.constant 0 : index
    %19 = vector.load %arg2[%c0_4, %c0_5, %c0_6] : memref<2x16x128xf32, #tpu.memory_space<vmem>>, vector<1x16x128xf32>
    %20 = vector.shape_cast %19 : vector<1x16x128xf32> to vector<16x128xf32>
    %cst_7 = arith.constant dense<0.000000e+00> : vector<64x128xf32>
    %21 = tpu.matmul %7, %20, %cst_7 {dimension_numbers = #tpu.dot_dimension_numbers<[1], [0], [0], [1], [0, 0, 1, 1], [], []>} : vector<64x16xf32>, vector<16x128xf32>, vector<64x128xf32> -> vector<64x128xf32>
    %c0_8 = arith.constant 0 : index
    %c0_9 = arith.constant 0 : index
    %c0_10 = arith.constant 0 : index
    %22 = vector.load %arg3[%c0_8, %c0_9, %c0_10] : memref<2x16x128xf32, #tpu.memory_space<vmem>>, vector<1x16x128xf32>
    %23 = vector.shape_cast %22 : vector<1x16x128xf32> to vector<16x128xf32>
    %cst_11 = arith.constant dense<0.000000e+00> : vector<64x128xf32>
    %24 = tpu.matmul %11, %23, %cst_11 {dimension_numbers = #tpu.dot_dimension_numbers<[1], [0], [0], [1], [0, 0, 1, 1], [], []>} : vector<64x16xf32>, vector<16x128xf32>, vector<64x128xf32> -> vector<64x128xf32>
    %25 = arith.addf %21, %24 : vector<64x128xf32>
    %c0_12 = arith.constant 0 : index
    %c0_13 = arith.constant 0 : index
    %c0_14 = arith.constant 0 : index
    %26 = vector.load %arg4[%c0_12, %c0_13, %c0_14] : memref<2x1x128xf32, #tpu.memory_space<vmem>>, vector<1x1x128xf32>
    %27 = vector.shape_cast %26 : vector<1x1x128xf32> to vector<1x128xf32>
    %28 = vector.broadcast %18 : vector<64x1xf32> to vector<64x128xf32>
    %29 = vector.broadcast %27 : vector<1x128xf32> to vector<64x128xf32>
    %30 = arith.mulf %28, %29 : vector<64x128xf32>
    %31 = arith.addf %25, %30 : vector<64x128xf32>
    %c0_15 = arith.constant 0 : index
    %c0_16 = arith.constant 0 : index
    %c0_17 = arith.constant 0 : index
    %32 = vector.load %arg5[%c0_15, %c0_16, %c0_17] : memref<2x1x128xf32, #tpu.memory_space<vmem>>, vector<1x1x128xf32>
    %33 = vector.shape_cast %32 : vector<1x1x128xf32> to vector<1x128xf32>
    %34 = vector.broadcast %33 : vector<1x128xf32> to vector<64x128xf32>
    %35 = arith.addf %31, %34 : vector<64x128xf32>
    %cst_18 = arith.constant 0.000000e+00 : f32
    %36 = vector.broadcast %cst_18 : f32 to vector<64x128xf32>
    %37 = arith.cmpf ogt, %35, %36 : vector<64x128xf32>
    %cst_19 = arith.constant 2.000000e-01 : f32
    %38 = vector.broadcast %cst_19 : f32 to vector<64x128xf32>
    %39 = arith.mulf %38, %35 : vector<64x128xf32>
    %40 = arith.select %37, %35, %39 : vector<64x128xi1>, vector<64x128xf32>
    %c0_20 = arith.constant 0 : index
    %c0_21 = arith.constant 0 : index
    %c0_22 = arith.constant 0 : index
    %41 = vector.load %arg6[%c0_20, %c0_21, %c0_22] : memref<2x128x32xf32, #tpu.memory_space<vmem>>, vector<1x128x32xf32>
    %42 = vector.shape_cast %41 : vector<1x128x32xf32> to vector<128x32xf32>
    %cst_23 = arith.constant dense<0.000000e+00> : vector<64x32xf32>
    %43 = tpu.matmul %40, %42, %cst_23 {dimension_numbers = #tpu.dot_dimension_numbers<[1], [0], [0], [1], [0, 0, 1, 1], [], []>} : vector<64x128xf32>, vector<128x32xf32>, vector<64x32xf32> -> vector<64x32xf32>
    %c0_24 = arith.constant 0 : index
    %c0_25 = arith.constant 0 : index
    %c0_26 = arith.constant 0 : index
    %44 = vector.load %arg7[%c0_24, %c0_25, %c0_26] : memref<2x1x32xf32, #tpu.memory_space<vmem>>, vector<1x1x32xf32>
    %45 = vector.shape_cast %44 : vector<1x1x32xf32> to vector<1x32xf32>
    %46 = vector.broadcast %45 : vector<1x32xf32> to vector<64x32xf32>
    %47 = arith.addf %43, %46 : vector<64x32xf32>
    %cst_27 = arith.constant 0.000000e+00 : f32
    %48 = vector.broadcast %cst_27 : f32 to vector<64x32xf32>
    %49 = arith.cmpf ogt, %47, %48 : vector<64x32xf32>
    %cst_28 = arith.constant 2.000000e-01 : f32
    %50 = vector.broadcast %cst_28 : f32 to vector<64x32xf32>
    %51 = arith.mulf %50, %47 : vector<64x32xf32>
    %52 = arith.select %49, %47, %51 : vector<64x32xi1>, vector<64x32xf32>
    %53 = vector.shape_cast %52 : vector<64x32xf32> to vector<8x8x32xf32>
    %cst_29 = arith.constant dense<0.000000e+00> : vector<8x32xf32>
    %54 = vector.multi_reduction <add>, %53, %cst_29 [1] : vector<8x8x32xf32> to vector<8x32xf32>
    %c0_30 = arith.constant 0 : index
    %c0_31 = arith.constant 0 : index
    %55 = vector.load %arg8[%c0_30, %c0_31] : memref<32x96xf32, #tpu.memory_space<vmem>>, vector<32x96xf32>
    %cst_32 = arith.constant dense<0.000000e+00> : vector<8x96xf32>
    %56 = tpu.matmul %54, %55, %cst_32 {dimension_numbers = #tpu.dot_dimension_numbers<[1], [0], [0], [1], [0, 0, 1, 1], [], []>} : vector<8x32xf32>, vector<32x96xf32>, vector<8x96xf32> -> vector<8x96xf32>
    %c0_33 = arith.constant 0 : index
    %c0_34 = arith.constant 0 : index
    %57 = vector.load %arg9[%c0_33, %c0_34] : memref<16x96xf32, #tpu.memory_space<vmem>>, vector<16x96xf32>
    %cst_35 = arith.constant dense<0.000000e+00> : vector<8x96xf32>
    %58 = tpu.matmul %1, %57, %cst_35 {dimension_numbers = #tpu.dot_dimension_numbers<[1], [0], [0], [1], [0, 0, 1, 1], [], []>} : vector<8x16xf32>, vector<16x96xf32>, vector<8x96xf32> -> vector<8x96xf32>
    %59 = arith.addf %56, %58 : vector<8x96xf32>
    %c0_36 = arith.constant 0 : index
    %c0_37 = arith.constant 0 : index
    %60 = vector.load %arg10[%c0_36, %c0_37] : memref<1x96xf32, #tpu.memory_space<vmem>>, vector<1x96xf32>
    %61 = vector.broadcast %60 : vector<1x96xf32> to vector<8x96xf32>
    %62 = arith.addf %59, %61 : vector<8x96xf32>
    %c0_38 = arith.constant 0 : index
    %c0_39 = arith.constant 0 : index
    %63 = vector.load %arg11[%c0_38, %c0_39] : memref<32x96xf32, #tpu.memory_space<vmem>>, vector<32x96xf32>
    %cst_40 = arith.constant dense<0.000000e+00> : vector<8x96xf32>
    %64 = tpu.matmul %2, %63, %cst_40 {dimension_numbers = #tpu.dot_dimension_numbers<[1], [0], [0], [1], [0, 0, 1, 1], [], []>} : vector<8x32xf32>, vector<32x96xf32>, vector<8x96xf32> -> vector<8x96xf32>
    %c0_41 = arith.constant 0 : index
    %c0_42 = arith.constant 0 : index
    %65 = vector.load %arg12[%c0_41, %c0_42] : memref<1x96xf32, #tpu.memory_space<vmem>>, vector<1x96xf32>
    %66 = vector.broadcast %65 : vector<1x96xf32> to vector<8x96xf32>
    %67 = arith.addf %64, %66 : vector<8x96xf32>
    %68 = vector.extract_strided_slice %62 {offsets = [0, 0], sizes = [8, 32], strides = [1, 1]} : vector<8x96xf32> to vector<8x32xf32>
    %69 = vector.extract_strided_slice %67 {offsets = [0, 0], sizes = [8, 32], strides = [1, 1]} : vector<8x96xf32> to vector<8x32xf32>
    %70 = arith.addf %68, %69 : vector<8x32xf32>
    %71 = arith.negf %70 : vector<8x32xf32>
    %72 = math.exp %71 : vector<8x32xf32>
    %cst_43 = arith.constant 1.000000e+00 : f32
    %73 = vector.broadcast %cst_43 : f32 to vector<8x32xf32>
    %74 = arith.addf %73, %72 : vector<8x32xf32>
    %75 = arith.divf %73, %74 : vector<8x32xf32>
    %76 = vector.extract_strided_slice %62 {offsets = [0, 32], sizes = [8, 32], strides = [1, 1]} : vector<8x96xf32> to vector<8x32xf32>
    %77 = vector.extract_strided_slice %67 {offsets = [0, 32], sizes = [8, 32], strides = [1, 1]} : vector<8x96xf32> to vector<8x32xf32>
    %78 = arith.addf %76, %77 : vector<8x32xf32>
    %79 = arith.negf %78 : vector<8x32xf32>
    %80 = math.exp %79 : vector<8x32xf32>
    %cst_44 = arith.constant 1.000000e+00 : f32
    %81 = vector.broadcast %cst_44 : f32 to vector<8x32xf32>
    %82 = arith.addf %81, %80 : vector<8x32xf32>
    %83 = arith.divf %81, %82 : vector<8x32xf32>
    %84 = vector.extract_strided_slice %62 {offsets = [0, 64], sizes = [8, 32], strides = [1, 1]} : vector<8x96xf32> to vector<8x32xf32>
    %85 = vector.extract_strided_slice %67 {offsets = [0, 64], sizes = [8, 32], strides = [1, 1]} : vector<8x96xf32> to vector<8x32xf32>
    %86 = arith.mulf %75, %85 : vector<8x32xf32>
    %87 = arith.addf %84, %86 : vector<8x32xf32>
    %88 = math.tanh %87 : vector<8x32xf32>
    %89 = arith.subf %2, %88 : vector<8x32xf32>
    %90 = arith.mulf %83, %89 : vector<8x32xf32>
    %91 = arith.addf %88, %90 : vector<8x32xf32>
    %c0_45 = arith.constant 0 : index
    %c0_46 = arith.constant 0 : index
    %92 = vector.load %arg13[%c0_45, %c0_46] : memref<32x96xf32, #tpu.memory_space<vmem>>, vector<32x96xf32>
    %cst_47 = arith.constant dense<0.000000e+00> : vector<8x96xf32>
    %93 = tpu.matmul %91, %92, %cst_47 {dimension_numbers = #tpu.dot_dimension_numbers<[1], [0], [0], [1], [0, 0, 1, 1], [], []>} : vector<8x32xf32>, vector<32x96xf32>, vector<8x96xf32> -> vector<8x96xf32>
    %c0_48 = arith.constant 0 : index
    %c0_49 = arith.constant 0 : index
    %94 = vector.load %arg14[%c0_48, %c0_49] : memref<1x96xf32, #tpu.memory_space<vmem>>, vector<1x96xf32>
    %95 = vector.broadcast %94 : vector<1x96xf32> to vector<8x96xf32>
    %96 = arith.addf %93, %95 : vector<8x96xf32>
    %c0_50 = arith.constant 0 : index
    %c0_51 = arith.constant 0 : index
    %97 = vector.load %arg15[%c0_50, %c0_51] : memref<32x96xf32, #tpu.memory_space<vmem>>, vector<32x96xf32>
    %cst_52 = arith.constant dense<0.000000e+00> : vector<8x96xf32>
    %98 = tpu.matmul %3, %97, %cst_52 {dimension_numbers = #tpu.dot_dimension_numbers<[1], [0], [0], [1], [0, 0, 1, 1], [], []>} : vector<8x32xf32>, vector<32x96xf32>, vector<8x96xf32> -> vector<8x96xf32>
    %c0_53 = arith.constant 0 : index
    %c0_54 = arith.constant 0 : index
    %99 = vector.load %arg16[%c0_53, %c0_54] : memref<1x96xf32, #tpu.memory_space<vmem>>, vector<1x96xf32>
    %100 = vector.broadcast %99 : vector<1x96xf32> to vector<8x96xf32>
    %101 = arith.addf %98, %100 : vector<8x96xf32>
    %102 = vector.extract_strided_slice %96 {offsets = [0, 0], sizes = [8, 32], strides = [1, 1]} : vector<8x96xf32> to vector<8x32xf32>
    %103 = vector.extract_strided_slice %101 {offsets = [0, 0], sizes = [8, 32], strides = [1, 1]} : vector<8x96xf32> to vector<8x32xf32>
    %104 = arith.addf %102, %103 : vector<8x32xf32>
    %105 = arith.negf %104 : vector<8x32xf32>
    %106 = math.exp %105 : vector<8x32xf32>
    %cst_55 = arith.constant 1.000000e+00 : f32
    %107 = vector.broadcast %cst_55 : f32 to vector<8x32xf32>
    %108 = arith.addf %107, %106 : vector<8x32xf32>
    %109 = arith.divf %107, %108 : vector<8x32xf32>
    %110 = vector.extract_strided_slice %96 {offsets = [0, 32], sizes = [8, 32], strides = [1, 1]} : vector<8x96xf32> to vector<8x32xf32>
    %111 = vector.extract_strided_slice %101 {offsets = [0, 32], sizes = [8, 32], strides = [1, 1]} : vector<8x96xf32> to vector<8x32xf32>
    %112 = arith.addf %110, %111 : vector<8x32xf32>
    %113 = arith.negf %112 : vector<8x32xf32>
    %114 = math.exp %113 : vector<8x32xf32>
    %cst_56 = arith.constant 1.000000e+00 : f32
    %115 = vector.broadcast %cst_56 : f32 to vector<8x32xf32>
    %116 = arith.addf %115, %114 : vector<8x32xf32>
    %117 = arith.divf %115, %116 : vector<8x32xf32>
    %118 = vector.extract_strided_slice %96 {offsets = [0, 64], sizes = [8, 32], strides = [1, 1]} : vector<8x96xf32> to vector<8x32xf32>
    %119 = vector.extract_strided_slice %101 {offsets = [0, 64], sizes = [8, 32], strides = [1, 1]} : vector<8x96xf32> to vector<8x32xf32>
    %120 = arith.mulf %109, %119 : vector<8x32xf32>
    %121 = arith.addf %118, %120 : vector<8x32xf32>
    %122 = math.tanh %121 : vector<8x32xf32>
    %123 = arith.subf %3, %122 : vector<8x32xf32>
    %124 = arith.mulf %117, %123 : vector<8x32xf32>
    %125 = arith.addf %122, %124 : vector<8x32xf32>
    %c0_57 = arith.constant 0 : index
    %c0_58 = arith.constant 0 : index
    %126 = vector.load %arg17[%c0_57, %c0_58] : memref<32x16xf32, #tpu.memory_space<vmem>>, vector<32x16xf32>
    %cst_59 = arith.constant dense<0.000000e+00> : vector<8x16xf32>
    %127 = tpu.matmul %125, %126, %cst_59 {dimension_numbers = #tpu.dot_dimension_numbers<[1], [0], [0], [1], [0, 0, 1, 1], [], []>} : vector<8x32xf32>, vector<32x16xf32>, vector<8x16xf32> -> vector<8x16xf32>
    %c0_60 = arith.constant 0 : index
    %c0_61 = arith.constant 0 : index
    %128 = vector.load %arg18[%c0_60, %c0_61] : memref<1x16xf32, #tpu.memory_space<vmem>>, vector<1x16xf32>
    %129 = vector.broadcast %128 : vector<1x16xf32> to vector<8x16xf32>
    %130 = arith.addf %127, %129 : vector<8x16xf32>
    %131 = math.tanh %130 : vector<8x16xf32>
    %132 = vector.shape_cast %131 : vector<8x16xf32> to vector<8x1x16xf32>
    %133 = vector.shape_cast %132 : vector<8x1x16xf32> to vector<8x1x16xf32>
    %134 = vector.broadcast %133 : vector<8x1x16xf32> to vector<8x8x16xf32>
    %135 = vector.shape_cast %134 : vector<8x8x16xf32> to vector<64x16xf32>
    %136 = vector.shape_cast %131 : vector<8x16xf32> to vector<1x8x16xf32>
    %137 = vector.shape_cast %136 : vector<1x8x16xf32> to vector<1x8x16xf32>
    %138 = vector.broadcast %137 : vector<1x8x16xf32> to vector<8x8x16xf32>
    %139 = vector.shape_cast %138 : vector<8x8x16xf32> to vector<64x16xf32>
    %140 = vector.extract_strided_slice %139 {offsets = [0, 0], sizes = [64, 2], strides = [1, 1]} : vector<64x16xf32> to vector<64x2xf32>
    %141 = vector.extract_strided_slice %135 {offsets = [0, 0], sizes = [64, 2], strides = [1, 1]} : vector<64x16xf32> to vector<64x2xf32>
    %142 = arith.subf %140, %141 : vector<64x2xf32>
    %143 = arith.mulf %142, %142 : vector<64x2xf32>
    %cst_62 = arith.constant dense<0.000000e+00> : vector<64xf32>
    %144 = vector.multi_reduction <add>, %143, %cst_62 [1] : vector<64x2xf32> to vector<64xf32>
    %145 = vector.shape_cast %144 : vector<64xf32> to vector<64x1xf32>
    %146 = math.sqrt %145 : vector<64x1xf32>
    %c1 = arith.constant 1 : index
    %c0_63 = arith.constant 0 : index
    %c0_64 = arith.constant 0 : index
    %147 = vector.load %arg2[%c1, %c0_63, %c0_64] : memref<2x16x128xf32, #tpu.memory_space<vmem>>, vector<1x16x128xf32>
    %148 = vector.shape_cast %147 : vector<1x16x128xf32> to vector<16x128xf32>
    %cst_65 = arith.constant dense<0.000000e+00> : vector<64x128xf32>
    %149 = tpu.matmul %135, %148, %cst_65 {dimension_numbers = #tpu.dot_dimension_numbers<[1], [0], [0], [1], [0, 0, 1, 1], [], []>} : vector<64x16xf32>, vector<16x128xf32>, vector<64x128xf32> -> vector<64x128xf32>
    %c1_66 = arith.constant 1 : index
    %c0_67 = arith.constant 0 : index
    %c0_68 = arith.constant 0 : index
    %150 = vector.load %arg3[%c1_66, %c0_67, %c0_68] : memref<2x16x128xf32, #tpu.memory_space<vmem>>, vector<1x16x128xf32>
    %151 = vector.shape_cast %150 : vector<1x16x128xf32> to vector<16x128xf32>
    %cst_69 = arith.constant dense<0.000000e+00> : vector<64x128xf32>
    %152 = tpu.matmul %139, %151, %cst_69 {dimension_numbers = #tpu.dot_dimension_numbers<[1], [0], [0], [1], [0, 0, 1, 1], [], []>} : vector<64x16xf32>, vector<16x128xf32>, vector<64x128xf32> -> vector<64x128xf32>
    %153 = arith.addf %149, %152 : vector<64x128xf32>
    %c1_70 = arith.constant 1 : index
    %c0_71 = arith.constant 0 : index
    %c0_72 = arith.constant 0 : index
    %154 = vector.load %arg4[%c1_70, %c0_71, %c0_72] : memref<2x1x128xf32, #tpu.memory_space<vmem>>, vector<1x1x128xf32>
    %155 = vector.shape_cast %154 : vector<1x1x128xf32> to vector<1x128xf32>
    %156 = vector.broadcast %146 : vector<64x1xf32> to vector<64x128xf32>
    %157 = vector.broadcast %155 : vector<1x128xf32> to vector<64x128xf32>
    %158 = arith.mulf %156, %157 : vector<64x128xf32>
    %159 = arith.addf %153, %158 : vector<64x128xf32>
    %c1_73 = arith.constant 1 : index
    %c0_74 = arith.constant 0 : index
    %c0_75 = arith.constant 0 : index
    %160 = vector.load %arg5[%c1_73, %c0_74, %c0_75] : memref<2x1x128xf32, #tpu.memory_space<vmem>>, vector<1x1x128xf32>
    %161 = vector.shape_cast %160 : vector<1x1x128xf32> to vector<1x128xf32>
    %162 = vector.broadcast %161 : vector<1x128xf32> to vector<64x128xf32>
    %163 = arith.addf %159, %162 : vector<64x128xf32>
    %cst_76 = arith.constant 0.000000e+00 : f32
    %164 = vector.broadcast %cst_76 : f32 to vector<64x128xf32>
    %165 = arith.cmpf ogt, %163, %164 : vector<64x128xf32>
    %cst_77 = arith.constant 2.000000e-01 : f32
    %166 = vector.broadcast %cst_77 : f32 to vector<64x128xf32>
    %167 = arith.mulf %166, %163 : vector<64x128xf32>
    %168 = arith.select %165, %163, %167 : vector<64x128xi1>, vector<64x128xf32>
    %c1_78 = arith.constant 1 : index
    %c0_79 = arith.constant 0 : index
    %c0_80 = arith.constant 0 : index
    %169 = vector.load %arg6[%c1_78, %c0_79, %c0_80] : memref<2x128x32xf32, #tpu.memory_space<vmem>>, vector<1x128x32xf32>
    %170 = vector.shape_cast %169 : vector<1x128x32xf32> to vector<128x32xf32>
    %cst_81 = arith.constant dense<0.000000e+00> : vector<64x32xf32>
    %171 = tpu.matmul %168, %170, %cst_81 {dimension_numbers = #tpu.dot_dimension_numbers<[1], [0], [0], [1], [0, 0, 1, 1], [], []>} : vector<64x128xf32>, vector<128x32xf32>, vector<64x32xf32> -> vector<64x32xf32>
    %c1_82 = arith.constant 1 : index
    %c0_83 = arith.constant 0 : index
    %c0_84 = arith.constant 0 : index
    %172 = vector.load %arg7[%c1_82, %c0_83, %c0_84] : memref<2x1x32xf32, #tpu.memory_space<vmem>>, vector<1x1x32xf32>
    %173 = vector.shape_cast %172 : vector<1x1x32xf32> to vector<1x32xf32>
    %174 = vector.broadcast %173 : vector<1x32xf32> to vector<64x32xf32>
    %175 = arith.addf %171, %174 : vector<64x32xf32>
    %cst_85 = arith.constant 0.000000e+00 : f32
    %176 = vector.broadcast %cst_85 : f32 to vector<64x32xf32>
    %177 = arith.cmpf ogt, %175, %176 : vector<64x32xf32>
    %cst_86 = arith.constant 2.000000e-01 : f32
    %178 = vector.broadcast %cst_86 : f32 to vector<64x32xf32>
    %179 = arith.mulf %178, %175 : vector<64x32xf32>
    %180 = arith.select %177, %175, %179 : vector<64x32xi1>, vector<64x32xf32>
    %181 = vector.shape_cast %180 : vector<64x32xf32> to vector<8x8x32xf32>
    %cst_87 = arith.constant dense<0.000000e+00> : vector<8x32xf32>
    %182 = vector.multi_reduction <add>, %181, %cst_87 [1] : vector<8x8x32xf32> to vector<8x32xf32>
    %c0_88 = arith.constant 0 : index
    %c0_89 = arith.constant 0 : index
    %183 = vector.load %arg8[%c0_88, %c0_89] : memref<32x96xf32, #tpu.memory_space<vmem>>, vector<32x96xf32>
    %cst_90 = arith.constant dense<0.000000e+00> : vector<8x96xf32>
    %184 = tpu.matmul %182, %183, %cst_90 {dimension_numbers = #tpu.dot_dimension_numbers<[1], [0], [0], [1], [0, 0, 1, 1], [], []>} : vector<8x32xf32>, vector<32x96xf32>, vector<8x96xf32> -> vector<8x96xf32>
    %c0_91 = arith.constant 0 : index
    %c0_92 = arith.constant 0 : index
    %185 = vector.load %arg9[%c0_91, %c0_92] : memref<16x96xf32, #tpu.memory_space<vmem>>, vector<16x96xf32>
    %cst_93 = arith.constant dense<0.000000e+00> : vector<8x96xf32>
    %186 = tpu.matmul %131, %185, %cst_93 {dimension_numbers = #tpu.dot_dimension_numbers<[1], [0], [0], [1], [0, 0, 1, 1], [], []>} : vector<8x16xf32>, vector<16x96xf32>, vector<8x96xf32> -> vector<8x96xf32>
    %187 = arith.addf %184, %186 : vector<8x96xf32>
    %c0_94 = arith.constant 0 : index
    %c0_95 = arith.constant 0 : index
    %188 = vector.load %arg10[%c0_94, %c0_95] : memref<1x96xf32, #tpu.memory_space<vmem>>, vector<1x96xf32>
    %189 = vector.broadcast %188 : vector<1x96xf32> to vector<8x96xf32>
    %190 = arith.addf %187, %189 : vector<8x96xf32>
    %c0_96 = arith.constant 0 : index
    %c0_97 = arith.constant 0 : index
    %191 = vector.load %arg11[%c0_96, %c0_97] : memref<32x96xf32, #tpu.memory_space<vmem>>, vector<32x96xf32>
    %cst_98 = arith.constant dense<0.000000e+00> : vector<8x96xf32>
    %192 = tpu.matmul %91, %191, %cst_98 {dimension_numbers = #tpu.dot_dimension_numbers<[1], [0], [0], [1], [0, 0, 1, 1], [], []>} : vector<8x32xf32>, vector<32x96xf32>, vector<8x96xf32> -> vector<8x96xf32>
    %c0_99 = arith.constant 0 : index
    %c0_100 = arith.constant 0 : index
    %193 = vector.load %arg12[%c0_99, %c0_100] : memref<1x96xf32, #tpu.memory_space<vmem>>, vector<1x96xf32>
    %194 = vector.broadcast %193 : vector<1x96xf32> to vector<8x96xf32>
    %195 = arith.addf %192, %194 : vector<8x96xf32>
    %196 = vector.extract_strided_slice %190 {offsets = [0, 0], sizes = [8, 32], strides = [1, 1]} : vector<8x96xf32> to vector<8x32xf32>
    %197 = vector.extract_strided_slice %195 {offsets = [0, 0], sizes = [8, 32], strides = [1, 1]} : vector<8x96xf32> to vector<8x32xf32>
    %198 = arith.addf %196, %197 : vector<8x32xf32>
    %199 = arith.negf %198 : vector<8x32xf32>
    %200 = math.exp %199 : vector<8x32xf32>
    %cst_101 = arith.constant 1.000000e+00 : f32
    %201 = vector.broadcast %cst_101 : f32 to vector<8x32xf32>
    %202 = arith.addf %201, %200 : vector<8x32xf32>
    %203 = arith.divf %201, %202 : vector<8x32xf32>
    %204 = vector.extract_strided_slice %190 {offsets = [0, 32], sizes = [8, 32], strides = [1, 1]} : vector<8x96xf32> to vector<8x32xf32>
    %205 = vector.extract_strided_slice %195 {offsets = [0, 32], sizes = [8, 32], strides = [1, 1]} : vector<8x96xf32> to vector<8x32xf32>
    %206 = arith.addf %204, %205 : vector<8x32xf32>
    %207 = arith.negf %206 : vector<8x32xf32>
    %208 = math.exp %207 : vector<8x32xf32>
    %cst_102 = arith.constant 1.000000e+00 : f32
    %209 = vector.broadcast %cst_102 : f32 to vector<8x32xf32>
    %210 = arith.addf %209, %208 : vector<8x32xf32>
    %211 = arith.divf %209, %210 : vector<8x32xf32>
    %212 = vector.extract_strided_slice %190 {offsets = [0, 64], sizes = [8, 32], strides = [1, 1]} : vector<8x96xf32> to vector<8x32xf32>
    %213 = vector.extract_strided_slice %195 {offsets = [0, 64], sizes = [8, 32], strides = [1, 1]} : vector<8x96xf32> to vector<8x32xf32>
    %214 = arith.mulf %203, %213 : vector<8x32xf32>
    %215 = arith.addf %212, %214 : vector<8x32xf32>
    %216 = math.tanh %215 : vector<8x32xf32>
    %217 = arith.subf %91, %216 : vector<8x32xf32>
    %218 = arith.mulf %211, %217 : vector<8x32xf32>
    %219 = arith.addf %216, %218 : vector<8x32xf32>
    %c0_103 = arith.constant 0 : index
    %c0_104 = arith.constant 0 : index
    %220 = vector.load %arg13[%c0_103, %c0_104] : memref<32x96xf32, #tpu.memory_space<vmem>>, vector<32x96xf32>
    %cst_105 = arith.constant dense<0.000000e+00> : vector<8x96xf32>
    %221 = tpu.matmul %219, %220, %cst_105 {dimension_numbers = #tpu.dot_dimension_numbers<[1], [0], [0], [1], [0, 0, 1, 1], [], []>} : vector<8x32xf32>, vector<32x96xf32>, vector<8x96xf32> -> vector<8x96xf32>
    %c0_106 = arith.constant 0 : index
    %c0_107 = arith.constant 0 : index
    %222 = vector.load %arg14[%c0_106, %c0_107] : memref<1x96xf32, #tpu.memory_space<vmem>>, vector<1x96xf32>
    %223 = vector.broadcast %222 : vector<1x96xf32> to vector<8x96xf32>
    %224 = arith.addf %221, %223 : vector<8x96xf32>
    %c0_108 = arith.constant 0 : index
    %c0_109 = arith.constant 0 : index
    %225 = vector.load %arg15[%c0_108, %c0_109] : memref<32x96xf32, #tpu.memory_space<vmem>>, vector<32x96xf32>
    %cst_110 = arith.constant dense<0.000000e+00> : vector<8x96xf32>
    %226 = tpu.matmul %125, %225, %cst_110 {dimension_numbers = #tpu.dot_dimension_numbers<[1], [0], [0], [1], [0, 0, 1, 1], [], []>} : vector<8x32xf32>, vector<32x96xf32>, vector<8x96xf32> -> vector<8x96xf32>
    %c0_111 = arith.constant 0 : index
    %c0_112 = arith.constant 0 : index
    %227 = vector.load %arg16[%c0_111, %c0_112] : memref<1x96xf32, #tpu.memory_space<vmem>>, vector<1x96xf32>
    %228 = vector.broadcast %227 : vector<1x96xf32> to vector<8x96xf32>
    %229 = arith.addf %226, %228 : vector<8x96xf32>
    %230 = vector.extract_strided_slice %224 {offsets = [0, 0], sizes = [8, 32], strides = [1, 1]} : vector<8x96xf32> to vector<8x32xf32>
    %231 = vector.extract_strided_slice %229 {offsets = [0, 0], sizes = [8, 32], strides = [1, 1]} : vector<8x96xf32> to vector<8x32xf32>
    %232 = arith.addf %230, %231 : vector<8x32xf32>
    %233 = arith.negf %232 : vector<8x32xf32>
    %234 = math.exp %233 : vector<8x32xf32>
    %cst_113 = arith.constant 1.000000e+00 : f32
    %235 = vector.broadcast %cst_113 : f32 to vector<8x32xf32>
    %236 = arith.addf %235, %234 : vector<8x32xf32>
    %237 = arith.divf %235, %236 : vector<8x32xf32>
    %238 = vector.extract_strided_slice %224 {offsets = [0, 32], sizes = [8, 32], strides = [1, 1]} : vector<8x96xf32> to vector<8x32xf32>
    %239 = vector.extract_strided_slice %229 {offsets = [0, 32], sizes = [8, 32], strides = [1, 1]} : vector<8x96xf32> to vector<8x32xf32>
    %240 = arith.addf %238, %239 : vector<8x32xf32>
    %241 = arith.negf %240 : vector<8x32xf32>
    %242 = math.exp %241 : vector<8x32xf32>
    %cst_114 = arith.constant 1.000000e+00 : f32
    %243 = vector.broadcast %cst_114 : f32 to vector<8x32xf32>
    %244 = arith.addf %243, %242 : vector<8x32xf32>
    %245 = arith.divf %243, %244 : vector<8x32xf32>
    %246 = vector.extract_strided_slice %224 {offsets = [0, 64], sizes = [8, 32], strides = [1, 1]} : vector<8x96xf32> to vector<8x32xf32>
    %247 = vector.extract_strided_slice %229 {offsets = [0, 64], sizes = [8, 32], strides = [1, 1]} : vector<8x96xf32> to vector<8x32xf32>
    %248 = arith.mulf %237, %247 : vector<8x32xf32>
    %249 = arith.addf %246, %248 : vector<8x32xf32>
    %250 = math.tanh %249 : vector<8x32xf32>
    %251 = arith.subf %125, %250 : vector<8x32xf32>
    %252 = arith.mulf %245, %251 : vector<8x32xf32>
    %253 = arith.addf %250, %252 : vector<8x32xf32>
    %c0_115 = arith.constant 0 : index
    %c0_116 = arith.constant 0 : index
    %254 = vector.load %arg17[%c0_115, %c0_116] : memref<32x16xf32, #tpu.memory_space<vmem>>, vector<32x16xf32>
    %cst_117 = arith.constant dense<0.000000e+00> : vector<8x16xf32>
    %255 = tpu.matmul %253, %254, %cst_117 {dimension_numbers = #tpu.dot_dimension_numbers<[1], [0], [0], [1], [0, 0, 1, 1], [], []>} : vector<8x32xf32>, vector<32x16xf32>, vector<8x16xf32> -> vector<8x16xf32>
    %c0_118 = arith.constant 0 : index
    %c0_119 = arith.constant 0 : index
    %256 = vector.load %arg18[%c0_118, %c0_119] : memref<1x16xf32, #tpu.memory_space<vmem>>, vector<1x16xf32>
    %257 = vector.broadcast %256 : vector<1x16xf32> to vector<8x16xf32>
    %258 = arith.addf %255, %257 : vector<8x16xf32>
    %259 = math.tanh %258 : vector<8x16xf32>
    %c0_120 = arith.constant 0 : index
    %c0_121 = arith.constant 0 : index
    %c0_122 = arith.constant 0 : index
    %260 = vector.load %arg19[%c0_120, %c0_121, %c0_122] : memref<1x8x16xf32, #tpu.memory_space<vmem>>, vector<1x8x16xf32>
    %261 = vector.shape_cast %260 : vector<1x8x16xf32> to vector<8x16xf32>
    %262 = vector.shape_cast %259 : vector<8x16xf32> to vector<1x8x16xf32>
    tpu.vector_store %arg19[%c0_120, %c0_121, %c0_122], %262 {strides = array<i32>} : memref<1x8x16xf32, #tpu.memory_space<vmem>>, vector<1x8x16xf32>,
    return
  }
  func.func @transform_0(%arg0: i32) -> (i32, i32, i32) {
    %c0_i32 = arith.constant 0 : i32
    %c0_i32_0 = arith.constant 0 : i32
    %c0_i32_1 = arith.constant 0 : i32
    return %arg0, %c0_i32, %c0_i32_0 : i32, i32, i32
  }
  func.func @transform_1(%arg0: i32) -> (i32, i32, i32) {
    %c0_i32 = arith.constant 0 : i32
    %c0_i32_0 = arith.constant 0 : i32
    %c0_i32_1 = arith.constant 0 : i32
    %c0_i32_2 = arith.constant 0 : i32
    return %c0_i32, %c0_i32_0, %c0_i32_1 : i32, i32, i32
  }
  func.func @transform_2(%arg0: i32) -> (i32, i32, i32) {
    %c0_i32 = arith.constant 0 : i32
    %c0_i32_0 = arith.constant 0 : i32
    %c0_i32_1 = arith.constant 0 : i32
    %c0_i32_2 = arith.constant 0 : i32
    return %c0_i32, %c0_i32_0, %c0_i32_1 : i32, i32, i32
  }
  func.func @transform_3(%arg0: i32) -> (i32, i32, i32) {
    %c0_i32 = arith.constant 0 : i32
    %c0_i32_0 = arith.constant 0 : i32
    %c0_i32_1 = arith.constant 0 : i32
    %c0_i32_2 = arith.constant 0 : i32
    return %c0_i32, %c0_i32_0, %c0_i32_1 : i32, i32, i32
  }
  func.func @transform_4(%arg0: i32) -> (i32, i32, i32) {
    %c0_i32 = arith.constant 0 : i32
    %c0_i32_0 = arith.constant 0 : i32
    %c0_i32_1 = arith.constant 0 : i32
    %c0_i32_2 = arith.constant 0 : i32
    return %c0_i32, %c0_i32_0, %c0_i32_1 : i32, i32, i32
  }
  func.func @transform_5(%arg0: i32) -> (i32, i32, i32) {
    %c0_i32 = arith.constant 0 : i32
    %c0_i32_0 = arith.constant 0 : i32
    %c0_i32_1 = arith.constant 0 : i32
    %c0_i32_2 = arith.constant 0 : i32
    return %c0_i32, %c0_i32_0, %c0_i32_1 : i32, i32, i32
  }
  func.func @transform_6(%arg0: i32) -> (i32, i32, i32) {
    %c0_i32 = arith.constant 0 : i32
    %c0_i32_0 = arith.constant 0 : i32
    %c0_i32_1 = arith.constant 0 : i32
    %c0_i32_2 = arith.constant 0 : i32
    return %c0_i32, %c0_i32_0, %c0_i32_1 : i32, i32, i32
  }
  func.func @transform_7(%arg0: i32) -> (i32, i32) {
    %c0_i32 = arith.constant 0 : i32
    %c0_i32_0 = arith.constant 0 : i32
    %c0_i32_1 = arith.constant 0 : i32
    return %c0_i32, %c0_i32_0 : i32, i32
  }
  func.func @transform_8(%arg0: i32) -> (i32, i32) {
    %c0_i32 = arith.constant 0 : i32
    %c0_i32_0 = arith.constant 0 : i32
    %c0_i32_1 = arith.constant 0 : i32
    return %c0_i32, %c0_i32_0 : i32, i32
  }
  func.func @transform_9(%arg0: i32) -> (i32, i32) {
    %c0_i32 = arith.constant 0 : i32
    %c0_i32_0 = arith.constant 0 : i32
    %c0_i32_1 = arith.constant 0 : i32
    return %c0_i32, %c0_i32_0 : i32, i32
  }
  func.func @transform_10(%arg0: i32) -> (i32, i32) {
    %c0_i32 = arith.constant 0 : i32
    %c0_i32_0 = arith.constant 0 : i32
    %c0_i32_1 = arith.constant 0 : i32
    return %c0_i32, %c0_i32_0 : i32, i32
  }
  func.func @transform_11(%arg0: i32) -> (i32, i32) {
    %c0_i32 = arith.constant 0 : i32
    %c0_i32_0 = arith.constant 0 : i32
    %c0_i32_1 = arith.constant 0 : i32
    return %c0_i32, %c0_i32_0 : i32, i32
  }
  func.func @transform_12(%arg0: i32) -> (i32, i32) {
    %c0_i32 = arith.constant 0 : i32
    %c0_i32_0 = arith.constant 0 : i32
    %c0_i32_1 = arith.constant 0 : i32
    return %c0_i32, %c0_i32_0 : i32, i32
  }
  func.func @transform_13(%arg0: i32) -> (i32, i32) {
    %c0_i32 = arith.constant 0 : i32
    %c0_i32_0 = arith.constant 0 : i32
    %c0_i32_1 = arith.constant 0 : i32
    return %c0_i32, %c0_i32_0 : i32, i32
  }
  func.func @transform_14(%arg0: i32) -> (i32, i32) {
    %c0_i32 = arith.constant 0 : i32
    %c0_i32_0 = arith.constant 0 : i32
    %c0_i32_1 = arith.constant 0 : i32
    return %c0_i32, %c0_i32_0 : i32, i32
  }
  func.func @transform_15(%arg0: i32) -> (i32, i32) {
    %c0_i32 = arith.constant 0 : i32
    %c0_i32_0 = arith.constant 0 : i32
    %c0_i32_1 = arith.constant 0 : i32
    return %c0_i32, %c0_i32_0 : i32, i32
  }
  func.func @transform_16(%arg0: i32) -> (i32, i32) {
    %c0_i32 = arith.constant 0 : i32
    %c0_i32_0 = arith.constant 0 : i32
    %c0_i32_1 = arith.constant 0 : i32
    return %c0_i32, %c0_i32_0 : i32, i32
  }
  func.func @transform_17(%arg0: i32) -> (i32, i32) {
    %c0_i32 = arith.constant 0 : i32
    %c0_i32_0 = arith.constant 0 : i32
    %c0_i32_1 = arith.constant 0 : i32
    return %c0_i32, %c0_i32_0 : i32, i32
  }
  func.func @transform_18(%arg0: i32) -> (i32, i32, i32) {
    %c0_i32 = arith.constant 0 : i32
    %c0_i32_0 = arith.constant 0 : i32
    %c0_i32_1 = arith.constant 0 : i32
    return %arg0, %c0_i32, %c0_i32_0 : i32, i32, i32
  }
}

</mosaic_0001>

<llo_original>
// kernel: simple_gru_forward.1
$region0: #{simple_gru_forward.1}
  #allocation0 [shape = 'u32[]', space=smem, size = 0x4, offset = 0x4, fixed_abs, tag = 'smem constant byte address 0x4 - core index']
  #allocation1 [shape = 'u32[144,128]{1,0:T(1,128)}', space=vmem, size = 0x12000, scoped, tag = 'internal scratch']
  %s0 = inlined_call_operand.vmem [shape: f32[2,8,16], index: 0, kind: input, shape index: {}]
  %s1 = inlined_call_operand.vmem [shape: f32[2,16,128], index: 1, kind: input, shape index: {}]
  %s2 = inlined_call_operand.vmem [shape: f32[2,16,128], index: 2, kind: input, shape index: {}]
  %s3 = inlined_call_operand.vmem [shape: f32[2,1,128], index: 3, kind: input, shape index: {}]
  %s4 = inlined_call_operand.vmem [shape: f32[2,1,128], index: 4, kind: input, shape index: {}]
  %s5 = inlined_call_operand.vmem [shape: f32[2,128,32], index: 5, kind: input, shape index: {}]
  %s6 = inlined_call_operand.vmem [shape: f32[2,1,32], index: 6, kind: input, shape index: {}]
  %s7 = inlined_call_operand.vmem [shape: f32[32,96], index: 7, kind: input, shape index: {}]
  %s8 = inlined_call_operand.vmem [shape: f32[16,96], index: 8, kind: input, shape index: {}]
  %s9 = inlined_call_operand.vmem [shape: f32[1,96], index: 9, kind: input, shape index: {}]
  %s10 = inlined_call_operand.vmem [shape: f32[32,96], index: 10, kind: input, shape index: {}]
  %s11 = inlined_call_operand.vmem [shape: f32[1,96], index: 11, kind: input, shape index: {}]
  %s12 = inlined_call_operand.vmem [shape: f32[32,96], index: 12, kind: input, shape index: {}]
  %s13 = inlined_call_operand.vmem [shape: f32[1,96], index: 13, kind: input, shape index: {}]
  %s14 = inlined_call_operand.vmem [shape: f32[32,96], index: 14, kind: input, shape index: {}]
  %s15 = inlined_call_operand.vmem [shape: f32[1,96], index: 15, kind: input, shape index: {}]
  %s16 = inlined_call_operand.vmem [shape: f32[32,16], index: 16, kind: input, shape index: {}]
  %s17 = inlined_call_operand.vmem [shape: f32[1,16], index: 17, kind: input, shape index: {}]
  %s18 = inlined_call_operand.hbm [shape: f32[2,8,16], index: 18, kind: output, shape index: {}]
  %s19 = sld [smem:[#allocation0]]
  $region105: #{simple_gru_forward.1} parent=0
    _
  %s21 = ssub.s32 1, %s19
  %s22 = scalar_select 0, %s21, %s19
  $region1: #{simple_gru_forward.1} parent=0
    #allocation2 [shape = 'u8[8192]{0}', space=vmem, size = 0x2000, scoped, tag = 'output window, operand 0']
    #allocation3 [shape = 's32[2]{0}', space=sflag, size = 0x8, scoped, tag = 'scoped memory for simple_gru_forward.1']
    %23 = vsyncpa [#allocation3], 0
    %s24 = scalar_lea.sflag [#allocation3], 1
    %25 = vsyncpa %s24, 0
    loop: start=0, step=1, limit=4
    $region2: #{simple_gru_forward.1} parent=1 // loop_pre_header
      _
    $region3: #{simple_gru_forward.1} parent=1 // loop_header
      %s27 = sphi 0, %s31
      %p28 = scmp.ge.s32.totalorder %s27, 4
      %s37 = sphi 0, %s39
      %s40 = sphi 0, %s37
      %s41 = sphi 0, %s40
      %s57 = sphi 0, %s41
      %s61 = sphi 0, %s61
      %s63 = sphi 0, %s61
      %s64 = sphi 0, %s63
      %s78 = sphi 0, %s64
      %s82 = sphi 0, %s82
      %s84 = sphi 0, %s82
      %s85 = sphi 0, %s84
      %s99 = sphi 0, %s85
      %s103 = sphi 0, %s103
      %s105 = sphi 0, %s103
      %s106 = sphi 0, %s105
      %s120 = sphi 0, %s106
      %s124 = sphi 0, %s124
      %s126 = sphi 0, %s124
      %s127 = sphi 0, %s126
      %s141 = sphi 0, %s127
      %s145 = sphi 0, %s145
      %s147 = sphi 0, %s145
      %s148 = sphi 0, %s147
      %s162 = sphi 0, %s148
      %s166 = sphi 0, %s166
      %s168 = sphi 0, %s166
      %s169 = sphi 0, %s168
      %s183 = sphi 0, %s169
      %s187 = sphi 0, %s187
      %s189 = sphi 0, %s187
      %s190 = sphi 0, %s189
      %s204 = sphi 0, %s190
      %s208 = sphi 0, %s208
      %s210 = sphi 0, %s208
      %s211 = sphi 0, %s210
      %s225 = sphi 0, %s211
      %s229 = sphi 0, %s229
      %s231 = sphi 0, %s229
      %s232 = sphi 0, %s231
      %s246 = sphi 0, %s232
      %s250 = sphi 0, %s250
      %s252 = sphi 0, %s250
      %s253 = sphi 0, %s252
      %s267 = sphi 0, %s253
      %s271 = sphi 0, %s271
      %s273 = sphi 0, %s271
      %s274 = sphi 0, %s273
      %s288 = sphi 0, %s274
      %s292 = sphi 0, %s292
      %s294 = sphi 0, %s292
      %s295 = sphi 0, %s294
      %s309 = sphi 0, %s295
      %s313 = sphi 0, %s313
      %s315 = sphi 0, %s313
      %s316 = sphi 0, %s315
      %s330 = sphi 0, %s316
      %s334 = sphi 0, %s334
      %s336 = sphi 0, %s334
      %s337 = sphi 0, %s336
      %s351 = sphi 0, %s337
      %s355 = sphi 0, %s355
      %s357 = sphi 0, %s355
      %s358 = sphi 0, %s357
      %s372 = sphi 0, %s358
      %s376 = sphi 0, %s376
      %s378 = sphi 0, %s376
      %s379 = sphi 0, %s378
      %s393 = sphi 0, %s379
      %s397 = sphi 0, %s397
      %s399 = sphi 0, %s397
      %s400 = sphi 0, %s399
      %s414 = sphi 0, %s400
      %s420 = sphi 0, %s422
      %s423 = sphi 0, %s420
      %s424 = sphi 0, %s423
      %s440 = sphi 0, %s424
    $region4: #{simple_gru_forward.1} parent=1 // loop_header_branch
      %30 = sbr.rel (%p28) target = $region8
    $region5: #{simple_gru_forward.1} parent=1 // loop_body
      %s32 = ssub.s32 %s27, 1
      %s33 = ssub.s32 %s27, 2
      %s34 = sadd.s32 %s27, 1
      %s35 = ssub.s32 %s27, %s34
      %p36 = scmp.eq.s32.totalorder %s35, 0
      %s38 = sadd.s32 %s37, 1
      %s39 = scalar_select %p36, %s37, %s38
      %p42 = pneg %p36
      %p43 = scmp.eq.s32.totalorder %s27, 1
      %p44 = por %p42, %p43
      %p45 = scmp.ne.s32.totalorder %s37, %s40
      %p46 = scmp.eq.s32.totalorder %s27, 0
      %p47 = por %p45, %p46
      %p48 = scmp.ne.s32.totalorder %s37, %s40
      %p49 = scmp.eq.s32.totalorder %s32, 1
      %p50 = por %p48, %p49
      %p51 = scmp.ne.s32.totalorder %s40, %s41
      %p52 = scmp.eq.s32.totalorder %s32, 0
      %p53 = por %p51, %p52
      %p54 = scmp.ne.s32.totalorder %s40, %s41
      %p55 = scmp.eq.s32.totalorder %s33, 1
      %p56 = por %p54, %p55
      %p58 = scmp.ne.s32.totalorder %s41, %s57
      %p59 = scmp.eq.s32.totalorder %s33, 0
      %p60 = por %p58, %p59
      %s62 = sadd.s32 %s61, 1
      %p65 = scmp.eq.s32.totalorder %s27, 1
      %p66 = scmp.ne.s32.totalorder %s61, %s63
      %p67 = scmp.eq.s32.totalorder %s27, 0
      %p68 = por %p66, %p67
      %p69 = scmp.ne.s32.totalorder %s61, %s63
      %p70 = scmp.eq.s32.totalorder %s32, 1
      %p71 = por %p69, %p70
      %p72 = scmp.ne.s32.totalorder %s63, %s64
      %p73 = scmp.eq.s32.totalorder %s32, 0
      %p74 = por %p72, %p73
      %p75 = scmp.ne.s32.totalorder %s63, %s64
      %p76 = scmp.eq.s32.totalorder %s33, 1
      %p77 = por %p75, %p76
      %p79 = scmp.ne.s32.totalorder %s64, %s78
      %p80 = scmp.eq.s32.totalorder %s33, 0
      %p81 = por %p79, %p80
      %s83 = sadd.s32 %s82, 1
      %p86 = scmp.eq.s32.totalorder %s27, 1
      %p87 = scmp.ne.s32.totalorder %s82, %s84
      %p88 = scmp.eq.s32.totalorder %s27, 0
      %p89 = por %p87, %p88
      %p90 = scmp.ne.s32.totalorder %s82, %s84
      %p91 = scmp.eq.s32.totalorder %s32, 1
      %p92 = por %p90, %p91
      %p93 = scmp.ne.s32.totalorder %s84, %s85
      %p94 = scmp.eq.s32.totalorder %s32, 0
      %p95 = por %p93, %p94
      %p96 = scmp.ne.s32.totalorder %s84, %s85
      %p97 = scmp.eq.s32.totalorder %s33, 1
      %p98 = por %p96, %p97
      %p100 = scmp.ne.s32.totalorder %s85, %s99
      %p101 = scmp.eq.s32.totalorder %s33, 0
      %p102 = por %p100, %p101
      %s104 = sadd.s32 %s103, 1
      %p107 = scmp.eq.s32.totalorder %s27, 1
      %p108 = scmp.ne.s32.totalorder %s103, %s105
      %p109 = scmp.eq.s32.totalorder %s27, 0
      %p110 = por %p108, %p109
      %p111 = scmp.ne.s32.totalorder %s103, %s105
      %p112 = scmp.eq.s32.totalorder %s32, 1
      %p113 = por %p111, %p112
      %p114 = scmp.ne.s32.totalorder %s105, %s106
      %p115 = scmp.eq.s32.totalorder %s32, 0
      %p116 = por %p114, %p115
      %p117 = scmp.ne.s32.totalorder %s105, %s106
      %p118 = scmp.eq.s32.totalorder %s33, 1
      %p119 = por %p117, %p118
      %p121 = scmp.ne.s32.totalorder %s106, %s120
      %p122 = scmp.eq.s32.totalorder %s33, 0
      %p123 = por %p121, %p122
      %s125 = sadd.s32 %s124, 1
      %p128 = scmp.eq.s32.totalorder %s27, 1
      %p129 = scmp.ne.s32.totalorder %s124, %s126
      %p130 = scmp.eq.s32.totalorder %s27, 0
      %p131 = por %p129, %p130
      %p132 = scmp.ne.s32.totalorder %s124, %s126
      %p133 = scmp.eq.s32.totalorder %s32, 1
      %p134 = por %p132, %p133
      %p135 = scmp.ne.s32.totalorder %s126, %s127
      %p136 = scmp.eq.s32.totalorder %s32, 0
      %p137 = por %p135, %p136
      %p138 = scmp.ne.s32.totalorder %s126, %s127
      %p139 = scmp.eq.s32.totalorder %s33, 1
      %p140 = por %p138, %p139
      %p142 = scmp.ne.s32.totalorder %s127, %s141
      %p143 = scmp.eq.s32.totalorder %s33, 0
      %p144 = por %p142, %p143
      %s146 = sadd.s32 %s145, 1
      %p149 = scmp.eq.s32.totalorder %s27, 1
      %p150 = scmp.ne.s32.totalorder %s145, %s147
      %p151 = scmp.eq.s32.totalorder %s27, 0
      %p152 = por %p150, %p151
      %p153 = scmp.ne.s32.totalorder %s145, %s147
      %p154 = scmp.eq.s32.totalorder %s32, 1
      %p155 = por %p153, %p154
      %p156 = scmp.ne.s32.totalorder %s147, %s148
      %p157 = scmp.eq.s32.totalorder %s32, 0
      %p158 = por %p156, %p157
      %p159 = scmp.ne.s32.totalorder %s147, %s148
      %p160 = scmp.eq.s32.totalorder %s33, 1
      %p161 = por %p159, %p160
      %p163 = scmp.ne.s32.totalorder %s148, %s162
      %p164 = scmp.eq.s32.totalorder %s33, 0
      %p165 = por %p163, %p164
      %s167 = sadd.s32 %s166, 1
      %p170 = scmp.eq.s32.totalorder %s27, 1
      %p171 = scmp.ne.s32.totalorder %s166, %s168
      %p172 = scmp.eq.s32.totalorder %s27, 0
      %p173 = por %p171, %p172
      %p174 = scmp.ne.s32.totalorder %s166, %s168
      %p175 = scmp.eq.s32.totalorder %s32, 1
      %p176 = por %p174, %p175
      %p177 = scmp.ne.s32.totalorder %s168, %s169
      %p178 = scmp.eq.s32.totalorder %s32, 0
      %p179 = por %p177, %p178
      %p180 = scmp.ne.s32.totalorder %s168, %s169
      %p181 = scmp.eq.s32.totalorder %s33, 1
      %p182 = por %p180, %p181
      %p184 = scmp.ne.s32.totalorder %s169, %s183
      %p185 = scmp.eq.s32.totalorder %s33, 0
      %p186 = por %p184, %p185
      %s188 = sadd.s32 %s187, 1
      %p191 = scmp.eq.s32.totalorder %s27, 1
      %p192 = scmp.ne.s32.totalorder %s187, %s189
      %p193 = scmp.eq.s32.totalorder %s27, 0
      %p194 = por %p192, %p193
      %p195 = scmp.ne.s32.totalorder %s187, %s189
      %p196 = scmp.eq.s32.totalorder %s32, 1
      %p197 = por %p195, %p196
      %p198 = scmp.ne.s32.totalorder %s189, %s190
      %p199 = scmp.eq.s32.totalorder %s32, 0
      %p200 = por %p198, %p199
      %p201 = scmp.ne.s32.totalorder %s189, %s190
      %p202 = scmp.eq.s32.totalorder %s33, 1
      %p203 = por %p201, %p202
      %p205 = scmp.ne.s32.totalorder %s190, %s204
      %p206 = scmp.eq.s32.totalorder %s33, 0
      %p207 = por %p205, %p206
      %s209 = sadd.s32 %s208, 1
      %p212 = scmp.eq.s32.totalorder %s27, 1
      %p213 = scmp.ne.s32.totalorder %s208, %s210
      %p214 = scmp.eq.s32.totalorder %s27, 0
      %p215 = por %p213, %p214
      %p216 = scmp.ne.s32.totalorder %s208, %s210
      %p217 = scmp.eq.s32.totalorder %s32, 1
      %p218 = por %p216, %p217
      %p219 = scmp.ne.s32.totalorder %s210, %s211
      %p220 = scmp.eq.s32.totalorder %s32, 0
      %p221 = por %p219, %p220
      %p222 = scmp.ne.s32.totalorder %s210, %s211
      %p223 = scmp.eq.s32.totalorder %s33, 1
      %p224 = por %p222, %p223
      %p226 = scmp.ne.s32.totalorder %s211, %s225
      %p227 = scmp.eq.s32.totalorder %s33, 0
      %p228 = por %p226, %p227
      %s230 = sadd.s32 %s229, 1
      %p233 = scmp.eq.s32.totalorder %s27, 1
      %p234 = scmp.ne.s32.totalorder %s229, %s231
      %p235 = scmp.eq.s32.totalorder %s27, 0
      %p236 = por %p234, %p235
      %p237 = scmp.ne.s32.totalorder %s229, %s231
      %p238 = scmp.eq.s32.totalorder %s32, 1
      %p239 = por %p237, %p238
      %p240 = scmp.ne.s32.totalorder %s231, %s232
      %p241 = scmp.eq.s32.totalorder %s32, 0
      %p242 = por %p240, %p241
      %p243 = scmp.ne.s32.totalorder %s231, %s232
      %p244 = scmp.eq.s32.totalorder %s33, 1
      %p245 = por %p243, %p244
      %p247 = scmp.ne.s32.totalorder %s232, %s246
      %p248 = scmp.eq.s32.totalorder %s33, 0
      %p249 = por %p247, %p248
      %s251 = sadd.s32 %s250, 1
      %p254 = scmp.eq.s32.totalorder %s27, 1
      %p255 = scmp.ne.s32.totalorder %s250, %s252
      %p256 = scmp.eq.s32.totalorder %s27, 0
      %p257 = por %p255, %p256
      %p258 = scmp.ne.s32.totalorder %s250, %s252
      %p259 = scmp.eq.s32.totalorder %s32, 1
      %p260 = por %p258, %p259
      %p261 = scmp.ne.s32.totalorder %s252, %s253
      %p262 = scmp.eq.s32.totalorder %s32, 0
      %p263 = por %p261, %p262
      %p264 = scmp.ne.s32.totalorder %s252, %s253
      %p265 = scmp.eq.s32.totalorder %s33, 1
      %p266 = por %p264, %p265
      %p268 = scmp.ne.s32.totalorder %s253, %s267
      %p269 = scmp.eq.s32.totalorder %s33, 0
      %p270 = por %p268, %p269
      %s272 = sadd.s32 %s271, 1
      %p275 = scmp.eq.s32.totalorder %s27, 1
      %p276 = scmp.ne.s32.totalorder %s271, %s273
      %p277 = scmp.eq.s32.totalorder %s27, 0
      %p278 = por %p276, %p277
      %p279 = scmp.ne.s32.totalorder %s271, %s273
      %p280 = scmp.eq.s32.totalorder %s32, 1
      %p281 = por %p279, %p280
      %p282 = scmp.ne.s32.totalorder %s273, %s274
      %p283 = scmp.eq.s32.totalorder %s32, 0
      %p284 = por %p282, %p283
      %p285 = scmp.ne.s32.totalorder %s273, %s274
      %p286 = scmp.eq.s32.totalorder %s33, 1
      %p287 = por %p285, %p286
      %p289 = scmp.ne.s32.totalorder %s274, %s288
      %p290 = scmp.eq.s32.totalorder %s33, 0
      %p291 = por %p289, %p290
      %s293 = sadd.s32 %s292, 1
      %p296 = scmp.eq.s32.totalorder %s27, 1
      %p297 = scmp.ne.s32.totalorder %s292, %s294
      %p298 = scmp.eq.s32.totalorder %s27, 0
      %p299 = por %p297, %p298
      %p300 = scmp.ne.s32.totalorder %s292, %s294
      %p301 = scmp.eq.s32.totalorder %s32, 1
      %p302 = por %p300, %p301
      %p303 = scmp.ne.s32.totalorder %s294, %s295
      %p304 = scmp.eq.s32.totalorder %s32, 0
      %p305 = por %p303, %p304
      %p306 = scmp.ne.s32.totalorder %s294, %s295
      %p307 = scmp.eq.s32.totalorder %s33, 1
      %p308 = por %p306, %p307
      %p310 = scmp.ne.s32.totalorder %s295, %s309
      %p311 = scmp.eq.s32.totalorder %s33, 0
      %p312 = por %p310, %p311
      %s314 = sadd.s32 %s313, 1
      %p317 = scmp.eq.s32.totalorder %s27, 1
      %p318 = scmp.ne.s32.totalorder %s313, %s315
      %p319 = scmp.eq.s32.totalorder %s27, 0
      %p320 = por %p318, %p319
      %p321 = scmp.ne.s32.totalorder %s313, %s315
      %p322 = scmp.eq.s32.totalorder %s32, 1
      %p323 = por %p321, %p322
      %p324 = scmp.ne.s32.totalorder %s315, %s316
      %p325 = scmp.eq.s32.totalorder %s32, 0
      %p326 = por %p324, %p325
      %p327 = scmp.ne.s32.totalorder %s315, %s316
      %p328 = scmp.eq.s32.totalorder %s33, 1
      %p329 = por %p327, %p328
      %p331 = scmp.ne.s32.totalorder %s316, %s330
      %p332 = scmp.eq.s32.totalorder %s33, 0
      %p333 = por %p331, %p332
      %s335 = sadd.s32 %s334, 1
      %p338 = scmp.eq.s32.totalorder %s27, 1
      %p339 = scmp.ne.s32.totalorder %s334, %s336
      %p340 = scmp.eq.s32.totalorder %s27, 0
      %p341 = por %p339, %p340
      %p342 = scmp.ne.s32.totalorder %s334, %s336
      %p343 = scmp.eq.s32.totalorder %s32, 1
      %p344 = por %p342, %p343
      %p345 = scmp.ne.s32.totalorder %s336, %s337
      %p346 = scmp.eq.s32.totalorder %s32, 0
      %p347 = por %p345, %p346
      %p348 = scmp.ne.s32.totalorder %s336, %s337
      %p349 = scmp.eq.s32.totalorder %s33, 1
      %p350 = por %p348, %p349
      %p352 = scmp.ne.s32.totalorder %s337, %s351
      %p353 = scmp.eq.s32.totalorder %s33, 0
      %p354 = por %p352, %p353
      %s356 = sadd.s32 %s355, 1
      %p359 = scmp.eq.s32.totalorder %s27, 1
      %p360 = scmp.ne.s32.totalorder %s355, %s357
      %p361 = scmp.eq.s32.totalorder %s27, 0
      %p362 = por %p360, %p361
      %p363 = scmp.ne.s32.totalorder %s355, %s357
      %p364 = scmp.eq.s32.totalorder %s32, 1
      %p365 = por %p363, %p364
      %p366 = scmp.ne.s32.totalorder %s357, %s358
      %p367 = scmp.eq.s32.totalorder %s32, 0
      %p368 = por %p366, %p367
      %p369 = scmp.ne.s32.totalorder %s357, %s358
      %p370 = scmp.eq.s32.totalorder %s33, 1
      %p371 = por %p369, %p370
      %p373 = scmp.ne.s32.totalorder %s358, %s372
      %p374 = scmp.eq.s32.totalorder %s33, 0
      %p375 = por %p373, %p374
      %s377 = sadd.s32 %s376, 1
      %p380 = scmp.eq.s32.totalorder %s27, 1
      %p381 = scmp.ne.s32.totalorder %s376, %s378
      %p382 = scmp.eq.s32.totalorder %s27, 0
      %p383 = por %p381, %p382
      %p384 = scmp.ne.s32.totalorder %s376, %s378
      %p385 = scmp.eq.s32.totalorder %s32, 1
      %p386 = por %p384, %p385
      %p387 = scmp.ne.s32.totalorder %s378, %s379
      %p388 = scmp.eq.s32.totalorder %s32, 0
      %p389 = por %p387, %p388
      %p390 = scmp.ne.s32.totalorder %s378, %s379
      %p391 = scmp.eq.s32.totalorder %s33, 1
      %p392 = por %p390, %p391
      %p394 = scmp.ne.s32.totalorder %s379, %s393
      %p395 = scmp.eq.s32.totalorder %s33, 0
      %p396 = por %p394, %p395
      %s398 = sadd.s32 %s397, 1
      %p401 = scmp.eq.s32.totalorder %s27, 1
      %p402 = scmp.ne.s32.totalorder %s397, %s399
      %p403 = scmp.eq.s32.totalorder %s27, 0
      %p404 = por %p402, %p403
      %p405 = scmp.ne.s32.totalorder %s397, %s399
      %p406 = scmp.eq.s32.totalorder %s32, 1
      %p407 = por %p405, %p406
      %p408 = scmp.ne.s32.totalorder %s399, %s400
      %p409 = scmp.eq.s32.totalorder %s32, 0
      %p410 = por %p408, %p409
      %p411 = scmp.ne.s32.totalorder %s399, %s400
      %p412 = scmp.eq.s32.totalorder %s33, 1
      %p413 = por %p411, %p412
      %p415 = scmp.ne.s32.totalorder %s400, %s414
      %p416 = scmp.eq.s32.totalorder %s33, 0
      %p417 = por %p415, %p416
      %s418 = ssub.s32 %s27, %s34
      %p419 = scmp.eq.s32.totalorder %s418, 0
      %s421 = sadd.s32 %s420, 1
      %s422 = scalar_select %p419, %s420, %s421
      %p425 = pneg %p419
      %p426 = scmp.eq.s32.totalorder %s27, 1
      %p427 = por %p425, %p426
      %p428 = scmp.ne.s32.totalorder %s420, %s423
      %p429 = scmp.eq.s32.totalorder %s27, 0
      %p430 = por %p428, %p429
      %p431 = scmp.ne.s32.totalorder %s420, %s423
      %p432 = scmp.eq.s32.totalorder %s32, 1
      %p433 = por %p431, %p432
      %p434 = scmp.ne.s32.totalorder %s423, %s424
      %p435 = scmp.eq.s32.totalorder %s32, 0
      %p436 = por %p434, %p435
      %p437 = scmp.ne.s32.totalorder %s423, %s424
      %p438 = scmp.eq.s32.totalorder %s33, 1
      %p439 = por %p437, %p438
      %p441 = scmp.ne.s32.totalorder %s424, %s440
      %p442 = scmp.eq.s32.totalorder %s33, 0
      %p443 = por %p441, %p442
      %p444 = scmp.le.s32.totalorder 1, %s27
      %p445 = scmp.lt.s32.totalorder %s27, 3
      %p446 = pnand %p444, %p445
      %p447 = pneg %p446
      // Predicated region
      $region9: #{simple_gru_forward.1} parent=5 // pred_check
        _
      $region10: #{simple_gru_forward.1} parent=5 // pred_check_branch
        %449 = sbr.rel (%p446) target = $region12
      $region11: #{simple_gru_forward.1} parent=5 // pred_region
        %s450 = ssub.s32 %s27, 1
        // Predicated region
        $region13: #{simple_gru_forward.1} parent=11 // pred_check
          %p451 = pneg %p74
        $region14: #{simple_gru_forward.1} parent=11 // pred_check_branch
          %453 = sbr.rel (%p451) target = $region16
        $region15: #{simple_gru_forward.1} parent=11 // pred_region
          _
        $region16: #{simple_gru_forward.1} parent=11 // pred_fallthru
          _
        // Predicated region
        $region17: #{simple_gru_forward.1} parent=11 // pred_check
          %p454 = pneg %p95
        $region18: #{simple_gru_forward.1} parent=11 // pred_check_branch
          %456 = sbr.rel (%p454) target = $region20
        $region19: #{simple_gru_forward.1} parent=11 // pred_region
          _
        $region20: #{simple_gru_forward.1} parent=11 // pred_fallthru
          _
        // Predicated region
        $region21: #{simple_gru_forward.1} parent=11 // pred_check
          %p457 = pneg %p116
        $region22: #{simple_gru_forward.1} parent=11 // pred_check_branch
          %459 = sbr.rel (%p457) target = $region24
        $region23: #{simple_gru_forward.1} parent=11 // pred_region
          _
        $region24: #{simple_gru_forward.1} parent=11 // pred_fallthru
          _
        // Predicated region
        $region25: #{simple_gru_forward.1} parent=11 // pred_check
          %p460 = pneg %p137
        $region26: #{simple_gru_forward.1} parent=11 // pred_check_branch
          %462 = sbr.rel (%p460) target = $region28
        $region27: #{simple_gru_forward.1} parent=11 // pred_region
          _
        $region28: #{simple_gru_forward.1} parent=11 // pred_fallthru
          _
        // Predicated region
        $region29: #{simple_gru_forward.1} parent=11 // pred_check
          %p463 = pneg %p158
        $region30: #{simple_gru_forward.1} parent=11 // pred_check_branch
          %465 = sbr.rel (%p463) target = $region32
        $region31: #{simple_gru_forward.1} parent=11 // pred_region
          _
        $region32: #{simple_gru_forward.1} parent=11 // pred_fallthru
          _
        // Predicated region
        $region33: #{simple_gru_forward.1} parent=11 // pred_check
          %p466 = pneg %p179
        $region34: #{simple_gru_forward.1} parent=11 // pred_check_branch
          %468 = sbr.rel (%p466) target = $region36
        $region35: #{simple_gru_forward.1} parent=11 // pred_region
          _
        $region36: #{simple_gru_forward.1} parent=11 // pred_fallthru
          _
        // Predicated region
        $region37: #{simple_gru_forward.1} parent=11 // pred_check
          %p469 = pneg %p200
        $region38: #{simple_gru_forward.1} parent=11 // pred_check_branch
          %471 = sbr.rel (%p469) target = $region40
        $region39: #{simple_gru_forward.1} parent=11 // pred_region
          _
        $region40: #{simple_gru_forward.1} parent=11 // pred_fallthru
          _
        // Predicated region
        $region41: #{simple_gru_forward.1} parent=11 // pred_check
          %p472 = pneg %p221
        $region42: #{simple_gru_forward.1} parent=11 // pred_check_branch
          %474 = sbr.rel (%p472) target = $region44
        $region43: #{simple_gru_forward.1} parent=11 // pred_region
          _
        $region44: #{simple_gru_forward.1} parent=11 // pred_fallthru
          _
        // Predicated region
        $region45: #{simple_gru_forward.1} parent=11 // pred_check
          %p475 = pneg %p242
        $region46: #{simple_gru_forward.1} parent=11 // pred_check_branch
          %477 = sbr.rel (%p475) target = $region48
        $region47: #{simple_gru_forward.1} parent=11 // pred_region
          _
        $region48: #{simple_gru_forward.1} parent=11 // pred_fallthru
          _
        // Predicated region
        $region49: #{simple_gru_forward.1} parent=11 // pred_check
          %p478 = pneg %p263
        $region50: #{simple_gru_forward.1} parent=11 // pred_check_branch
          %480 = sbr.rel (%p478) target = $region52
        $region51: #{simple_gru_forward.1} parent=11 // pred_region
          _
        $region52: #{simple_gru_forward.1} parent=11 // pred_fallthru
          _
        // Predicated region
        $region53: #{simple_gru_forward.1} parent=11 // pred_check
          %p481 = pneg %p284
        $region54: #{simple_gru_forward.1} parent=11 // pred_check_branch
          %483 = sbr.rel (%p481) target = $region56
        $region55: #{simple_gru_forward.1} parent=11 // pred_region
          _
        $region56: #{simple_gru_forward.1} parent=11 // pred_fallthru
          _
        // Predicated region
        $region57: #{simple_gru_forward.1} parent=11 // pred_check
          %p484 = pneg %p305
        $region58: #{simple_gru_forward.1} parent=11 // pred_check_branch
          %486 = sbr.rel (%p484) target = $region60
        $region59: #{simple_gru_forward.1} parent=11 // pred_region
          _
        $region60: #{simple_gru_forward.1} parent=11 // pred_fallthru
          _
        // Predicated region
        $region61: #{simple_gru_forward.1} parent=11 // pred_check
          %p487 = pneg %p326
        $region62: #{simple_gru_forward.1} parent=11 // pred_check_branch
          %489 = sbr.rel (%p487) target = $region64
        $region63: #{simple_gru_forward.1} parent=11 // pred_region
          _
        $region64: #{simple_gru_forward.1} parent=11 // pred_fallthru
          _
        // Predicated region
        $region65: #{simple_gru_forward.1} parent=11 // pred_check
          %p490 = pneg %p347
        $region66: #{simple_gru_forward.1} parent=11 // pred_check_branch
          %492 = sbr.rel (%p490) target = $region68
        $region67: #{simple_gru_forward.1} parent=11 // pred_region
          _
        $region68: #{simple_gru_forward.1} parent=11 // pred_fallthru
          _
        // Predicated region
        $region69: #{simple_gru_forward.1} parent=11 // pred_check
          %p493 = pneg %p368
        $region70: #{simple_gru_forward.1} parent=11 // pred_check_branch
          %495 = sbr.rel (%p493) target = $region72
        $region71: #{simple_gru_forward.1} parent=11 // pred_region
          _
        $region72: #{simple_gru_forward.1} parent=11 // pred_fallthru
          _
        // Predicated region
        $region73: #{simple_gru_forward.1} parent=11 // pred_check
          %p496 = pneg %p389
        $region74: #{simple_gru_forward.1} parent=11 // pred_check_branch
          %498 = sbr.rel (%p496) target = $region76
        $region75: #{simple_gru_forward.1} parent=11 // pred_region
          _
        $region76: #{simple_gru_forward.1} parent=11 // pred_fallthru
          _
        // Predicated region
        $region77: #{simple_gru_forward.1} parent=11 // pred_check
          %p499 = pneg %p410
        $region78: #{simple_gru_forward.1} parent=11 // pred_check_branch
          %501 = sbr.rel (%p499) target = $region80
        $region79: #{simple_gru_forward.1} parent=11 // pred_region
          _
        $region80: #{simple_gru_forward.1} parent=11 // pred_fallthru
          _
      $region12: #{simple_gru_forward.1} parent=5 // pred_fallthru
        _
      %p502 = scmp.lt.s32.totalorder %s27, 2
      // Predicated region
      $region81: #{simple_gru_forward.1} parent=5 // pred_check
        %p503 = pneg %p502
      $region82: #{simple_gru_forward.1} parent=5 // pred_check_branch
        %505 = sbr.rel (%p503) target = $region84
      $region83: #{simple_gru_forward.1} parent=5 // pred_region
        // Predicated region
        $region85: #{simple_gru_forward.1} parent=83 // pred_check
          %p506 = pneg %p47
        $region86: #{simple_gru_forward.1} parent=83 // pred_check_branch
          %508 = sbr.rel (%p506) target = $region88
        $region87: #{simple_gru_forward.1} parent=83 // pred_region
          %p509 = scmp.lt.s32.totalorder %s27, 1
          %s510 = scalar_select %p509, %s27, 1
          %s511 = smul.addr %s510, 8
          %s512 = scalar_lea.vmem %s0, %s511
        $region88: #{simple_gru_forward.1} parent=83 // pred_fallthru
          _
      $region84: #{simple_gru_forward.1} parent=5 // pred_fallthru
        _
      %p513 = scmp.le.s32.totalorder 1, %s27
      %p514 = scmp.lt.s32.totalorder %s27, 3
      %p515 = pnand %p513, %p514
      %p516 = pneg %p515
      // Predicated region
      $region89: #{simple_gru_forward.1} parent=5 // pred_check
        _
      $region90: #{simple_gru_forward.1} parent=5 // pred_check_branch
        %518 = sbr.rel (%p515) target = $region92
      $region91: #{simple_gru_forward.1} parent=5 // pred_region
        %s519 = ssub.s32 %s27, 1
        %p520 = scmp.lt.s32.totalorder %s32, 1
        %s521 = scalar_select %p520, %s32, 1
        %s522 = smul.addr %s521, 8
        %s523 = scalar_lea.vmem %s0, %s522
        %p524 = pneg %p53
        %p525 = pneg %p50
        %p526 = pneg %p74
        %p527 = pneg %p71
        %p528 = pneg %p95
        %p529 = pneg %p92
        %p530 = pneg %p116
        %p531 = pneg %p113
        %p532 = pneg %p137
        %p533 = pneg %p134
        %p534 = pneg %p158
        %p535 = pneg %p155
        %p536 = pneg %p179
        %p537 = pneg %p176
        %p538 = pneg %p200
        %p539 = pneg %p197
        %p540 = pneg %p221
        %p541 = pneg %p218
        %p542 = pneg %p242
        %p543 = pneg %p239
        %p544 = pneg %p263
        %p545 = pneg %p260
        %p546 = pneg %p284
        %p547 = pneg %p281
        %p548 = pneg %p305
        %p549 = pneg %p302
        %p550 = pneg %p326
        %p551 = pneg %p323
        %p552 = pneg %p347
        %p553 = pneg %p344
        %p554 = pneg %p368
        %p555 = pneg %p365
        %p556 = pneg %p389
        %p557 = pneg %p386
        %p558 = pneg %p410
        %p559 = pneg %p407
        %p560 = pneg %p436
        %p561 = pneg %p433
        %s562 = sand.u32 %s423, 1
        %s563 = scalar_lea.sflag [#allocation3], %s562
        %s564 = sand.u32 %s423, 1
        %s565 = smul.addr %s564, 8
        %s566 = scalar_lea.vmem [#allocation2], %s565
        %p567 = scmp.lt.s32.totalorder %s32, 1
        %s568 = scalar_select %p567, %s32, 1
        %s569 = smul.addr %s568, 8
        %s570 = scalar_lea.vmem %s0, %s569
        %v571 = vld [vmem:[%s570] sm:$0xff]
        %v573 = vcombine.high %v571, %v571
        %v575 = vunpack.c.l.s4 1966171168
        %v576 = vunpack.c.0.s8 %v575
        %v577 = vlaneseq
        %v578 = vshrl.u32 %v577, 7
        %v579 = vsub.s32 %v576, %v578
        %v580 = vrot.slane %v571, %v579
        %v582 = vunpack.c.l.s4 1966171168
        %v583 = vunpack.c.0.s8 %v582
        %v584 = vlaneseq
        %v585 = vshrl.u32 %v584, 7
        %v586 = vsub.s32 %v583, %v585
        %v587 = vrot.slane %v573, %v586
        %v588 = vcombine.high %v580, %v580
        %v589 = vcombine.high %v587, %v587
        %v591 = vunpack.c.l.s4 1966171168
        %v592 = vunpack.c.0.s8 %v591
        %v593 = vlaneseq
        %v594 = vshrl.u32 %v593, 7
        %v595 = vsub.s32 %v592, %v594
        %v596 = vrot.slane %v580, %v595
        %v598 = vunpack.c.l.s4 1966171168
        %v599 = vunpack.c.0.s8 %v598
        %v600 = vlaneseq
        %v601 = vshrl.u32 %v600, 7
        %v602 = vsub.s32 %v599, %v601
        %v603 = vrot.slane %v587, %v602
        %v605 = vunpack.c.l.s4 1966171168
        %v606 = vunpack.c.0.s8 %v605
        %v607 = vlaneseq
        %v608 = vshrl.u32 %v607, 7
        %v609 = vsub.s32 %v606, %v608
        %v610 = vrot.slane %v588, %v609
        %v612 = vunpack.c.l.s4 1966171168
        %v613 = vunpack.c.0.s8 %v612
        %v614 = vlaneseq
        %v615 = vshrl.u32 %v614, 7
        %v616 = vsub.s32 %v613, %v615
        %v617 = vrot.slane %v589, %v616
        %v618 = vcombine.high %v596, %v596
        %v619 = vcombine.high %v603, %v603
        %v620 = vcombine.high %v610, %v610
        %v621 = vcombine.high %v617, %v617
        %v622 = vlaneseq
        %v623 = vshrl.u32 %v622, 7
        %v624 = vsub.s32 0, %v623
        %v625 = vrot.slane %v596, %v624
        %v626 = vlaneseq
        %v627 = vshrl.u32 %v626, 7
        %v628 = vsub.s32 0, %v627
        %v629 = vrot.slane %v610, %v628
        %v630 = vlaneseq
        %v631 = vshrl.u32 %v630, 7
        %v632 = vsub.s32 0, %v631
        %v633 = vrot.slane %v618, %v632
        %v634 = vlaneseq
        %v635 = vshrl.u32 %v634, 7
        %v636 = vsub.s32 0, %v635
        %v637 = vrot.slane %v620, %v636
        %v638 = vlaneseq
        %v639 = vshrl.u32 %v638, 7
        %v640 = vsub.s32 0, %v639
        %v641 = vrot.slane %v603, %v640
        %v642 = vlaneseq
        %v643 = vshrl.u32 %v642, 7
        %v644 = vsub.s32 0, %v643
        %v645 = vrot.slane %v617, %v644
        %v646 = vlaneseq
        %v647 = vshrl.u32 %v646, 7
        %v648 = vsub.s32 0, %v647
        %v649 = vrot.slane %v619, %v648
        %v650 = vlaneseq
        %v651 = vshrl.u32 %v650, 7
        %v652 = vsub.s32 0, %v651
        %v653 = vrot.slane %v621, %v652
        %v662 = vsub.f32 %v571, %v625
        %v663 = vsub.f32 %v571, %v629
        %v664 = vsub.f32 %v571, %v633
        %v665 = vsub.f32 %v571, %v637
        %v666 = vsub.f32 %v571, %v641
        %v667 = vsub.f32 %v571, %v645
        %v668 = vsub.f32 %v571, %v649
        %v669 = vsub.f32 %v571, %v653
        %v670 = vmul.f32 %v662, %v662
        %v671 = vmul.f32 %v663, %v663
        %v672 = vmul.f32 %v664, %v664
        %v673 = vmul.f32 %v665, %v665
        %v674 = vmul.f32 %v666, %v666
        %v675 = vmul.f32 %v667, %v667
        %v676 = vmul.f32 %v668, %v668
        %v677 = vmul.f32 %v669, %v669
        %vm678 = vcmask 15360
        %v679 = vsel %vm678, %v670, 0.0
        %680 = vadd.xlane.f32.xlu0 %v679
        %v681 = vpop.xlane.xlu0 %680
        %v682 = vsel %vm678, %v671, 0.0
        %683 = vadd.xlane.f32.xlu0 %v682
        %v684 = vpop.xlane.xlu0 %683
        %v685 = vsel %vm678, %v672, 0.0
        %686 = vadd.xlane.f32.xlu0 %v685
        %v687 = vpop.xlane.xlu0 %686
        %v688 = vsel %vm678, %v673, 0.0
        %689 = vadd.xlane.f32.xlu0 %v688
        %v690 = vpop.xlane.xlu0 %689
        %v691 = vsel %vm678, %v674, 0.0
        %692 = vadd.xlane.f32.xlu0 %v691
        %v693 = vpop.xlane.xlu0 %692
        %v694 = vsel %vm678, %v675, 0.0
        %695 = vadd.xlane.f32.xlu0 %v694
        %v696 = vpop.xlane.xlu0 %695
        %v697 = vsel %vm678, %v676, 0.0
        %698 = vadd.xlane.f32.xlu0 %v697
        %v699 = vpop.xlane.xlu0 %698
        %v700 = vsel %vm678, %v677, 0.0
        %701 = vadd.xlane.f32.xlu0 %v700
        %v702 = vpop.xlane.xlu0 %701
        %v703 = vrsqrt.pop %v681
        %v704 = vmul.f32 %v681, %v703
        %vm705 = vcmp.eq.f32.partialorder %v681, inf
        %v706 = vsel %vm705, %v681, %v704
        %vm707 = vcmp.eq.f32.partialorder %v681, 0.0
        %v708 = vand.u32 %v681, 2147483648
        %v709 = vsel %vm707, %v708, %v706
        %v710 = vrsqrt.pop %v684
        %v711 = vmul.f32 %v684, %v710
        %vm712 = vcmp.eq.f32.partialorder %v684, inf
        %v713 = vsel %vm712, %v684, %v711
        %vm714 = vcmp.eq.f32.partialorder %v684, 0.0
        %v715 = vand.u32 %v684, 2147483648
        %v716 = vsel %vm714, %v715, %v713
        %v717 = vrsqrt.pop %v687
        %v718 = vmul.f32 %v687, %v717
        %vm719 = vcmp.eq.f32.partialorder %v687, inf
        %v720 = vsel %vm719, %v687, %v718
        %vm721 = vcmp.eq.f32.partialorder %v687, 0.0
        %v722 = vand.u32 %v687, 2147483648
        %v723 = vsel %vm721, %v722, %v720
        %v724 = vrsqrt.pop %v690
        %v725 = vmul.f32 %v690, %v724
        %vm726 = vcmp.eq.f32.partialorder %v690, inf
        %v727 = vsel %vm726, %v690, %v725
        %vm728 = vcmp.eq.f32.partialorder %v690, 0.0
        %v729 = vand.u32 %v690, 2147483648
        %v730 = vsel %vm728, %v729, %v727
        %v731 = vrsqrt.pop %v693
        %v732 = vmul.f32 %v693, %v731
        %vm733 = vcmp.eq.f32.partialorder %v693, inf
        %v734 = vsel %vm733, %v693, %v732
        %vm735 = vcmp.eq.f32.partialorder %v693, 0.0
        %v736 = vand.u32 %v693, 2147483648
        %v737 = vsel %vm735, %v736, %v734
        %v738 = vrsqrt.pop %v696
        %v739 = vmul.f32 %v696, %v738
        %vm740 = vcmp.eq.f32.partialorder %v696, inf
        %v741 = vsel %vm740, %v696, %v739
        %vm742 = vcmp.eq.f32.partialorder %v696, 0.0
        %v743 = vand.u32 %v696, 2147483648
        %v744 = vsel %vm742, %v743, %v741
        %v745 = vrsqrt.pop %v699
        %v746 = vmul.f32 %v699, %v745
        %vm747 = vcmp.eq.f32.partialorder %v699, inf
        %v748 = vsel %vm747, %v699, %v746
        %vm749 = vcmp.eq.f32.partialorder %v699, 0.0
        %v750 = vand.u32 %v699, 2147483648
        %v751 = vsel %vm749, %v750, %v748
        %v752 = vrsqrt.pop %v702
        %v753 = vmul.f32 %v702, %v752
        %vm754 = vcmp.eq.f32.partialorder %v702, inf
        %v755 = vsel %vm754, %v702, %v753
        %vm756 = vcmp.eq.f32.partialorder %v702, 0.0
        %v757 = vand.u32 %v702, 2147483648
        %v758 = vsel %vm756, %v757, %v755
        %v759 = vld [vmem:[%s1] sm:$0xff]
        %v760 = vld [vmem:[%s1 + $0x8] sm:$0xff]
        %v761 = vld [vmem:[%s2] sm:$0xff]
        %v762 = vld [vmem:[%s2 + $0x8] sm:$0xff]
        %vm763 = vcmask 130048
        %v764 = vsel %vm763, %v571, 0
        %766 = vmatprep.subr.mxu0 0.0
        %767 = vmatpush1.msra.mxu0 0.0
        %768 = vmatprep.subr.mxu0 0.0
        %769 = vmatpush1.msra.mxu0 0.0
        %770 = vmatprep.subr.mxu0 0.0
        %771 = vmatpush1.msra.mxu0 0.0
        %772 = vmatprep.subr.mxu0 0.0
        %773 = vmatpush1.msra.mxu0 0.0
        %774 = vmatprep.subr.mxu0 0.0
        %775 = vmatpush1.msra.mxu0 0.0
        %776 = vmatprep.subr.mxu0 0.0
        %777 = vmatpush1.msra.mxu0 0.0
        %778 = vmatprep.subr.mxu0 0.0
        %779 = vmatpush1.msra.mxu0 0.0
        %780 = vmatprep.subr.mxu0 0.0
        %781 = vmatpush1.msra.mxu0 0.0
        %782 = vmatprep.subr.mxu0 0.0
        %783 = vmatpush1.msra.mxu0 0.0
        %784 = vmatprep.subr.mxu0 0.0
        %785 = vmatpush1.msra.mxu0 0.0
        %786 = vmatprep.subr.mxu0 0.0
        %787 = vmatpush1.msra.mxu0 0.0
        %788 = vmatprep.subr.mxu0 0.0
        %789 = vmatpush1.msra.mxu0 0.0
        %790 = vmatprep.subr.mxu0 0.0
        %791 = vmatpush1.msra.mxu0 0.0
        %792 = vmatprep.subr.mxu0 0.0
        %793 = vmatpush1.msra.mxu0 0.0
        %794 = vmatprep.subr.mxu0 0.0
        %795 = vmatpush1.msra.mxu0 %v762
        %796 = vmatprep.subr.mxu0 0.0
        %797 = vmatpush1.msra.mxu0 %v761
        %798 = vmatprep.subr.mxu0 0.0
        %799 = vmatpush2.msra.mxu0 0.0
        %800 = vmatprep.subr.mxu0 0.0
        %801 = vmatpush2.msra.mxu0 0.0
        %802 = vmatprep.subr.mxu0 0.0
        %803 = vmatpush2.msra.mxu0 0.0
        %804 = vmatprep.subr.mxu0 0.0
        %805 = vmatpush2.msra.mxu0 0.0
        %806 = vmatprep.subr.mxu0 0.0
        %807 = vmatpush2.msra.mxu0 0.0
        %808 = vmatprep.subr.mxu0 0.0
        %809 = vmatpush2.msra.mxu0 0.0
        %810 = vmatprep.subr.mxu0 0.0
        %811 = vmatpush2.msra.mxu0 0.0
        %812 = vmatprep.subr.mxu0 0.0
        %813 = vmatpush2.msra.mxu0 0.0
        %814 = vmatprep.subr.mxu0 0.0
        %815 = vmatpush2.msra.mxu0 0.0
        %816 = vmatprep.subr.mxu0 0.0
        %817 = vmatpush2.msra.mxu0 0.0
        %818 = vmatprep.subr.mxu0 0.0
        %819 = vmatpush2.msra.mxu0 0.0
        %820 = vmatprep.subr.mxu0 0.0
        %821 = vmatpush2.msra.mxu0 0.0
        %822 = vmatprep.subr.mxu0 0.0
        %823 = vmatpush2.msra.mxu0 0.0
        %824 = vmatprep.subr.mxu0 0.0
        %825 = vmatpush2.msra.mxu0 0.0
        %826 = vmatprep.subr.mxu0 0.0
        %827 = vmatpush2.msra.mxu0 0.0
        %828 = vmatprep.subr.mxu0 0.0
        %829 = vmatpush2.msra.mxu0 0.0
        %830 = vmatprep.mubr.f32.mxu0 0.0
        %831 = vmatmul.mubr.f32.gmra.mxu0 %v764
        %v832 = vpop.f32.mrf.mxu0
        %v833 = vadd.f32 0.0, %v832
        %v834 = vpop.f32.mrf.mxu0
        %835 = vmatprep.mubr.f32.mxu0 0.0
        %836 = vmatmul.mubr.f32.gmra.mxu0 %v764
        %v837 = vpop.f32.mrf.mxu0
        %v838 = vadd.f32 0.0, %v837
        %v839 = vpop.f32.mrf.mxu0
        %840 = vmatprep.mubr.f32.mxu0 0.0
        %841 = vmatmul.mubr.f32.gmra.mxu0 %v764
        %v842 = vpop.f32.mrf.mxu0
        %v843 = vadd.f32 0.0, %v842
        %v844 = vpop.f32.mrf.mxu0
        %845 = vmatprep.mubr.f32.mxu0 0.0
        %846 = vmatmul.mubr.f32.gmra.mxu0 %v764
        %v847 = vpop.f32.mrf.mxu0
        %v848 = vadd.f32 0.0, %v847
        %v849 = vpop.f32.mrf.mxu0
        %850 = vmatprep.mubr.f32.mxu0 0.0
        %851 = vmatmul.mubr.f32.gmra.mxu0 %v764
        %v852 = vpop.f32.mrf.mxu0
        %v853 = vadd.f32 0.0, %v852
        %v854 = vpop.f32.mrf.mxu0
        %855 = vmatprep.mubr.f32.mxu0 0.0
        %856 = vmatmul.mubr.f32.gmra.mxu0 %v764
        %v857 = vpop.f32.mrf.mxu0
        %v858 = vadd.f32 0.0, %v857
        %v859 = vpop.f32.mrf.mxu0
        %860 = vmatprep.mubr.f32.mxu0 0.0
        %861 = vmatmul.mubr.f32.gmra.mxu0 %v764
        %v862 = vpop.f32.mrf.mxu0
        %v863 = vadd.f32 0.0, %v862
        %v864 = vpop.f32.mrf.mxu0
        %865 = vmatprep.mubr.f32.mxu0 0.0
        %866 = vmatmul.mubr.f32.gmra.mxu0 %v764
        %v867 = vpop.f32.mrf.mxu0
        %v868 = vadd.f32 0.0, %v867
        %v869 = vpop.f32.mrf.mxu0
        %870 = vdwg.mxu0
        %v871 = vsel %vm763, %v625, 0
        %v873 = vsel %vm763, %v629, 0
        %v875 = vsel %vm763, %v633, 0
        %v877 = vsel %vm763, %v637, 0
        %v879 = vsel %vm763, %v641, 0
        %v881 = vsel %vm763, %v645, 0
        %v883 = vsel %vm763, %v649, 0
        %v885 = vsel %vm763, %v653, 0
        %887 = vmatprep.subr.mxu0 0.0
        %888 = vmatpush1.msra.mxu0 0.0
        %889 = vmatprep.subr.mxu0 0.0
        %890 = vmatpush1.msra.mxu0 0.0
        %891 = vmatprep.subr.mxu0 0.0
        %892 = vmatpush1.msra.mxu0 0.0
        %893 = vmatprep.subr.mxu0 0.0
        %894 = vmatpush1.msra.mxu0 0.0
        %895 = vmatprep.subr.mxu0 0.0
        %896 = vmatpush1.msra.mxu0 0.0
        %897 = vmatprep.subr.mxu0 0.0
        %898 = vmatpush1.msra.mxu0 0.0
        %899 = vmatprep.subr.mxu0 0.0
        %900 = vmatpush1.msra.mxu0 0.0
        %901 = vmatprep.subr.mxu0 0.0
        %902 = vmatpush1.msra.mxu0 0.0
        %903 = vmatprep.subr.mxu0 0.0
        %904 = vmatpush1.msra.mxu0 0.0
        %905 = vmatprep.subr.mxu0 0.0
        %906 = vmatpush1.msra.mxu0 0.0
        %907 = vmatprep.subr.mxu0 0.0
        %908 = vmatpush1.msra.mxu0 0.0
        %909 = vmatprep.subr.mxu0 0.0
        %910 = vmatpush1.msra.mxu0 0.0
        %911 = vmatprep.subr.mxu0 0.0
        %912 = vmatpush1.msra.mxu0 0.0
        %913 = vmatprep.subr.mxu0 0.0
        %914 = vmatpush1.msra.mxu0 0.0
        %915 = vmatprep.subr.mxu0 0.0
        %916 = vmatpush1.msra.mxu0 %v760
        %917 = vmatprep.subr.mxu0 0.0
        %918 = vmatpush1.msra.mxu0 %v759
        %919 = vmatprep.subr.mxu0 0.0
        %920 = vmatpush2.msra.mxu0 0.0
        %921 = vmatprep.subr.mxu0 0.0
        %922 = vmatpush2.msra.mxu0 0.0
        %923 = vmatprep.subr.mxu0 0.0
        %924 = vmatpush2.msra.mxu0 0.0
        %925 = vmatprep.subr.mxu0 0.0
        %926 = vmatpush2.msra.mxu0 0.0
        %927 = vmatprep.subr.mxu0 0.0
        %928 = vmatpush2.msra.mxu0 0.0
        %929 = vmatprep.subr.mxu0 0.0
        %930 = vmatpush2.msra.mxu0 0.0
        %931 = vmatprep.subr.mxu0 0.0
        %932 = vmatpush2.msra.mxu0 0.0
        %933 = vmatprep.subr.mxu0 0.0
        %934 = vmatpush2.msra.mxu0 0.0
        %935 = vmatprep.subr.mxu0 0.0
        %936 = vmatpush2.msra.mxu0 0.0
        %937 = vmatprep.subr.mxu0 0.0
        %938 = vmatpush2.msra.mxu0 0.0
        %939 = vmatprep.subr.mxu0 0.0
        %940 = vmatpush2.msra.mxu0 0.0
        %941 = vmatprep.subr.mxu0 0.0
        %942 = vmatpush2.msra.mxu0 0.0
        %943 = vmatprep.subr.mxu0 0.0
        %944 = vmatpush2.msra.mxu0 0.0
        %945 = vmatprep.subr.mxu0 0.0
        %946 = vmatpush2.msra.mxu0 0.0
        %947 = vmatprep.subr.mxu0 0.0
        %948 = vmatpush2.msra.mxu0 0.0
        %949 = vmatprep.subr.mxu0 0.0
        %950 = vmatpush2.msra.mxu0 0.0
        %951 = vmatprep.mubr.f32.mxu0 0.0
        %952 = vmatmul.mubr.f32.gmra.mxu0 %v871
        %v953 = vpop.f32.mrf.mxu0
        %v954 = vadd.f32 %v833, %v953
        %v955 = vpop.f32.mrf.mxu0
        %956 = vmatprep.mubr.f32.mxu0 0.0
        %957 = vmatmul.mubr.f32.gmra.mxu0 %v873
        %v958 = vpop.f32.mrf.mxu0
        %v959 = vadd.f32 %v838, %v958
        %v960 = vpop.f32.mrf.mxu0
        %961 = vmatprep.mubr.f32.mxu0 0.0
        %962 = vmatmul.mubr.f32.gmra.mxu0 %v875
        %v963 = vpop.f32.mrf.mxu0
        %v964 = vadd.f32 %v843, %v963
        %v965 = vpop.f32.mrf.mxu0
        %966 = vmatprep.mubr.f32.mxu0 0.0
        %967 = vmatmul.mubr.f32.gmra.mxu0 %v877
        %v968 = vpop.f32.mrf.mxu0
        %v969 = vadd.f32 %v848, %v968
        %v970 = vpop.f32.mrf.mxu0
        %971 = vmatprep.mubr.f32.mxu0 0.0
        %972 = vmatmul.mubr.f32.gmra.mxu0 %v879
        %v973 = vpop.f32.mrf.mxu0
        %v974 = vadd.f32 %v853, %v973
        %v975 = vpop.f32.mrf.mxu0
        %976 = vmatprep.mubr.f32.mxu0 0.0
        %977 = vmatmul.mubr.f32.gmra.mxu0 %v881
        %v978 = vpop.f32.mrf.mxu0
        %v979 = vadd.f32 %v858, %v978
        %v980 = vpop.f32.mrf.mxu0
        %981 = vmatprep.mubr.f32.mxu0 0.0
        %982 = vmatmul.mubr.f32.gmra.mxu0 %v883
        %v983 = vpop.f32.mrf.mxu0
        %v984 = vadd.f32 %v863, %v983
        %v985 = vpop.f32.mrf.mxu0
        %986 = vmatprep.mubr.f32.mxu0 0.0
        %987 = vmatmul.mubr.f32.gmra.mxu0 %v885
        %v988 = vpop.f32.mrf.mxu0
        %v989 = vadd.f32 %v868, %v988
        %v990 = vpop.f32.mrf.mxu0
        %991 = vdwg.mxu0
        %v992 = vld [vmem:[%s3] sm:$0x1]
        %v994 = vlaneseq
        %v995 = vshrl.u32 %v994, 7
        %v996 = vsub.s32 0, %v995
        %v997 = vrot.slane %v992, %v996
        %v999 = vmul.f32 %v709, %v997
        %v1000 = vmul.f32 %v716, %v997
        %v1001 = vmul.f32 %v723, %v997
        %v1002 = vmul.f32 %v730, %v997
        %v1003 = vmul.f32 %v737, %v997
        %v1004 = vmul.f32 %v744, %v997
        %v1005 = vmul.f32 %v751, %v997
        %v1006 = vmul.f32 %v758, %v997
        %v1007 = vadd.f32 %v954, %v999
        %v1008 = vadd.f32 %v959, %v1000
        %v1009 = vadd.f32 %v964, %v1001
        %v1010 = vadd.f32 %v969, %v1002
        %v1011 = vadd.f32 %v974, %v1003
        %v1012 = vadd.f32 %v979, %v1004
        %v1013 = vadd.f32 %v984, %v1005
        %v1014 = vadd.f32 %v989, %v1006
        %v1015 = vld [vmem:[%s4] sm:$0x1]
        %v1017 = vlaneseq
        %v1018 = vshrl.u32 %v1017, 7
        %v1019 = vsub.s32 0, %v1018
        %v1020 = vrot.slane %v1015, %v1019
        %v1022 = vadd.f32 %v1007, %v1020
        %v1023 = vadd.f32 %v1008, %v1020
        %v1024 = vadd.f32 %v1009, %v1020
        %v1025 = vadd.f32 %v1010, %v1020
        %v1026 = vadd.f32 %v1011, %v1020
        %v1027 = vadd.f32 %v1012, %v1020
        %v1028 = vadd.f32 %v1013, %v1020
        %v1029 = vadd.f32 %v1014, %v1020
        %vm1030 = vcmp.gt.f32.partialorder %v1022, 0.0
        %vm1031 = vcmp.gt.f32.partialorder %v1023, 0.0
        %vm1032 = vcmp.gt.f32.partialorder %v1024, 0.0
        %vm1033 = vcmp.gt.f32.partialorder %v1025, 0.0
        %vm1034 = vcmp.gt.f32.partialorder %v1026, 0.0
        %vm1035 = vcmp.gt.f32.partialorder %v1027, 0.0
        %vm1036 = vcmp.gt.f32.partialorder %v1028, 0.0
        %vm1037 = vcmp.gt.f32.partialorder %v1029, 0.0
        %v1038 = vmul.f32 %v1022, 0.2
        %v1039 = vmul.f32 %v1023, 0.2
        %v1040 = vmul.f32 %v1024, 0.2
        %v1041 = vmul.f32 %v1025, 0.2
        %v1042 = vmul.f32 %v1026, 0.2
        %v1043 = vmul.f32 %v1027, 0.2
        %v1044 = vmul.f32 %v1028, 0.2
        %v1045 = vmul.f32 %v1029, 0.2
        %v1046 = vsel %vm1030, %v1022, %v1038
        %v1047 = vsel %vm1031, %v1023, %v1039
        %v1048 = vsel %vm1032, %v1024, %v1040
        %v1049 = vsel %vm1033, %v1025, %v1041
        %v1050 = vsel %vm1034, %v1026, %v1042
        %v1051 = vsel %vm1035, %v1027, %v1043
        %v1052 = vsel %vm1036, %v1028, %v1044
        %v1053 = vsel %vm1037, %v1029, %v1045
        %v1054 = vld [vmem:[%s5] sm:$0xff]
        %v1055 = vld [vmem:[%s5 + $0x8] sm:$0xff]
        %v1056 = vld [vmem:[%s5 + $0x10] sm:$0xff]
        %v1057 = vld [vmem:[%s5 + $0x18] sm:$0xff]
        %v1058 = vld [vmem:[%s5 + $0x20] sm:$0xff]
        %v1059 = vld [vmem:[%s5 + $0x28] sm:$0xff]
        %v1060 = vld [vmem:[%s5 + $0x30] sm:$0xff]
        %v1061 = vld [vmem:[%s5 + $0x38] sm:$0xff]
        %v1062 = vld [vmem:[%s5 + $0x40] sm:$0xff]
        %v1063 = vld [vmem:[%s5 + $0x48] sm:$0xff]
        %v1064 = vld [vmem:[%s5 + $0x50] sm:$0xff]
        %v1065 = vld [vmem:[%s5 + $0x58] sm:$0xff]
        %v1066 = vld [vmem:[%s5 + $0x60] sm:$0xff]
        %v1067 = vld [vmem:[%s5 + $0x68] sm:$0xff]
        %v1068 = vld [vmem:[%s5 + $0x70] sm:$0xff]
        %v1069 = vld [vmem:[%s5 + $0x78] sm:$0xff]
        %v1070 = vld [vmem:[%s6] sm:$0x1]
        %v1072 = vlaneseq
        %v1073 = vshrl.u32 %v1072, 7
        %v1074 = vsub.s32 0, %v1073
        %v1075 = vrot.slane %v1070, %v1074
        %1077 = vmatprep.subr.mxu0 0.0
        %1078 = vmatpush1.msra.mxu0 %v1069
        %1079 = vmatprep.subr.mxu0 0.0
        %1080 = vmatpush1.msra.mxu0 %v1068
        %1081 = vmatprep.subr.mxu0 0.0
        %1082 = vmatpush1.msra.mxu0 %v1067
        %1083 = vmatprep.subr.mxu0 0.0
        %1084 = vmatpush1.msra.mxu0 %v1066
        %1085 = vmatprep.subr.mxu0 0.0
        %1086 = vmatpush1.msra.mxu0 %v1065
        %1087 = vmatprep.subr.mxu0 0.0
        %1088 = vmatpush1.msra.mxu0 %v1064
        %1089 = vmatprep.subr.mxu0 0.0
        %1090 = vmatpush1.msra.mxu0 %v1063
        %1091 = vmatprep.subr.mxu0 0.0
        %1092 = vmatpush1.msra.mxu0 %v1062
        %1093 = vmatprep.subr.mxu0 0.0
        %1094 = vmatpush1.msra.mxu0 %v1061
        %1095 = vmatprep.subr.mxu0 0.0
        %1096 = vmatpush1.msra.mxu0 %v1060
        %1097 = vmatprep.subr.mxu0 0.0
        %1098 = vmatpush1.msra.mxu0 %v1059
        %1099 = vmatprep.subr.mxu0 0.0
        %1100 = vmatpush1.msra.mxu0 %v1058
        %1101 = vmatprep.subr.mxu0 0.0
        %1102 = vmatpush1.msra.mxu0 %v1057
        %1103 = vmatprep.subr.mxu0 0.0
        %1104 = vmatpush1.msra.mxu0 %v1056
        %1105 = vmatprep.subr.mxu0 0.0
        %1106 = vmatpush1.msra.mxu0 %v1055
        %1107 = vmatprep.subr.mxu0 0.0
        %1108 = vmatpush1.msra.mxu0 %v1054
        %1109 = vmatprep.subr.mxu0 0.0
        %1110 = vmatpush2.msra.mxu0 0.0
        %1111 = vmatprep.subr.mxu0 0.0
        %1112 = vmatpush2.msra.mxu0 0.0
        %1113 = vmatprep.subr.mxu0 0.0
        %1114 = vmatpush2.msra.mxu0 0.0
        %1115 = vmatprep.subr.mxu0 0.0
        %1116 = vmatpush2.msra.mxu0 0.0
        %1117 = vmatprep.subr.mxu0 0.0
        %1118 = vmatpush2.msra.mxu0 0.0
        %1119 = vmatprep.subr.mxu0 0.0
        %1120 = vmatpush2.msra.mxu0 0.0
        %1121 = vmatprep.subr.mxu0 0.0
        %1122 = vmatpush2.msra.mxu0 0.0
        %1123 = vmatprep.subr.mxu0 0.0
        %1124 = vmatpush2.msra.mxu0 0.0
        %1125 = vmatprep.subr.mxu0 0.0
        %1126 = vmatpush2.msra.mxu0 0.0
        %1127 = vmatprep.subr.mxu0 0.0
        %1128 = vmatpush2.msra.mxu0 0.0
        %1129 = vmatprep.subr.mxu0 0.0
        %1130 = vmatpush2.msra.mxu0 0.0
        %1131 = vmatprep.subr.mxu0 0.0
        %1132 = vmatpush2.msra.mxu0 0.0
        %1133 = vmatprep.subr.mxu0 0.0
        %1134 = vmatpush2.msra.mxu0 0.0
        %1135 = vmatprep.subr.mxu0 0.0
        %1136 = vmatpush2.msra.mxu0 0.0
        %1137 = vmatprep.subr.mxu0 0.0
        %1138 = vmatpush2.msra.mxu0 0.0
        %1139 = vmatprep.subr.mxu0 0.0
        %1140 = vmatpush2.msra.mxu0 0.0
        %1141 = vmatprep.mubr.f32.mxu0 0.0
        %1142 = vmatmul.mubr.f32.gmra.mxu0 %v1046
        %v1143 = vpop.f32.mrf.mxu0
        %v1144 = vadd.f32 %v1075, %v1143
        %v1145 = vpop.f32.mrf.mxu0
        %1146 = vmatprep.mubr.f32.mxu0 0.0
        %1147 = vmatmul.mubr.f32.gmra.mxu0 %v1047
        %v1148 = vpop.f32.mrf.mxu0
        %v1149 = vadd.f32 %v1075, %v1148
        %v1150 = vpop.f32.mrf.mxu0
        %1151 = vmatprep.mubr.f32.mxu0 0.0
        %1152 = vmatmul.mubr.f32.gmra.mxu0 %v1048
        %v1153 = vpop.f32.mrf.mxu0
        %v1154 = vadd.f32 %v1075, %v1153
        %v1155 = vpop.f32.mrf.mxu0
        %1156 = vmatprep.mubr.f32.mxu0 0.0
        %1157 = vmatmul.mubr.f32.gmra.mxu0 %v1049
        %v1158 = vpop.f32.mrf.mxu0
        %v1159 = vadd.f32 %v1075, %v1158
        %v1160 = vpop.f32.mrf.mxu0
        %1161 = vmatprep.mubr.f32.mxu0 0.0
        %1162 = vmatmul.mubr.f32.gmra.mxu0 %v1050
        %v1163 = vpop.f32.mrf.mxu0
        %v1164 = vadd.f32 %v1075, %v1163
        %v1165 = vpop.f32.mrf.mxu0
        %1166 = vmatprep.mubr.f32.mxu0 0.0
        %1167 = vmatmul.mubr.f32.gmra.mxu0 %v1051
        %v1168 = vpop.f32.mrf.mxu0
        %v1169 = vadd.f32 %v1075, %v1168
        %v1170 = vpop.f32.mrf.mxu0
        %1171 = vmatprep.mubr.f32.mxu0 0.0
        %1172 = vmatmul.mubr.f32.gmra.mxu0 %v1052
        %v1173 = vpop.f32.mrf.mxu0
        %v1174 = vadd.f32 %v1075, %v1173
        %v1175 = vpop.f32.mrf.mxu0
        %1176 = vmatprep.mubr.f32.mxu0 0.0
        %1177 = vmatmul.mubr.f32.gmra.mxu0 %v1053
        %v1178 = vpop.f32.mrf.mxu0
        %v1179 = vadd.f32 %v1075, %v1178
        %v1180 = vpop.f32.mrf.mxu0
        %1181 = vdwg.mxu0
        %vm1182 = vcmp.gt.f32.partialorder %v1144, 0.0
        %vm1183 = vcmp.gt.f32.partialorder %v1149, 0.0
        %vm1184 = vcmp.gt.f32.partialorder %v1154, 0.0
        %vm1185 = vcmp.gt.f32.partialorder %v1159, 0.0
        %vm1186 = vcmp.gt.f32.partialorder %v1164, 0.0
        %vm1187 = vcmp.gt.f32.partialorder %v1169, 0.0
        %vm1188 = vcmp.gt.f32.partialorder %v1174, 0.0
        %vm1189 = vcmp.gt.f32.partialorder %v1179, 0.0
        %v1190 = vmul.f32 %v1144, 0.2
        %v1191 = vmul.f32 %v1149, 0.2
        %v1192 = vmul.f32 %v1154, 0.2
        %v1193 = vmul.f32 %v1159, 0.2
        %v1194 = vmul.f32 %v1164, 0.2
        %v1195 = vmul.f32 %v1169, 0.2
        %v1196 = vmul.f32 %v1174, 0.2
        %v1197 = vmul.f32 %v1179, 0.2
        %v1198 = vsel %vm1182, %v1144, %v1190
        %v1199 = vsel %vm1183, %v1149, %v1191
        %v1200 = vsel %vm1184, %v1154, %v1192
        %v1201 = vsel %vm1185, %v1159, %v1193
        %v1202 = vsel %vm1186, %v1164, %v1194
        %v1203 = vsel %vm1187, %v1169, %v1195
        %v1204 = vsel %vm1188, %v1174, %v1196
        %v1205 = vsel %vm1189, %v1179, %v1197
        %vm1206 = vcmask 261120
        %v1207 = vsel %vm1206, %v1198, 0.0
        %v1208 = vrot.slane %v1207, 4
        %v1209 = vadd.f32 %v1207, %v1208
        %v1210 = vrot.slane %v1209, 2
        %v1211 = vadd.f32 %v1209, %v1210
        %v1212 = vrot.slane %v1211, 1
        %v1213 = vadd.f32 %v1211, %v1212
        %v1214 = vsel %vm1206, %v1199, 0.0
        %v1215 = vrot.slane %v1214, 4
        %v1216 = vadd.f32 %v1214, %v1215
        %v1217 = vrot.slane %v1216, 2
        %v1218 = vadd.f32 %v1216, %v1217
        %v1219 = vrot.slane %v1218, 1
        %v1220 = vadd.f32 %v1218, %v1219
        %v1221 = vsel %vm1206, %v1200, 0.0
        %v1222 = vrot.slane %v1221, 4
        %v1223 = vadd.f32 %v1221, %v1222
        %v1224 = vrot.slane %v1223, 2
        %v1225 = vadd.f32 %v1223, %v1224
        %v1226 = vrot.slane %v1225, 1
        %v1227 = vadd.f32 %v1225, %v1226
        %v1228 = vsel %vm1206, %v1201, 0.0
        %v1229 = vrot.slane %v1228, 4
        %v1230 = vadd.f32 %v1228, %v1229
        %v1231 = vrot.slane %v1230, 2
        %v1232 = vadd.f32 %v1230, %v1231
        %v1233 = vrot.slane %v1232, 1
        %v1234 = vadd.f32 %v1232, %v1233
        %v1235 = vsel %vm1206, %v1202, 0.0
        %v1236 = vrot.slane %v1235, 4
        %v1237 = vadd.f32 %v1235, %v1236
        %v1238 = vrot.slane %v1237, 2
        %v1239 = vadd.f32 %v1237, %v1238
        %v1240 = vrot.slane %v1239, 1
        %v1241 = vadd.f32 %v1239, %v1240
        %v1242 = vsel %vm1206, %v1203, 0.0
        %v1243 = vrot.slane %v1242, 4
        %v1244 = vadd.f32 %v1242, %v1243
        %v1245 = vrot.slane %v1244, 2
        %v1246 = vadd.f32 %v1244, %v1245
        %v1247 = vrot.slane %v1246, 1
        %v1248 = vadd.f32 %v1246, %v1247
        %v1249 = vsel %vm1206, %v1204, 0.0
        %v1250 = vrot.slane %v1249, 4
        %v1251 = vadd.f32 %v1249, %v1250
        %v1252 = vrot.slane %v1251, 2
        %v1253 = vadd.f32 %v1251, %v1252
        %v1254 = vrot.slane %v1253, 1
        %v1255 = vadd.f32 %v1253, %v1254
        %v1256 = vsel %vm1206, %v1205, 0.0
        %v1257 = vrot.slane %v1256, 4
        %v1258 = vadd.f32 %v1256, %v1257
        %v1259 = vrot.slane %v1258, 2
        %v1260 = vadd.f32 %v1258, %v1259
        %v1261 = vrot.slane %v1260, 1
        %v1262 = vadd.f32 %v1260, %v1261
        %v1263 = vld [vmem:[%s7] sm:$0xff]
        %v1264 = vld [vmem:[%s7 + $0x8] sm:$0xff]
        %v1265 = vld [vmem:[%s7 + $0x10] sm:$0xff]
        %v1266 = vld [vmem:[%s7 + $0x18] sm:$0xff]
        %v1267 = vld [vmem:[%s8] sm:$0xff]
        %v1268 = vld [vmem:[%s8 + $0x8] sm:$0xff]
        %1269 = vmatprep.subr.mxu0 0.0
        %1270 = vmatpush1.msra.mxu0 0.0
        %1271 = vmatprep.subr.mxu0 0.0
        %1272 = vmatpush1.msra.mxu0 0.0
        %1273 = vmatprep.subr.mxu0 0.0
        %1274 = vmatpush1.msra.mxu0 0.0
        %1275 = vmatprep.subr.mxu0 0.0
        %1276 = vmatpush1.msra.mxu0 0.0
        %1277 = vmatprep.subr.mxu0 0.0
        %1278 = vmatpush1.msra.mxu0 0.0
        %1279 = vmatprep.subr.mxu0 0.0
        %1280 = vmatpush1.msra.mxu0 0.0
        %1281 = vmatprep.subr.mxu0 0.0
        %1282 = vmatpush1.msra.mxu0 0.0
        %1283 = vmatprep.subr.mxu0 0.0
        %1284 = vmatpush1.msra.mxu0 0.0
        %1285 = vmatprep.subr.mxu0 0.0
        %1286 = vmatpush1.msra.mxu0 0.0
        %1287 = vmatprep.subr.mxu0 0.0
        %1288 = vmatpush1.msra.mxu0 0.0
        %1289 = vmatprep.subr.mxu0 0.0
        %1290 = vmatpush1.msra.mxu0 0.0
        %1291 = vmatprep.subr.mxu0 0.0
        %1292 = vmatpush1.msra.mxu0 0.0
        %1293 = vmatprep.subr.mxu0 0.0
        %1294 = vmatpush1.msra.mxu0 0.0
        %1295 = vmatprep.subr.mxu0 0.0
        %1296 = vmatpush1.msra.mxu0 0.0
        %1297 = vmatprep.subr.mxu0 0.0
        %1298 = vmatpush1.msra.mxu0 %v1268
        %1299 = vmatprep.subr.mxu0 0.0
        %1300 = vmatpush1.msra.mxu0 %v1267
        %1301 = vmatprep.subr.mxu0 0.0
        %1302 = vmatpush2.msra.mxu0 0.0
        %1303 = vmatprep.subr.mxu0 0.0
        %1304 = vmatpush2.msra.mxu0 0.0
        %1305 = vmatprep.subr.mxu0 0.0
        %1306 = vmatpush2.msra.mxu0 0.0
        %1307 = vmatprep.subr.mxu0 0.0
        %1308 = vmatpush2.msra.mxu0 0.0
        %1309 = vmatprep.subr.mxu0 0.0
        %1310 = vmatpush2.msra.mxu0 0.0
        %1311 = vmatprep.subr.mxu0 0.0
        %1312 = vmatpush2.msra.mxu0 0.0
        %1313 = vmatprep.subr.mxu0 0.0
        %1314 = vmatpush2.msra.mxu0 0.0
        %1315 = vmatprep.subr.mxu0 0.0
        %1316 = vmatpush2.msra.mxu0 0.0
        %1317 = vmatprep.subr.mxu0 0.0
        %1318 = vmatpush2.msra.mxu0 0.0
        %1319 = vmatprep.subr.mxu0 0.0
        %1320 = vmatpush2.msra.mxu0 0.0
        %1321 = vmatprep.subr.mxu0 0.0
        %1322 = vmatpush2.msra.mxu0 0.0
        %1323 = vmatprep.subr.mxu0 0.0
        %1324 = vmatpush2.msra.mxu0 0.0
        %1325 = vmatprep.subr.mxu0 0.0
        %1326 = vmatpush2.msra.mxu0 0.0
        %1327 = vmatprep.subr.mxu0 0.0
        %1328 = vmatpush2.msra.mxu0 0.0
        %1329 = vmatprep.subr.mxu0 0.0
        %1330 = vmatpush2.msra.mxu0 0.0
        %1331 = vmatprep.subr.mxu0 0.0
        %1332 = vmatpush2.msra.mxu0 0.0
        %1333 = vmatprep.mubr.f32.mxu0 0.0
        %1334 = vmatmul.mubr.f32.gmra.mxu0 %v764
        %v1335 = vpop.f32.mrf.mxu0
        %v1336 = vadd.f32 0.0, %v1335
        %v1337 = vpop.f32.mrf.mxu0
        %1338 = vdwg.mxu0
        %vm1347 = vcmask 1041409
        %v1348 = vsel %vm1347, %v1220, %v1213
        %vm1349 = vcmask 1042434
        %v1350 = vsel %vm1349, %v1227, %v1348
        %vm1351 = vcmask 1043459
        %v1352 = vsel %vm1351, %v1234, %v1350
        %vm1353 = vcmask 1044484
        %v1354 = vsel %vm1353, %v1241, %v1352
        %vm1355 = vcmask 1045509
        %v1356 = vsel %vm1355, %v1248, %v1354
        %vm1357 = vcmask 1046534
        %v1358 = vsel %vm1357, %v1255, %v1356
        %vm1359 = vcmask 1047559
        %v1360 = vsel %vm1359, %v1262, %v1358
        %v1361 = vsel %vm1206, %v1360, 0
        %1363 = vmatprep.subr.mxu0 0.0
        %1364 = vmatpush1.msra.mxu0 0.0
        %1365 = vmatprep.subr.mxu0 0.0
        %1366 = vmatpush1.msra.mxu0 0.0
        %1367 = vmatprep.subr.mxu0 0.0
        %1368 = vmatpush1.msra.mxu0 0.0
        %1369 = vmatprep.subr.mxu0 0.0
        %1370 = vmatpush1.msra.mxu0 0.0
        %1371 = vmatprep.subr.mxu0 0.0
        %1372 = vmatpush1.msra.mxu0 0.0
        %1373 = vmatprep.subr.mxu0 0.0
        %1374 = vmatpush1.msra.mxu0 0.0
        %1375 = vmatprep.subr.mxu0 0.0
        %1376 = vmatpush1.msra.mxu0 0.0
        %1377 = vmatprep.subr.mxu0 0.0
        %1378 = vmatpush1.msra.mxu0 0.0
        %1379 = vmatprep.subr.mxu0 0.0
        %1380 = vmatpush1.msra.mxu0 0.0
        %1381 = vmatprep.subr.mxu0 0.0
        %1382 = vmatpush1.msra.mxu0 0.0
        %1383 = vmatprep.subr.mxu0 0.0
        %1384 = vmatpush1.msra.mxu0 0.0
        %1385 = vmatprep.subr.mxu0 0.0
        %1386 = vmatpush1.msra.mxu0 0.0
        %1387 = vmatprep.subr.mxu0 0.0
        %1388 = vmatpush1.msra.mxu0 %v1266
        %1389 = vmatprep.subr.mxu0 0.0
        %1390 = vmatpush1.msra.mxu0 %v1265
        %1391 = vmatprep.subr.mxu0 0.0
        %1392 = vmatpush1.msra.mxu0 %v1264
        %1393 = vmatprep.subr.mxu0 0.0
        %1394 = vmatpush1.msra.mxu0 %v1263
        %1395 = vmatprep.subr.mxu0 0.0
        %1396 = vmatpush2.msra.mxu0 0.0
        %1397 = vmatprep.subr.mxu0 0.0
        %1398 = vmatpush2.msra.mxu0 0.0
        %1399 = vmatprep.subr.mxu0 0.0
        %1400 = vmatpush2.msra.mxu0 0.0
        %1401 = vmatprep.subr.mxu0 0.0
        %1402 = vmatpush2.msra.mxu0 0.0
        %1403 = vmatprep.subr.mxu0 0.0
        %1404 = vmatpush2.msra.mxu0 0.0
        %1405 = vmatprep.subr.mxu0 0.0
        %1406 = vmatpush2.msra.mxu0 0.0
        %1407 = vmatprep.subr.mxu0 0.0
        %1408 = vmatpush2.msra.mxu0 0.0
        %1409 = vmatprep.subr.mxu0 0.0
        %1410 = vmatpush2.msra.mxu0 0.0
        %1411 = vmatprep.subr.mxu0 0.0
        %1412 = vmatpush2.msra.mxu0 0.0
        %1413 = vmatprep.subr.mxu0 0.0
        %1414 = vmatpush2.msra.mxu0 0.0
        %1415 = vmatprep.subr.mxu0 0.0
        %1416 = vmatpush2.msra.mxu0 0.0
        %1417 = vmatprep.subr.mxu0 0.0
        %1418 = vmatpush2.msra.mxu0 0.0
        %1419 = vmatprep.subr.mxu0 0.0
        %1420 = vmatpush2.msra.mxu0 0.0
        %1421 = vmatprep.subr.mxu0 0.0
        %1422 = vmatpush2.msra.mxu0 0.0
        %1423 = vmatprep.subr.mxu0 0.0
        %1424 = vmatpush2.msra.mxu0 0.0
        %1425 = vmatprep.subr.mxu0 0.0
        %1426 = vmatpush2.msra.mxu0 0.0
        %1427 = vmatprep.mubr.f32.mxu0 0.0
        %1428 = vmatmul.mubr.f32.gmra.mxu0 %v1361
        %v1429 = vpop.f32.mrf.mxu0
        %v1430 = vadd.f32 %v1336, %v1429
        %v1431 = vpop.f32.mrf.mxu0
        %1432 = vdwg.mxu0
        %v1433 = vld [vmem:[%s9] sm:$0x1]
        %v1435 = vlaneseq
        %v1436 = vshrl.u32 %v1435, 7
        %v1437 = vsub.s32 0, %v1436
        %v1438 = vrot.slane %v1433, %v1437
        %v1440 = vadd.f32 %v1430, %v1438
        %v1441 = vld [vmem:[%s10] sm:$0xff]
        %v1442 = vld [vmem:[%s10 + $0x8] sm:$0xff]
        %v1443 = vld [vmem:[%s10 + $0x10] sm:$0xff]
        %v1444 = vld [vmem:[%s10 + $0x18] sm:$0xff]
        %v1445 = vld [vmem:[%s11] sm:$0x1]
        %v1447 = vlaneseq
        %v1448 = vshrl.u32 %v1447, 7
        %v1449 = vsub.s32 0, %v1448
        %v1450 = vrot.slane %v1445, %v1449
        %v1453 = vsel %vm1206, 0.0, 0
        %1455 = vmatprep.subr.mxu0 0.0
        %1456 = vmatpush1.msra.mxu0 0.0
        %1457 = vmatprep.subr.mxu0 0.0
        %1458 = vmatpush1.msra.mxu0 0.0
        %1459 = vmatprep.subr.mxu0 0.0
        %1460 = vmatpush1.msra.mxu0 0.0
        %1461 = vmatprep.subr.mxu0 0.0
        %1462 = vmatpush1.msra.mxu0 0.0
        %1463 = vmatprep.subr.mxu0 0.0
        %1464 = vmatpush1.msra.mxu0 0.0
        %1465 = vmatprep.subr.mxu0 0.0
        %1466 = vmatpush1.msra.mxu0 0.0
        %1467 = vmatprep.subr.mxu0 0.0
        %1468 = vmatpush1.msra.mxu0 0.0
        %1469 = vmatprep.subr.mxu0 0.0
        %1470 = vmatpush1.msra.mxu0 0.0
        %1471 = vmatprep.subr.mxu0 0.0
        %1472 = vmatpush1.msra.mxu0 0.0
        %1473 = vmatprep.subr.mxu0 0.0
        %1474 = vmatpush1.msra.mxu0 0.0
        %1475 = vmatprep.subr.mxu0 0.0
        %1476 = vmatpush1.msra.mxu0 0.0
        %1477 = vmatprep.subr.mxu0 0.0
        %1478 = vmatpush1.msra.mxu0 0.0
        %1479 = vmatprep.subr.mxu0 0.0
        %1480 = vmatpush1.msra.mxu0 %v1444
        %1481 = vmatprep.subr.mxu0 0.0
        %1482 = vmatpush1.msra.mxu0 %v1443
        %1483 = vmatprep.subr.mxu0 0.0
        %1484 = vmatpush1.msra.mxu0 %v1442
        %1485 = vmatprep.subr.mxu0 0.0
        %1486 = vmatpush1.msra.mxu0 %v1441
        %1487 = vmatprep.subr.mxu0 0.0
        %1488 = vmatpush2.msra.mxu0 0.0
        %1489 = vmatprep.subr.mxu0 0.0
        %1490 = vmatpush2.msra.mxu0 0.0
        %1491 = vmatprep.subr.mxu0 0.0
        %1492 = vmatpush2.msra.mxu0 0.0
        %1493 = vmatprep.subr.mxu0 0.0
        %1494 = vmatpush2.msra.mxu0 0.0
        %1495 = vmatprep.subr.mxu0 0.0
        %1496 = vmatpush2.msra.mxu0 0.0
        %1497 = vmatprep.subr.mxu0 0.0
        %1498 = vmatpush2.msra.mxu0 0.0
        %1499 = vmatprep.subr.mxu0 0.0
        %1500 = vmatpush2.msra.mxu0 0.0
        %1501 = vmatprep.subr.mxu0 0.0
        %1502 = vmatpush2.msra.mxu0 0.0
        %1503 = vmatprep.subr.mxu0 0.0
        %1504 = vmatpush2.msra.mxu0 0.0
        %1505 = vmatprep.subr.mxu0 0.0
        %1506 = vmatpush2.msra.mxu0 0.0
        %1507 = vmatprep.subr.mxu0 0.0
        %1508 = vmatpush2.msra.mxu0 0.0
        %1509 = vmatprep.subr.mxu0 0.0
        %1510 = vmatpush2.msra.mxu0 0.0
        %1511 = vmatprep.subr.mxu0 0.0
        %1512 = vmatpush2.msra.mxu0 0.0
        %1513 = vmatprep.subr.mxu0 0.0
        %1514 = vmatpush2.msra.mxu0 0.0
        %1515 = vmatprep.subr.mxu0 0.0
        %1516 = vmatpush2.msra.mxu0 0.0
        %1517 = vmatprep.subr.mxu0 0.0
        %1518 = vmatpush2.msra.mxu0 0.0
        %1519 = vmatprep.mubr.f32.mxu0 0.0
        %1520 = vmatmul.mubr.f32.gmra.mxu0 %v1453
        %v1521 = vpop.f32.mrf.mxu0
        %v1522 = vadd.f32 %v1450, %v1521
        %v1523 = vpop.f32.mrf.mxu0
        %1524 = vdwg.mxu0
        %v1525 = vadd.f32 %v1440, %v1522
        %v1526 = vxor.u32 %v1525, 2147483648
        %v1527 = vmul.f32 %v1526, 1.442695
        %v1528 = vpow.pop %v1527
        %v1529 = vadd.f32 %v1528, 1.0
        %v1530 = vrcp.pop %v1529
        %v1531 = vmul.f32 1.0, %v1530
        %1533 = vrot.lane.b32.xlu0 %v1522, 64
        %v1534 = vpop.permute.xlu0 %1533
        %v1536 = vmul.f32 %v1531, %v1534
        %1538 = vrot.lane.b32.xlu0 %v1536, 64
        %v1539 = vpop.permute.xlu0 %1538
        %v1541 = vadd.f32 %v1440, %v1539
        %v1542 = vtanh.pop %v1541
        %v1543 = vsub.f32 0.0, %v1542
        %1545 = vrot.lane.b32.xlu0 %v1543, 96
        %v1546 = vpop.permute.xlu0 %1545
        %v1548 = vmul.f32 %v1531, %v1546
        %1550 = vrot.lane.b32.xlu0 %v1548, 32
        %v1551 = vpop.permute.xlu0 %1550
        %v1553 = vadd.f32 %v1542, %v1551
        %v1554 = vld [vmem:[%s12] sm:$0xff]
        %v1555 = vld [vmem:[%s12 + $0x8] sm:$0xff]
        %v1556 = vld [vmem:[%s12 + $0x10] sm:$0xff]
        %v1557 = vld [vmem:[%s12 + $0x18] sm:$0xff]
        %v1558 = vld [vmem:[%s13] sm:$0x1]
        %v1560 = vlaneseq
        %v1561 = vshrl.u32 %v1560, 7
        %v1562 = vsub.s32 0, %v1561
        %v1563 = vrot.slane %v1558, %v1562
        %1566 = vrot.lane.b32.xlu0 %v1553, 64
        %v1567 = vpop.permute.xlu0 %1566
        %v1568 = vsel %vm1206, %v1567, 0
        %1570 = vmatprep.subr.mxu0 0.0
        %1571 = vmatpush1.msra.mxu0 0.0
        %1572 = vmatprep.subr.mxu0 0.0
        %1573 = vmatpush1.msra.mxu0 0.0
        %1574 = vmatprep.subr.mxu0 0.0
        %1575 = vmatpush1.msra.mxu0 0.0
        %1576 = vmatprep.subr.mxu0 0.0
        %1577 = vmatpush1.msra.mxu0 0.0
        %1578 = vmatprep.subr.mxu0 0.0
        %1579 = vmatpush1.msra.mxu0 0.0
        %1580 = vmatprep.subr.mxu0 0.0
        %1581 = vmatpush1.msra.mxu0 0.0
        %1582 = vmatprep.subr.mxu0 0.0
        %1583 = vmatpush1.msra.mxu0 0.0
        %1584 = vmatprep.subr.mxu0 0.0
        %1585 = vmatpush1.msra.mxu0 0.0
        %1586 = vmatprep.subr.mxu0 0.0
        %1587 = vmatpush1.msra.mxu0 0.0
        %1588 = vmatprep.subr.mxu0 0.0
        %1589 = vmatpush1.msra.mxu0 0.0
        %1590 = vmatprep.subr.mxu0 0.0
        %1591 = vmatpush1.msra.mxu0 0.0
        %1592 = vmatprep.subr.mxu0 0.0
        %1593 = vmatpush1.msra.mxu0 0.0
        %1594 = vmatprep.subr.mxu0 0.0
        %1595 = vmatpush1.msra.mxu0 %v1557
        %1596 = vmatprep.subr.mxu0 0.0
        %1597 = vmatpush1.msra.mxu0 %v1556
        %1598 = vmatprep.subr.mxu0 0.0
        %1599 = vmatpush1.msra.mxu0 %v1555
        %1600 = vmatprep.subr.mxu0 0.0
        %1601 = vmatpush1.msra.mxu0 %v1554
        %1602 = vmatprep.subr.mxu0 0.0
        %1603 = vmatpush2.msra.mxu0 0.0
        %1604 = vmatprep.subr.mxu0 0.0
        %1605 = vmatpush2.msra.mxu0 0.0
        %1606 = vmatprep.subr.mxu0 0.0
        %1607 = vmatpush2.msra.mxu0 0.0
        %1608 = vmatprep.subr.mxu0 0.0
        %1609 = vmatpush2.msra.mxu0 0.0
        %1610 = vmatprep.subr.mxu0 0.0
        %1611 = vmatpush2.msra.mxu0 0.0
        %1612 = vmatprep.subr.mxu0 0.0
        %1613 = vmatpush2.msra.mxu0 0.0
        %1614 = vmatprep.subr.mxu0 0.0
        %1615 = vmatpush2.msra.mxu0 0.0
        %1616 = vmatprep.subr.mxu0 0.0
        %1617 = vmatpush2.msra.mxu0 0.0
        %1618 = vmatprep.subr.mxu0 0.0
        %1619 = vmatpush2.msra.mxu0 0.0
        %1620 = vmatprep.subr.mxu0 0.0
        %1621 = vmatpush2.msra.mxu0 0.0
        %1622 = vmatprep.subr.mxu0 0.0
        %1623 = vmatpush2.msra.mxu0 0.0
        %1624 = vmatprep.subr.mxu0 0.0
        %1625 = vmatpush2.msra.mxu0 0.0
        %1626 = vmatprep.subr.mxu0 0.0
        %1627 = vmatpush2.msra.mxu0 0.0
        %1628 = vmatprep.subr.mxu0 0.0
        %1629 = vmatpush2.msra.mxu0 0.0
        %1630 = vmatprep.subr.mxu0 0.0
        %1631 = vmatpush2.msra.mxu0 0.0
        %1632 = vmatprep.subr.mxu0 0.0
        %1633 = vmatpush2.msra.mxu0 0.0
        %1634 = vmatprep.mubr.f32.mxu0 0.0
        %1635 = vmatmul.mubr.f32.gmra.mxu0 %v1568
        %v1636 = vpop.f32.mrf.mxu0
        %v1637 = vadd.f32 %v1563, %v1636
        %v1638 = vpop.f32.mrf.mxu0
        %1639 = vdwg.mxu0
        %v1640 = vld [vmem:[%s14] sm:$0xff]
        %v1641 = vld [vmem:[%s14 + $0x8] sm:$0xff]
        %v1642 = vld [vmem:[%s14 + $0x10] sm:$0xff]
        %v1643 = vld [vmem:[%s14 + $0x18] sm:$0xff]
        %v1644 = vld [vmem:[%s15] sm:$0x1]
        %v1646 = vlaneseq
        %v1647 = vshrl.u32 %v1646, 7
        %v1648 = vsub.s32 0, %v1647
        %v1649 = vrot.slane %v1644, %v1648
        %1651 = vmatprep.subr.mxu0 0.0
        %1652 = vmatpush1.msra.mxu0 0.0
        %1653 = vmatprep.subr.mxu0 0.0
        %1654 = vmatpush1.msra.mxu0 0.0
        %1655 = vmatprep.subr.mxu0 0.0
        %1656 = vmatpush1.msra.mxu0 0.0
        %1657 = vmatprep.subr.mxu0 0.0
        %1658 = vmatpush1.msra.mxu0 0.0
        %1659 = vmatprep.subr.mxu0 0.0
        %1660 = vmatpush1.msra.mxu0 0.0
        %1661 = vmatprep.subr.mxu0 0.0
        %1662 = vmatpush1.msra.mxu0 0.0
        %1663 = vmatprep.subr.mxu0 0.0
        %1664 = vmatpush1.msra.mxu0 0.0
        %1665 = vmatprep.subr.mxu0 0.0
        %1666 = vmatpush1.msra.mxu0 0.0
        %1667 = vmatprep.subr.mxu0 0.0
        %1668 = vmatpush1.msra.mxu0 0.0
        %1669 = vmatprep.subr.mxu0 0.0
        %1670 = vmatpush1.msra.mxu0 0.0
        %1671 = vmatprep.subr.mxu0 0.0
        %1672 = vmatpush1.msra.mxu0 0.0
        %1673 = vmatprep.subr.mxu0 0.0
        %1674 = vmatpush1.msra.mxu0 0.0
        %1675 = vmatprep.subr.mxu0 0.0
        %1676 = vmatpush1.msra.mxu0 %v1643
        %1677 = vmatprep.subr.mxu0 0.0
        %1678 = vmatpush1.msra.mxu0 %v1642
        %1679 = vmatprep.subr.mxu0 0.0
        %1680 = vmatpush1.msra.mxu0 %v1641
        %1681 = vmatprep.subr.mxu0 0.0
        %1682 = vmatpush1.msra.mxu0 %v1640
        %1683 = vmatprep.subr.mxu0 0.0
        %1684 = vmatpush2.msra.mxu0 0.0
        %1685 = vmatprep.subr.mxu0 0.0
        %1686 = vmatpush2.msra.mxu0 0.0
        %1687 = vmatprep.subr.mxu0 0.0
        %1688 = vmatpush2.msra.mxu0 0.0
        %1689 = vmatprep.subr.mxu0 0.0
        %1690 = vmatpush2.msra.mxu0 0.0
        %1691 = vmatprep.subr.mxu0 0.0
        %1692 = vmatpush2.msra.mxu0 0.0
        %1693 = vmatprep.subr.mxu0 0.0
        %1694 = vmatpush2.msra.mxu0 0.0
        %1695 = vmatprep.subr.mxu0 0.0
        %1696 = vmatpush2.msra.mxu0 0.0
        %1697 = vmatprep.subr.mxu0 0.0
        %1698 = vmatpush2.msra.mxu0 0.0
        %1699 = vmatprep.subr.mxu0 0.0
        %1700 = vmatpush2.msra.mxu0 0.0
        %1701 = vmatprep.subr.mxu0 0.0
        %1702 = vmatpush2.msra.mxu0 0.0
        %1703 = vmatprep.subr.mxu0 0.0
        %1704 = vmatpush2.msra.mxu0 0.0
        %1705 = vmatprep.subr.mxu0 0.0
        %1706 = vmatpush2.msra.mxu0 0.0
        %1707 = vmatprep.subr.mxu0 0.0
        %1708 = vmatpush2.msra.mxu0 0.0
        %1709 = vmatprep.subr.mxu0 0.0
        %1710 = vmatpush2.msra.mxu0 0.0
        %1711 = vmatprep.subr.mxu0 0.0
        %1712 = vmatpush2.msra.mxu0 0.0
        %1713 = vmatprep.subr.mxu0 0.0
        %1714 = vmatpush2.msra.mxu0 0.0
        %1715 = vmatprep.mubr.f32.mxu0 0.0
        %1716 = vmatmul.mubr.f32.gmra.mxu0 %v1453
        %v1717 = vpop.f32.mrf.mxu0
        %v1718 = vadd.f32 %v1649, %v1717
        %v1719 = vpop.f32.mrf.mxu0
        %1720 = vdwg.mxu0
        %v1721 = vadd.f32 %v1637, %v1718
        %v1722 = vxor.u32 %v1721, 2147483648
        %v1723 = vmul.f32 %v1722, 1.442695
        %v1724 = vpow.pop %v1723
        %v1725 = vadd.f32 %v1724, 1.0
        %v1726 = vrcp.pop %v1725
        %v1727 = vmul.f32 1.0, %v1726
        %1729 = vrot.lane.b32.xlu0 %v1718, 64
        %v1730 = vpop.permute.xlu0 %1729
        %v1732 = vmul.f32 %v1727, %v1730
        %1734 = vrot.lane.b32.xlu0 %v1732, 64
        %v1735 = vpop.permute.xlu0 %1734
        %v1737 = vadd.f32 %v1637, %v1735
        %v1738 = vtanh.pop %v1737
        %v1739 = vsub.f32 0.0, %v1738
        %1741 = vrot.lane.b32.xlu0 %v1739, 96
        %v1742 = vpop.permute.xlu0 %1741
        %v1744 = vmul.f32 %v1727, %v1742
        %1746 = vrot.lane.b32.xlu0 %v1744, 32
        %v1747 = vpop.permute.xlu0 %1746
        %v1749 = vadd.f32 %v1738, %v1747
        %v1750 = vld [vmem:[%s16] sm:$0xff]
        %v1751 = vld [vmem:[%s16 + $0x8] sm:$0xff]
        %v1752 = vld [vmem:[%s16 + $0x10] sm:$0xff]
        %v1753 = vld [vmem:[%s16 + $0x18] sm:$0xff]
        %v1754 = vld [vmem:[%s17] sm:$0x1]
        %v1756 = vlaneseq
        %v1757 = vshrl.u32 %v1756, 7
        %v1758 = vsub.s32 0, %v1757
        %v1759 = vrot.slane %v1754, %v1758
        %1762 = vrot.lane.b32.xlu0 %v1749, 64
        %v1763 = vpop.permute.xlu0 %1762
        %v1764 = vsel %vm1206, %v1763, 0
        %1766 = vmatprep.subr.mxu0 0.0
        %1767 = vmatpush1.msra.mxu0 0.0
        %1768 = vmatprep.subr.mxu0 0.0
        %1769 = vmatpush1.msra.mxu0 0.0
        %1770 = vmatprep.subr.mxu0 0.0
        %1771 = vmatpush1.msra.mxu0 0.0
        %1772 = vmatprep.subr.mxu0 0.0
        %1773 = vmatpush1.msra.mxu0 0.0
        %1774 = vmatprep.subr.mxu0 0.0
        %1775 = vmatpush1.msra.mxu0 0.0
        %1776 = vmatprep.subr.mxu0 0.0
        %1777 = vmatpush1.msra.mxu0 0.0
        %1778 = vmatprep.subr.mxu0 0.0
        %1779 = vmatpush1.msra.mxu0 0.0
        %1780 = vmatprep.subr.mxu0 0.0
        %1781 = vmatpush1.msra.mxu0 0.0
        %1782 = vmatprep.subr.mxu0 0.0
        %1783 = vmatpush1.msra.mxu0 0.0
        %1784 = vmatprep.subr.mxu0 0.0
        %1785 = vmatpush1.msra.mxu0 0.0
        %1786 = vmatprep.subr.mxu0 0.0
        %1787 = vmatpush1.msra.mxu0 0.0
        %1788 = vmatprep.subr.mxu0 0.0
        %1789 = vmatpush1.msra.mxu0 0.0
        %1790 = vmatprep.subr.mxu0 0.0
        %1791 = vmatpush1.msra.mxu0 %v1753
        %1792 = vmatprep.subr.mxu0 0.0
        %1793 = vmatpush1.msra.mxu0 %v1752
        %1794 = vmatprep.subr.mxu0 0.0
        %1795 = vmatpush1.msra.mxu0 %v1751
        %1796 = vmatprep.subr.mxu0 0.0
        %1797 = vmatpush1.msra.mxu0 %v1750
        %1798 = vmatprep.subr.mxu0 0.0
        %1799 = vmatpush2.msra.mxu0 0.0
        %1800 = vmatprep.subr.mxu0 0.0
        %1801 = vmatpush2.msra.mxu0 0.0
        %1802 = vmatprep.subr.mxu0 0.0
        %1803 = vmatpush2.msra.mxu0 0.0
        %1804 = vmatprep.subr.mxu0 0.0
        %1805 = vmatpush2.msra.mxu0 0.0
        %1806 = vmatprep.subr.mxu0 0.0
        %1807 = vmatpush2.msra.mxu0 0.0
        %1808 = vmatprep.subr.mxu0 0.0
        %1809 = vmatpush2.msra.mxu0 0.0
        %1810 = vmatprep.subr.mxu0 0.0
        %1811 = vmatpush2.msra.mxu0 0.0
        %1812 = vmatprep.subr.mxu0 0.0
        %1813 = vmatpush2.msra.mxu0 0.0
        %1814 = vmatprep.subr.mxu0 0.0
        %1815 = vmatpush2.msra.mxu0 0.0
        %1816 = vmatprep.subr.mxu0 0.0
        %1817 = vmatpush2.msra.mxu0 0.0
        %1818 = vmatprep.subr.mxu0 0.0
        %1819 = vmatpush2.msra.mxu0 0.0
        %1820 = vmatprep.subr.mxu0 0.0
        %1821 = vmatpush2.msra.mxu0 0.0
        %1822 = vmatprep.subr.mxu0 0.0
        %1823 = vmatpush2.msra.mxu0 0.0
        %1824 = vmatprep.subr.mxu0 0.0
        %1825 = vmatpush2.msra.mxu0 0.0
        %1826 = vmatprep.subr.mxu0 0.0
        %1827 = vmatpush2.msra.mxu0 0.0
        %1828 = vmatprep.subr.mxu0 0.0
        %1829 = vmatpush2.msra.mxu0 0.0
        %1830 = vmatprep.mubr.f32.mxu0 0.0
        %1831 = vmatmul.mubr.f32.gmra.mxu0 %v1764
        %v1832 = vpop.f32.mrf.mxu0
        %v1833 = vadd.f32 %v1759, %v1832
        %v1834 = vpop.f32.mrf.mxu0
        %1835 = vdwg.mxu0
        %v1836 = vtanh.pop %v1833
        %v1838 = vcombine.high %v1836, %v1836
        %v1840 = vunpack.c.l.s4 1966171168
        %v1841 = vunpack.c.0.s8 %v1840
        %v1842 = vlaneseq
        %v1843 = vshrl.u32 %v1842, 7
        %v1844 = vsub.s32 %v1841, %v1843
        %v1845 = vrot.slane %v1836, %v1844
        %v1847 = vunpack.c.l.s4 1966171168
        %v1848 = vunpack.c.0.s8 %v1847
        %v1849 = vlaneseq
        %v1850 = vshrl.u32 %v1849, 7
        %v1851 = vsub.s32 %v1848, %v1850
        %v1852 = vrot.slane %v1838, %v1851
        %v1853 = vcombine.high %v1845, %v1845
        %v1854 = vcombine.high %v1852, %v1852
        %v1856 = vunpack.c.l.s4 1966171168
        %v1857 = vunpack.c.0.s8 %v1856
        %v1858 = vlaneseq
        %v1859 = vshrl.u32 %v1858, 7
        %v1860 = vsub.s32 %v1857, %v1859
        %v1861 = vrot.slane %v1845, %v1860
        %v1863 = vunpack.c.l.s4 1966171168
        %v1864 = vunpack.c.0.s8 %v1863
        %v1865 = vlaneseq
        %v1866 = vshrl.u32 %v1865, 7
        %v1867 = vsub.s32 %v1864, %v1866
        %v1868 = vrot.slane %v1852, %v1867
        %v1870 = vunpack.c.l.s4 1966171168
        %v1871 = vunpack.c.0.s8 %v1870
        %v1872 = vlaneseq
        %v1873 = vshrl.u32 %v1872, 7
        %v1874 = vsub.s32 %v1871, %v1873
        %v1875 = vrot.slane %v1853, %v1874
        %v1877 = vunpack.c.l.s4 1966171168
        %v1878 = vunpack.c.0.s8 %v1877
        %v1879 = vlaneseq
        %v1880 = vshrl.u32 %v1879, 7
        %v1881 = vsub.s32 %v1878, %v1880
        %v1882 = vrot.slane %v1854, %v1881
        %v1883 = vcombine.high %v1861, %v1861
        %v1884 = vcombine.high %v1868, %v1868
        %v1885 = vcombine.high %v1875, %v1875
        %v1886 = vcombine.high %v1882, %v1882
        %v1887 = vlaneseq
        %v1888 = vshrl.u32 %v1887, 7
        %v1889 = vsub.s32 0, %v1888
        %v1890 = vrot.slane %v1861, %v1889
        %v1891 = vlaneseq
        %v1892 = vshrl.u32 %v1891, 7
        %v1893 = vsub.s32 0, %v1892
        %v1894 = vrot.slane %v1875, %v1893
        %v1895 = vlaneseq
        %v1896 = vshrl.u32 %v1895, 7
        %v1897 = vsub.s32 0, %v1896
        %v1898 = vrot.slane %v1883, %v1897
        %v1899 = vlaneseq
        %v1900 = vshrl.u32 %v1899, 7
        %v1901 = vsub.s32 0, %v1900
        %v1902 = vrot.slane %v1885, %v1901
        %v1903 = vlaneseq
        %v1904 = vshrl.u32 %v1903, 7
        %v1905 = vsub.s32 0, %v1904
        %v1906 = vrot.slane %v1868, %v1905
        %v1907 = vlaneseq
        %v1908 = vshrl.u32 %v1907, 7
        %v1909 = vsub.s32 0, %v1908
        %v1910 = vrot.slane %v1882, %v1909
        %v1911 = vlaneseq
        %v1912 = vshrl.u32 %v1911, 7
        %v1913 = vsub.s32 0, %v1912
        %v1914 = vrot.slane %v1884, %v1913
        %v1915 = vlaneseq
        %v1916 = vshrl.u32 %v1915, 7
        %v1917 = vsub.s32 0, %v1916
        %v1918 = vrot.slane %v1886, %v1917
        %v1927 = vsub.f32 %v1836, %v1890
        %v1928 = vsub.f32 %v1836, %v1894
        %v1929 = vsub.f32 %v1836, %v1898
        %v1930 = vsub.f32 %v1836, %v1902
        %v1931 = vsub.f32 %v1836, %v1906
        %v1932 = vsub.f32 %v1836, %v1910
        %v1933 = vsub.f32 %v1836, %v1914
        %v1934 = vsub.f32 %v1836, %v1918
        %v1935 = vmul.f32 %v1927, %v1927
        %v1936 = vmul.f32 %v1928, %v1928
        %v1937 = vmul.f32 %v1929, %v1929
        %v1938 = vmul.f32 %v1930, %v1930
        %v1939 = vmul.f32 %v1931, %v1931
        %v1940 = vmul.f32 %v1932, %v1932
        %v1941 = vmul.f32 %v1933, %v1933
        %v1942 = vmul.f32 %v1934, %v1934
        %v1943 = vsel %vm678, %v1935, 0.0
        %1944 = vadd.xlane.f32.xlu0 %v1943
        %v1945 = vpop.xlane.xlu0 %1944
        %v1946 = vsel %vm678, %v1936, 0.0
        %1947 = vadd.xlane.f32.xlu0 %v1946
        %v1948 = vpop.xlane.xlu0 %1947
        %v1949 = vsel %vm678, %v1937, 0.0
        %1950 = vadd.xlane.f32.xlu0 %v1949
        %v1951 = vpop.xlane.xlu0 %1950
        %v1952 = vsel %vm678, %v1938, 0.0
        %1953 = vadd.xlane.f32.xlu0 %v1952
        %v1954 = vpop.xlane.xlu0 %1953
        %v1955 = vsel %vm678, %v1939, 0.0
        %1956 = vadd.xlane.f32.xlu0 %v1955
        %v1957 = vpop.xlane.xlu0 %1956
        %v1958 = vsel %vm678, %v1940, 0.0
        %1959 = vadd.xlane.f32.xlu0 %v1958
        %v1960 = vpop.xlane.xlu0 %1959
        %v1961 = vsel %vm678, %v1941, 0.0
        %1962 = vadd.xlane.f32.xlu0 %v1961
        %v1963 = vpop.xlane.xlu0 %1962
        %v1964 = vsel %vm678, %v1942, 0.0
        %1965 = vadd.xlane.f32.xlu0 %v1964
        %v1966 = vpop.xlane.xlu0 %1965
        %v1967 = vrsqrt.pop %v1945
        %v1968 = vmul.f32 %v1945, %v1967
        %vm1969 = vcmp.eq.f32.partialorder %v1945, inf
        %v1970 = vsel %vm1969, %v1945, %v1968
        %vm1971 = vcmp.eq.f32.partialorder %v1945, 0.0
        %v1972 = vand.u32 %v1945, 2147483648
        %v1973 = vsel %vm1971, %v1972, %v1970
        %v1974 = vrsqrt.pop %v1948
        %v1975 = vmul.f32 %v1948, %v1974
        %vm1976 = vcmp.eq.f32.partialorder %v1948, inf
        %v1977 = vsel %vm1976, %v1948, %v1975
        %vm1978 = vcmp.eq.f32.partialorder %v1948, 0.0
        %v1979 = vand.u32 %v1948, 2147483648
        %v1980 = vsel %vm1978, %v1979, %v1977
        %v1981 = vrsqrt.pop %v1951
        %v1982 = vmul.f32 %v1951, %v1981
        %vm1983 = vcmp.eq.f32.partialorder %v1951, inf
        %v1984 = vsel %vm1983, %v1951, %v1982
        %vm1985 = vcmp.eq.f32.partialorder %v1951, 0.0
        %v1986 = vand.u32 %v1951, 2147483648
        %v1987 = vsel %vm1985, %v1986, %v1984
        %v1988 = vrsqrt.pop %v1954
        %v1989 = vmul.f32 %v1954, %v1988
        %vm1990 = vcmp.eq.f32.partialorder %v1954, inf
        %v1991 = vsel %vm1990, %v1954, %v1989
        %vm1992 = vcmp.eq.f32.partialorder %v1954, 0.0
        %v1993 = vand.u32 %v1954, 2147483648
        %v1994 = vsel %vm1992, %v1993, %v1991
        %v1995 = vrsqrt.pop %v1957
        %v1996 = vmul.f32 %v1957, %v1995
        %vm1997 = vcmp.eq.f32.partialorder %v1957, inf
        %v1998 = vsel %vm1997, %v1957, %v1996
        %vm1999 = vcmp.eq.f32.partialorder %v1957, 0.0
        %v2000 = vand.u32 %v1957, 2147483648
        %v2001 = vsel %vm1999, %v2000, %v1998
        %v2002 = vrsqrt.pop %v1960
        %v2003 = vmul.f32 %v1960, %v2002
        %vm2004 = vcmp.eq.f32.partialorder %v1960, inf
        %v2005 = vsel %vm2004, %v1960, %v2003
        %vm2006 = vcmp.eq.f32.partialorder %v1960, 0.0
        %v2007 = vand.u32 %v1960, 2147483648
        %v2008 = vsel %vm2006, %v2007, %v2005
        %v2009 = vrsqrt.pop %v1963
        %v2010 = vmul.f32 %v1963, %v2009
        %vm2011 = vcmp.eq.f32.partialorder %v1963, inf
        %v2012 = vsel %vm2011, %v1963, %v2010
        %vm2013 = vcmp.eq.f32.partialorder %v1963, 0.0
        %v2014 = vand.u32 %v1963, 2147483648
        %v2015 = vsel %vm2013, %v2014, %v2012
        %v2016 = vrsqrt.pop %v1966
        %v2017 = vmul.f32 %v1966, %v2016
        %vm2018 = vcmp.eq.f32.partialorder %v1966, inf
        %v2019 = vsel %vm2018, %v1966, %v2017
        %vm2020 = vcmp.eq.f32.partialorder %v1966, 0.0
        %v2021 = vand.u32 %v1966, 2147483648
        %v2022 = vsel %vm2020, %v2021, %v2019
        %s2023 = scalar_lea.vmem %s1, 16
        %v2024 = vld [vmem:[%s2023] sm:$0xff]
        %v2025 = vld [vmem:[%s2023 + $0x8] sm:$0xff]
        %s2026 = scalar_lea.vmem %s2, 16
        %v2027 = vld [vmem:[%s2026] sm:$0xff]
        %v2028 = vld [vmem:[%s2026 + $0x8] sm:$0xff]
        %v2029 = vsel %vm763, %v1836, 0
        %2031 = vmatprep.subr.mxu0 0.0
        %2032 = vmatpush1.msra.mxu0 0.0
        %2033 = vmatprep.subr.mxu0 0.0
        %2034 = vmatpush1.msra.mxu0 0.0
        %2035 = vmatprep.subr.mxu0 0.0
        %2036 = vmatpush1.msra.mxu0 0.0
        %2037 = vmatprep.subr.mxu0 0.0
        %2038 = vmatpush1.msra.mxu0 0.0
        %2039 = vmatprep.subr.mxu0 0.0
        %2040 = vmatpush1.msra.mxu0 0.0
        %2041 = vmatprep.subr.mxu0 0.0
        %2042 = vmatpush1.msra.mxu0 0.0
        %2043 = vmatprep.subr.mxu0 0.0
        %2044 = vmatpush1.msra.mxu0 0.0
        %2045 = vmatprep.subr.mxu0 0.0
        %2046 = vmatpush1.msra.mxu0 0.0
        %2047 = vmatprep.subr.mxu0 0.0
        %2048 = vmatpush1.msra.mxu0 0.0
        %2049 = vmatprep.subr.mxu0 0.0
        %2050 = vmatpush1.msra.mxu0 0.0
        %2051 = vmatprep.subr.mxu0 0.0
        %2052 = vmatpush1.msra.mxu0 0.0
        %2053 = vmatprep.subr.mxu0 0.0
        %2054 = vmatpush1.msra.mxu0 0.0
        %2055 = vmatprep.subr.mxu0 0.0
        %2056 = vmatpush1.msra.mxu0 0.0
        %2057 = vmatprep.subr.mxu0 0.0
        %2058 = vmatpush1.msra.mxu0 0.0
        %2059 = vmatprep.subr.mxu0 0.0
        %2060 = vmatpush1.msra.mxu0 %v2028
        %2061 = vmatprep.subr.mxu0 0.0
        %2062 = vmatpush1.msra.mxu0 %v2027
        %2063 = vmatprep.subr.mxu0 0.0
        %2064 = vmatpush2.msra.mxu0 0.0
        %2065 = vmatprep.subr.mxu0 0.0
        %2066 = vmatpush2.msra.mxu0 0.0
        %2067 = vmatprep.subr.mxu0 0.0
        %2068 = vmatpush2.msra.mxu0 0.0
        %2069 = vmatprep.subr.mxu0 0.0
        %2070 = vmatpush2.msra.mxu0 0.0
        %2071 = vmatprep.subr.mxu0 0.0
        %2072 = vmatpush2.msra.mxu0 0.0
        %2073 = vmatprep.subr.mxu0 0.0
        %2074 = vmatpush2.msra.mxu0 0.0
        %2075 = vmatprep.subr.mxu0 0.0
        %2076 = vmatpush2.msra.mxu0 0.0
        %2077 = vmatprep.subr.mxu0 0.0
        %2078 = vmatpush2.msra.mxu0 0.0
        %2079 = vmatprep.subr.mxu0 0.0
        %2080 = vmatpush2.msra.mxu0 0.0
        %2081 = vmatprep.subr.mxu0 0.0
        %2082 = vmatpush2.msra.mxu0 0.0
        %2083 = vmatprep.subr.mxu0 0.0
        %2084 = vmatpush2.msra.mxu0 0.0
        %2085 = vmatprep.subr.mxu0 0.0
        %2086 = vmatpush2.msra.mxu0 0.0
        %2087 = vmatprep.subr.mxu0 0.0
        %2088 = vmatpush2.msra.mxu0 0.0
        %2089 = vmatprep.subr.mxu0 0.0
        %2090 = vmatpush2.msra.mxu0 0.0
        %2091 = vmatprep.subr.mxu0 0.0
        %2092 = vmatpush2.msra.mxu0 0.0
        %2093 = vmatprep.subr.mxu0 0.0
        %2094 = vmatpush2.msra.mxu0 0.0
        %2095 = vmatprep.mubr.f32.mxu0 0.0
        %2096 = vmatmul.mubr.f32.gmra.mxu0 %v2029
        %v2097 = vpop.f32.mrf.mxu0
        %v2098 = vadd.f32 0.0, %v2097
        %v2099 = vpop.f32.mrf.mxu0
        %2100 = vmatprep.mubr.f32.mxu0 0.0
        %2101 = vmatmul.mubr.f32.gmra.mxu0 %v2029
        %v2102 = vpop.f32.mrf.mxu0
        %v2103 = vadd.f32 0.0, %v2102
        %v2104 = vpop.f32.mrf.mxu0
        %2105 = vmatprep.mubr.f32.mxu0 0.0
        %2106 = vmatmul.mubr.f32.gmra.mxu0 %v2029
        %v2107 = vpop.f32.mrf.mxu0
        %v2108 = vadd.f32 0.0, %v2107
        %v2109 = vpop.f32.mrf.mxu0
        %2110 = vmatprep.mubr.f32.mxu0 0.0
        %2111 = vmatmul.mubr.f32.gmra.mxu0 %v2029
        %v2112 = vpop.f32.mrf.mxu0
        %v2113 = vadd.f32 0.0, %v2112
        %v2114 = vpop.f32.mrf.mxu0
        %2115 = vmatprep.mubr.f32.mxu0 0.0
        %2116 = vmatmul.mubr.f32.gmra.mxu0 %v2029
        %v2117 = vpop.f32.mrf.mxu0
        %v2118 = vadd.f32 0.0, %v2117
        %v2119 = vpop.f32.mrf.mxu0
        %2120 = vmatprep.mubr.f32.mxu0 0.0
        %2121 = vmatmul.mubr.f32.gmra.mxu0 %v2029
        %v2122 = vpop.f32.mrf.mxu0
        %v2123 = vadd.f32 0.0, %v2122
        %v2124 = vpop.f32.mrf.mxu0
        %2125 = vmatprep.mubr.f32.mxu0 0.0
        %2126 = vmatmul.mubr.f32.gmra.mxu0 %v2029
        %v2127 = vpop.f32.mrf.mxu0
        %v2128 = vadd.f32 0.0, %v2127
        %v2129 = vpop.f32.mrf.mxu0
        %2130 = vmatprep.mubr.f32.mxu0 0.0
        %2131 = vmatmul.mubr.f32.gmra.mxu0 %v2029
        %v2132 = vpop.f32.mrf.mxu0
        %v2133 = vadd.f32 0.0, %v2132
        %v2134 = vpop.f32.mrf.mxu0
        %2135 = vdwg.mxu0
        %v2136 = vsel %vm763, %v1890, 0
        %v2138 = vsel %vm763, %v1894, 0
        %v2140 = vsel %vm763, %v1898, 0
        %v2142 = vsel %vm763, %v1902, 0
        %v2144 = vsel %vm763, %v1906, 0
        %v2146 = vsel %vm763, %v1910, 0
        %v2148 = vsel %vm763, %v1914, 0
        %v2150 = vsel %vm763, %v1918, 0
        %2152 = vmatprep.subr.mxu0 0.0
        %2153 = vmatpush1.msra.mxu0 0.0
        %2154 = vmatprep.subr.mxu0 0.0
        %2155 = vmatpush1.msra.mxu0 0.0
        %2156 = vmatprep.subr.mxu0 0.0
        %2157 = vmatpush1.msra.mxu0 0.0
        %2158 = vmatprep.subr.mxu0 0.0
        %2159 = vmatpush1.msra.mxu0 0.0
        %2160 = vmatprep.subr.mxu0 0.0
        %2161 = vmatpush1.msra.mxu0 0.0
        %2162 = vmatprep.subr.mxu0 0.0
        %2163 = vmatpush1.msra.mxu0 0.0
        %2164 = vmatprep.subr.mxu0 0.0
        %2165 = vmatpush1.msra.mxu0 0.0
        %2166 = vmatprep.subr.mxu0 0.0
        %2167 = vmatpush1.msra.mxu0 0.0
        %2168 = vmatprep.subr.mxu0 0.0
        %2169 = vmatpush1.msra.mxu0 0.0
        %2170 = vmatprep.subr.mxu0 0.0
        %2171 = vmatpush1.msra.mxu0 0.0
        %2172 = vmatprep.subr.mxu0 0.0
        %2173 = vmatpush1.msra.mxu0 0.0
        %2174 = vmatprep.subr.mxu0 0.0
        %2175 = vmatpush1.msra.mxu0 0.0
        %2176 = vmatprep.subr.mxu0 0.0
        %2177 = vmatpush1.msra.mxu0 0.0
        %2178 = vmatprep.subr.mxu0 0.0
        %2179 = vmatpush1.msra.mxu0 0.0
        %2180 = vmatprep.subr.mxu0 0.0
        %2181 = vmatpush1.msra.mxu0 %v2025
        %2182 = vmatprep.subr.mxu0 0.0
        %2183 = vmatpush1.msra.mxu0 %v2024
        %2184 = vmatprep.subr.mxu0 0.0
        %2185 = vmatpush2.msra.mxu0 0.0
        %2186 = vmatprep.subr.mxu0 0.0
        %2187 = vmatpush2.msra.mxu0 0.0
        %2188 = vmatprep.subr.mxu0 0.0
        %2189 = vmatpush2.msra.mxu0 0.0
        %2190 = vmatprep.subr.mxu0 0.0
        %2191 = vmatpush2.msra.mxu0 0.0
        %2192 = vmatprep.subr.mxu0 0.0
        %2193 = vmatpush2.msra.mxu0 0.0
        %2194 = vmatprep.subr.mxu0 0.0
        %2195 = vmatpush2.msra.mxu0 0.0
        %2196 = vmatprep.subr.mxu0 0.0
        %2197 = vmatpush2.msra.mxu0 0.0
        %2198 = vmatprep.subr.mxu0 0.0
        %2199 = vmatpush2.msra.mxu0 0.0
        %2200 = vmatprep.subr.mxu0 0.0
        %2201 = vmatpush2.msra.mxu0 0.0
        %2202 = vmatprep.subr.mxu0 0.0
        %2203 = vmatpush2.msra.mxu0 0.0
        %2204 = vmatprep.subr.mxu0 0.0
        %2205 = vmatpush2.msra.mxu0 0.0
        %2206 = vmatprep.subr.mxu0 0.0
        %2207 = vmatpush2.msra.mxu0 0.0
        %2208 = vmatprep.subr.mxu0 0.0
        %2209 = vmatpush2.msra.mxu0 0.0
        %2210 = vmatprep.subr.mxu0 0.0
        %2211 = vmatpush2.msra.mxu0 0.0
        %2212 = vmatprep.subr.mxu0 0.0
        %2213 = vmatpush2.msra.mxu0 0.0
        %2214 = vmatprep.subr.mxu0 0.0
        %2215 = vmatpush2.msra.mxu0 0.0
        %2216 = vmatprep.mubr.f32.mxu0 0.0
        %2217 = vmatmul.mubr.f32.gmra.mxu0 %v2136
        %v2218 = vpop.f32.mrf.mxu0
        %v2219 = vadd.f32 %v2098, %v2218
        %v2220 = vpop.f32.mrf.mxu0
        %2221 = vmatprep.mubr.f32.mxu0 0.0
        %2222 = vmatmul.mubr.f32.gmra.mxu0 %v2138
        %v2223 = vpop.f32.mrf.mxu0
        %v2224 = vadd.f32 %v2103, %v2223
        %v2225 = vpop.f32.mrf.mxu0
        %2226 = vmatprep.mubr.f32.mxu0 0.0
        %2227 = vmatmul.mubr.f32.gmra.mxu0 %v2140
        %v2228 = vpop.f32.mrf.mxu0
        %v2229 = vadd.f32 %v2108, %v2228
        %v2230 = vpop.f32.mrf.mxu0
        %2231 = vmatprep.mubr.f32.mxu0 0.0
        %2232 = vmatmul.mubr.f32.gmra.mxu0 %v2142
        %v2233 = vpop.f32.mrf.mxu0
        %v2234 = vadd.f32 %v2113, %v2233
        %v2235 = vpop.f32.mrf.mxu0
        %2236 = vmatprep.mubr.f32.mxu0 0.0
        %2237 = vmatmul.mubr.f32.gmra.mxu0 %v2144
        %v2238 = vpop.f32.mrf.mxu0
        %v2239 = vadd.f32 %v2118, %v2238
        %v2240 = vpop.f32.mrf.mxu0
        %2241 = vmatprep.mubr.f32.mxu0 0.0
        %2242 = vmatmul.mubr.f32.gmra.mxu0 %v2146
        %v2243 = vpop.f32.mrf.mxu0
        %v2244 = vadd.f32 %v2123, %v2243
        %v2245 = vpop.f32.mrf.mxu0
        %2246 = vmatprep.mubr.f32.mxu0 0.0
        %2247 = vmatmul.mubr.f32.gmra.mxu0 %v2148
        %v2248 = vpop.f32.mrf.mxu0
        %v2249 = vadd.f32 %v2128, %v2248
        %v2250 = vpop.f32.mrf.mxu0
        %2251 = vmatprep.mubr.f32.mxu0 0.0
        %2252 = vmatmul.mubr.f32.gmra.mxu0 %v2150
        %v2253 = vpop.f32.mrf.mxu0
        %v2254 = vadd.f32 %v2133, %v2253
        %v2255 = vpop.f32.mrf.mxu0
        %2256 = vdwg.mxu0
        %s2257 = scalar_lea.vmem %s3, 1
        %v2258 = vld [vmem:[%s2257] sm:$0x1]
        %v2260 = vlaneseq
        %v2261 = vshrl.u32 %v2260, 7
        %v2262 = vsub.s32 0, %v2261
        %v2263 = vrot.slane %v2258, %v2262
        %v2265 = vmul.f32 %v1973, %v2263
        %v2266 = vmul.f32 %v1980, %v2263
        %v2267 = vmul.f32 %v1987, %v2263
        %v2268 = vmul.f32 %v1994, %v2263
        %v2269 = vmul.f32 %v2001, %v2263
        %v2270 = vmul.f32 %v2008, %v2263
        %v2271 = vmul.f32 %v2015, %v2263
        %v2272 = vmul.f32 %v2022, %v2263
        %v2273 = vadd.f32 %v2219, %v2265
        %v2274 = vadd.f32 %v2224, %v2266
        %v2275 = vadd.f32 %v2229, %v2267
        %v2276 = vadd.f32 %v2234, %v2268
        %v2277 = vadd.f32 %v2239, %v2269
        %v2278 = vadd.f32 %v2244, %v2270
        %v2279 = vadd.f32 %v2249, %v2271
        %v2280 = vadd.f32 %v2254, %v2272
        %s2281 = scalar_lea.vmem %s4, 1
        %v2282 = vld [vmem:[%s2281] sm:$0x1]
        %v2284 = vlaneseq
        %v2285 = vshrl.u32 %v2284, 7
        %v2286 = vsub.s32 0, %v2285
        %v2287 = vrot.slane %v2282, %v2286
        %v2289 = vadd.f32 %v2273, %v2287
        %v2290 = vadd.f32 %v2274, %v2287
        %v2291 = vadd.f32 %v2275, %v2287
        %v2292 = vadd.f32 %v2276, %v2287
        %v2293 = vadd.f32 %v2277, %v2287
        %v2294 = vadd.f32 %v2278, %v2287
        %v2295 = vadd.f32 %v2279, %v2287
        %v2296 = vadd.f32 %v2280, %v2287
        %vm2297 = vcmp.gt.f32.partialorder %v2289, 0.0
        %vm2298 = vcmp.gt.f32.partialorder %v2290, 0.0
        %vm2299 = vcmp.gt.f32.partialorder %v2291, 0.0
        %vm2300 = vcmp.gt.f32.partialorder %v2292, 0.0
        %vm2301 = vcmp.gt.f32.partialorder %v2293, 0.0
        %vm2302 = vcmp.gt.f32.partialorder %v2294, 0.0
        %vm2303 = vcmp.gt.f32.partialorder %v2295, 0.0
        %vm2304 = vcmp.gt.f32.partialorder %v2296, 0.0
        %v2305 = vmul.f32 %v2289, 0.2
        %v2306 = vmul.f32 %v2290, 0.2
        %v2307 = vmul.f32 %v2291, 0.2
        %v2308 = vmul.f32 %v2292, 0.2
        %v2309 = vmul.f32 %v2293, 0.2
        %v2310 = vmul.f32 %v2294, 0.2
        %v2311 = vmul.f32 %v2295, 0.2
        %v2312 = vmul.f32 %v2296, 0.2
        %v2313 = vsel %vm2297, %v2289, %v2305
        %v2314 = vsel %vm2298, %v2290, %v2306
        %v2315 = vsel %vm2299, %v2291, %v2307
        %v2316 = vsel %vm2300, %v2292, %v2308
        %v2317 = vsel %vm2301, %v2293, %v2309
        %v2318 = vsel %vm2302, %v2294, %v2310
        %v2319 = vsel %vm2303, %v2295, %v2311
        %v2320 = vsel %vm2304, %v2296, %v2312
        %s2321 = scalar_lea.vmem %s5, 128
        %v2322 = vld [vmem:[%s2321] sm:$0xff]
        %v2323 = vld [vmem:[%s2321 + $0x8] sm:$0xff]
        %v2324 = vld [vmem:[%s2321 + $0x10] sm:$0xff]
        %v2325 = vld [vmem:[%s2321 + $0x18] sm:$0xff]
        %v2326 = vld [vmem:[%s2321 + $0x20] sm:$0xff]
        %v2327 = vld [vmem:[%s2321 + $0x28] sm:$0xff]
        %v2328 = vld [vmem:[%s2321 + $0x30] sm:$0xff]
        %v2329 = vld [vmem:[%s2321 + $0x38] sm:$0xff]
        %v2330 = vld [vmem:[%s2321 + $0x40] sm:$0xff]
        %v2331 = vld [vmem:[%s2321 + $0x48] sm:$0xff]
        %v2332 = vld [vmem:[%s2321 + $0x50] sm:$0xff]
        %v2333 = vld [vmem:[%s2321 + $0x58] sm:$0xff]
        %v2334 = vld [vmem:[%s2321 + $0x60] sm:$0xff]
        %v2335 = vld [vmem:[%s2321 + $0x68] sm:$0xff]
        %v2336 = vld [vmem:[%s2321 + $0x70] sm:$0xff]
        %v2337 = vld [vmem:[%s2321 + $0x78] sm:$0xff]
        %s2338 = scalar_lea.vmem %s6, 1
        %v2339 = vld [vmem:[%s2338] sm:$0x1]
        %v2341 = vlaneseq
        %v2342 = vshrl.u32 %v2341, 7
        %v2343 = vsub.s32 0, %v2342
        %v2344 = vrot.slane %v2339, %v2343
        %2346 = vmatprep.subr.mxu0 0.0
        %2347 = vmatpush1.msra.mxu0 %v2337
        %2348 = vmatprep.subr.mxu0 0.0
        %2349 = vmatpush1.msra.mxu0 %v2336
        %2350 = vmatprep.subr.mxu0 0.0
        %2351 = vmatpush1.msra.mxu0 %v2335
        %2352 = vmatprep.subr.mxu0 0.0
        %2353 = vmatpush1.msra.mxu0 %v2334
        %2354 = vmatprep.subr.mxu0 0.0
        %2355 = vmatpush1.msra.mxu0 %v2333
        %2356 = vmatprep.subr.mxu0 0.0
        %2357 = vmatpush1.msra.mxu0 %v2332
        %2358 = vmatprep.subr.mxu0 0.0
        %2359 = vmatpush1.msra.mxu0 %v2331
        %2360 = vmatprep.subr.mxu0 0.0
        %2361 = vmatpush1.msra.mxu0 %v2330
        %2362 = vmatprep.subr.mxu0 0.0
        %2363 = vmatpush1.msra.mxu0 %v2329
        %2364 = vmatprep.subr.mxu0 0.0
        %2365 = vmatpush1.msra.mxu0 %v2328
        %2366 = vmatprep.subr.mxu0 0.0
        %2367 = vmatpush1.msra.mxu0 %v2327
        %2368 = vmatprep.subr.mxu0 0.0
        %2369 = vmatpush1.msra.mxu0 %v2326
        %2370 = vmatprep.subr.mxu0 0.0
        %2371 = vmatpush1.msra.mxu0 %v2325
        %2372 = vmatprep.subr.mxu0 0.0
        %2373 = vmatpush1.msra.mxu0 %v2324
        %2374 = vmatprep.subr.mxu0 0.0
        %2375 = vmatpush1.msra.mxu0 %v2323
        %2376 = vmatprep.subr.mxu0 0.0
        %2377 = vmatpush1.msra.mxu0 %v2322
        %2378 = vmatprep.subr.mxu0 0.0
        %2379 = vmatpush2.msra.mxu0 0.0
        %2380 = vmatprep.subr.mxu0 0.0
        %2381 = vmatpush2.msra.mxu0 0.0
        %2382 = vmatprep.subr.mxu0 0.0
        %2383 = vmatpush2.msra.mxu0 0.0
        %2384 = vmatprep.subr.mxu0 0.0
        %2385 = vmatpush2.msra.mxu0 0.0
        %2386 = vmatprep.subr.mxu0 0.0
        %2387 = vmatpush2.msra.mxu0 0.0
        %2388 = vmatprep.subr.mxu0 0.0
        %2389 = vmatpush2.msra.mxu0 0.0
        %2390 = vmatprep.subr.mxu0 0.0
        %2391 = vmatpush2.msra.mxu0 0.0
        %2392 = vmatprep.subr.mxu0 0.0
        %2393 = vmatpush2.msra.mxu0 0.0
        %2394 = vmatprep.subr.mxu0 0.0
        %2395 = vmatpush2.msra.mxu0 0.0
        %2396 = vmatprep.subr.mxu0 0.0
        %2397 = vmatpush2.msra.mxu0 0.0
        %2398 = vmatprep.subr.mxu0 0.0
        %2399 = vmatpush2.msra.mxu0 0.0
        %2400 = vmatprep.subr.mxu0 0.0
        %2401 = vmatpush2.msra.mxu0 0.0
        %2402 = vmatprep.subr.mxu0 0.0
        %2403 = vmatpush2.msra.mxu0 0.0
        %2404 = vmatprep.subr.mxu0 0.0
        %2405 = vmatpush2.msra.mxu0 0.0
        %2406 = vmatprep.subr.mxu0 0.0
        %2407 = vmatpush2.msra.mxu0 0.0
        %2408 = vmatprep.subr.mxu0 0.0
        %2409 = vmatpush2.msra.mxu0 0.0
        %2410 = vmatprep.mubr.f32.mxu0 0.0
        %2411 = vmatmul.mubr.f32.gmra.mxu0 %v2313
        %v2412 = vpop.f32.mrf.mxu0
        %v2413 = vadd.f32 %v2344, %v2412
        %v2414 = vpop.f32.mrf.mxu0
        %2415 = vmatprep.mubr.f32.mxu0 0.0
        %2416 = vmatmul.mubr.f32.gmra.mxu0 %v2314
        %v2417 = vpop.f32.mrf.mxu0
        %v2418 = vadd.f32 %v2344, %v2417
        %v2419 = vpop.f32.mrf.mxu0
        %2420 = vmatprep.mubr.f32.mxu0 0.0
        %2421 = vmatmul.mubr.f32.gmra.mxu0 %v2315
        %v2422 = vpop.f32.mrf.mxu0
        %v2423 = vadd.f32 %v2344, %v2422
        %v2424 = vpop.f32.mrf.mxu0
        %2425 = vmatprep.mubr.f32.mxu0 0.0
        %2426 = vmatmul.mubr.f32.gmra.mxu0 %v2316
        %v2427 = vpop.f32.mrf.mxu0
        %v2428 = vadd.f32 %v2344, %v2427
        %v2429 = vpop.f32.mrf.mxu0
        %2430 = vmatprep.mubr.f32.mxu0 0.0
        %2431 = vmatmul.mubr.f32.gmra.mxu0 %v2317
        %v2432 = vpop.f32.mrf.mxu0
        %v2433 = vadd.f32 %v2344, %v2432
        %v2434 = vpop.f32.mrf.mxu0
        %2435 = vmatprep.mubr.f32.mxu0 0.0
        %2436 = vmatmul.mubr.f32.gmra.mxu0 %v2318
        %v2437 = vpop.f32.mrf.mxu0
        %v2438 = vadd.f32 %v2344, %v2437
        %v2439 = vpop.f32.mrf.mxu0
        %2440 = vmatprep.mubr.f32.mxu0 0.0
        %2441 = vmatmul.mubr.f32.gmra.mxu0 %v2319
        %v2442 = vpop.f32.mrf.mxu0
        %v2443 = vadd.f32 %v2344, %v2442
        %v2444 = vpop.f32.mrf.mxu0
        %2445 = vmatprep.mubr.f32.mxu0 0.0
        %2446 = vmatmul.mubr.f32.gmra.mxu0 %v2320
        %v2447 = vpop.f32.mrf.mxu0
        %v2448 = vadd.f32 %v2344, %v2447
        %v2449 = vpop.f32.mrf.mxu0
        %2450 = vdwg.mxu0
        %vm2451 = vcmp.gt.f32.partialorder %v2413, 0.0
        %vm2452 = vcmp.gt.f32.partialorder %v2418, 0.0
        %vm2453 = vcmp.gt.f32.partialorder %v2423, 0.0
        %vm2454 = vcmp.gt.f32.partialorder %v2428, 0.0
        %vm2455 = vcmp.gt.f32.partialorder %v2433, 0.0
        %vm2456 = vcmp.gt.f32.partialorder %v2438, 0.0
        %vm2457 = vcmp.gt.f32.partialorder %v2443, 0.0
        %vm2458 = vcmp.gt.f32.partialorder %v2448, 0.0
        %v2459 = vmul.f32 %v2413, 0.2
        %v2460 = vmul.f32 %v2418, 0.2
        %v2461 = vmul.f32 %v2423, 0.2
        %v2462 = vmul.f32 %v2428, 0.2
        %v2463 = vmul.f32 %v2433, 0.2
        %v2464 = vmul.f32 %v2438, 0.2
        %v2465 = vmul.f32 %v2443, 0.2
        %v2466 = vmul.f32 %v2448, 0.2
        %v2467 = vsel %vm2451, %v2413, %v2459
        %v2468 = vsel %vm2452, %v2418, %v2460
        %v2469 = vsel %vm2453, %v2423, %v2461
        %v2470 = vsel %vm2454, %v2428, %v2462
        %v2471 = vsel %vm2455, %v2433, %v2463
        %v2472 = vsel %vm2456, %v2438, %v2464
        %v2473 = vsel %vm2457, %v2443, %v2465
        %v2474 = vsel %vm2458, %v2448, %v2466
        %v2475 = vsel %vm1206, %v2467, 0.0
        %v2476 = vrot.slane %v2475, 4
        %v2477 = vadd.f32 %v2475, %v2476
        %v2478 = vrot.slane %v2477, 2
        %v2479 = vadd.f32 %v2477, %v2478
        %v2480 = vrot.slane %v2479, 1
        %v2481 = vadd.f32 %v2479, %v2480
        %v2482 = vsel %vm1206, %v2468, 0.0
        %v2483 = vrot.slane %v2482, 4
        %v2484 = vadd.f32 %v2482, %v2483
        %v2485 = vrot.slane %v2484, 2
        %v2486 = vadd.f32 %v2484, %v2485
        %v2487 = vrot.slane %v2486, 1
        %v2488 = vadd.f32 %v2486, %v2487
        %v2489 = vsel %vm1206, %v2469, 0.0
        %v2490 = vrot.slane %v2489, 4
        %v2491 = vadd.f32 %v2489, %v2490
        %v2492 = vrot.slane %v2491, 2
        %v2493 = vadd.f32 %v2491, %v2492
        %v2494 = vrot.slane %v2493, 1
        %v2495 = vadd.f32 %v2493, %v2494
        %v2496 = vsel %vm1206, %v2470, 0.0
        %v2497 = vrot.slane %v2496, 4
        %v2498 = vadd.f32 %v2496, %v2497
        %v2499 = vrot.slane %v2498, 2
        %v2500 = vadd.f32 %v2498, %v2499
        %v2501 = vrot.slane %v2500, 1
        %v2502 = vadd.f32 %v2500, %v2501
        %v2503 = vsel %vm1206, %v2471, 0.0
        %v2504 = vrot.slane %v2503, 4
        %v2505 = vadd.f32 %v2503, %v2504
        %v2506 = vrot.slane %v2505, 2
        %v2507 = vadd.f32 %v2505, %v2506
        %v2508 = vrot.slane %v2507, 1
        %v2509 = vadd.f32 %v2507, %v2508
        %v2510 = vsel %vm1206, %v2472, 0.0
        %v2511 = vrot.slane %v2510, 4
        %v2512 = vadd.f32 %v2510, %v2511
        %v2513 = vrot.slane %v2512, 2
        %v2514 = vadd.f32 %v2512, %v2513
        %v2515 = vrot.slane %v2514, 1
        %v2516 = vadd.f32 %v2514, %v2515
        %v2517 = vsel %vm1206, %v2473, 0.0
        %v2518 = vrot.slane %v2517, 4
        %v2519 = vadd.f32 %v2517, %v2518
        %v2520 = vrot.slane %v2519, 2
        %v2521 = vadd.f32 %v2519, %v2520
        %v2522 = vrot.slane %v2521, 1
        %v2523 = vadd.f32 %v2521, %v2522
        %v2524 = vsel %vm1206, %v2474, 0.0
        %v2525 = vrot.slane %v2524, 4
        %v2526 = vadd.f32 %v2524, %v2525
        %v2527 = vrot.slane %v2526, 2
        %v2528 = vadd.f32 %v2526, %v2527
        %v2529 = vrot.slane %v2528, 1
        %v2530 = vadd.f32 %v2528, %v2529
        %2531 = vmatprep.subr.mxu0 0.0
        %2532 = vmatpush1.msra.mxu0 0.0
        %2533 = vmatprep.subr.mxu0 0.0
        %2534 = vmatpush1.msra.mxu0 0.0
        %2535 = vmatprep.subr.mxu0 0.0
        %2536 = vmatpush1.msra.mxu0 0.0
        %2537 = vmatprep.subr.mxu0 0.0
        %2538 = vmatpush1.msra.mxu0 0.0
        %2539 = vmatprep.subr.mxu0 0.0
        %2540 = vmatpush1.msra.mxu0 0.0
        %2541 = vmatprep.subr.mxu0 0.0
        %2542 = vmatpush1.msra.mxu0 0.0
        %2543 = vmatprep.subr.mxu0 0.0
        %2544 = vmatpush1.msra.mxu0 0.0
        %2545 = vmatprep.subr.mxu0 0.0
        %2546 = vmatpush1.msra.mxu0 0.0
        %2547 = vmatprep.subr.mxu0 0.0
        %2548 = vmatpush1.msra.mxu0 0.0
        %2549 = vmatprep.subr.mxu0 0.0
        %2550 = vmatpush1.msra.mxu0 0.0
        %2551 = vmatprep.subr.mxu0 0.0
        %2552 = vmatpush1.msra.mxu0 0.0
        %2553 = vmatprep.subr.mxu0 0.0
        %2554 = vmatpush1.msra.mxu0 0.0
        %2555 = vmatprep.subr.mxu0 0.0
        %2556 = vmatpush1.msra.mxu0 0.0
        %2557 = vmatprep.subr.mxu0 0.0
        %2558 = vmatpush1.msra.mxu0 0.0
        %2559 = vmatprep.subr.mxu0 0.0
        %2560 = vmatpush1.msra.mxu0 %v1268
        %2561 = vmatprep.subr.mxu0 0.0
        %2562 = vmatpush1.msra.mxu0 %v1267
        %2563 = vmatprep.subr.mxu0 0.0
        %2564 = vmatpush2.msra.mxu0 0.0
        %2565 = vmatprep.subr.mxu0 0.0
        %2566 = vmatpush2.msra.mxu0 0.0
        %2567 = vmatprep.subr.mxu0 0.0
        %2568 = vmatpush2.msra.mxu0 0.0
        %2569 = vmatprep.subr.mxu0 0.0
        %2570 = vmatpush2.msra.mxu0 0.0
        %2571 = vmatprep.subr.mxu0 0.0
        %2572 = vmatpush2.msra.mxu0 0.0
        %2573 = vmatprep.subr.mxu0 0.0
        %2574 = vmatpush2.msra.mxu0 0.0
        %2575 = vmatprep.subr.mxu0 0.0
        %2576 = vmatpush2.msra.mxu0 0.0
        %2577 = vmatprep.subr.mxu0 0.0
        %2578 = vmatpush2.msra.mxu0 0.0
        %2579 = vmatprep.subr.mxu0 0.0
        %2580 = vmatpush2.msra.mxu0 0.0
        %2581 = vmatprep.subr.mxu0 0.0
        %2582 = vmatpush2.msra.mxu0 0.0
        %2583 = vmatprep.subr.mxu0 0.0
        %2584 = vmatpush2.msra.mxu0 0.0
        %2585 = vmatprep.subr.mxu0 0.0
        %2586 = vmatpush2.msra.mxu0 0.0
        %2587 = vmatprep.subr.mxu0 0.0
        %2588 = vmatpush2.msra.mxu0 0.0
        %2589 = vmatprep.subr.mxu0 0.0
        %2590 = vmatpush2.msra.mxu0 0.0
        %2591 = vmatprep.subr.mxu0 0.0
        %2592 = vmatpush2.msra.mxu0 0.0
        %2593 = vmatprep.subr.mxu0 0.0
        %2594 = vmatpush2.msra.mxu0 0.0
        %2595 = vmatprep.mubr.f32.mxu0 0.0
        %2596 = vmatmul.mubr.f32.gmra.mxu0 %v2029
        %v2597 = vpop.f32.mrf.mxu0
        %v2598 = vadd.f32 0.0, %v2597
        %v2599 = vpop.f32.mrf.mxu0
        %2600 = vdwg.mxu0
        %v2609 = vsel %vm1347, %v2488, %v2481
        %v2610 = vsel %vm1349, %v2495, %v2609
        %v2611 = vsel %vm1351, %v2502, %v2610
        %v2612 = vsel %vm1353, %v2509, %v2611
        %v2613 = vsel %vm1355, %v2516, %v2612
        %v2614 = vsel %vm1357, %v2523, %v2613
        %v2615 = vsel %vm1359, %v2530, %v2614
        %v2616 = vsel %vm1206, %v2615, 0
        %2618 = vmatprep.subr.mxu0 0.0
        %2619 = vmatpush1.msra.mxu0 0.0
        %2620 = vmatprep.subr.mxu0 0.0
        %2621 = vmatpush1.msra.mxu0 0.0
        %2622 = vmatprep.subr.mxu0 0.0
        %2623 = vmatpush1.msra.mxu0 0.0
        %2624 = vmatprep.subr.mxu0 0.0
        %2625 = vmatpush1.msra.mxu0 0.0
        %2626 = vmatprep.subr.mxu0 0.0
        %2627 = vmatpush1.msra.mxu0 0.0
        %2628 = vmatprep.subr.mxu0 0.0
        %2629 = vmatpush1.msra.mxu0 0.0
        %2630 = vmatprep.subr.mxu0 0.0
        %2631 = vmatpush1.msra.mxu0 0.0
        %2632 = vmatprep.subr.mxu0 0.0
        %2633 = vmatpush1.msra.mxu0 0.0
        %2634 = vmatprep.subr.mxu0 0.0
        %2635 = vmatpush1.msra.mxu0 0.0
        %2636 = vmatprep.subr.mxu0 0.0
        %2637 = vmatpush1.msra.mxu0 0.0
        %2638 = vmatprep.subr.mxu0 0.0
        %2639 = vmatpush1.msra.mxu0 0.0
        %2640 = vmatprep.subr.mxu0 0.0
        %2641 = vmatpush1.msra.mxu0 0.0
        %2642 = vmatprep.subr.mxu0 0.0
        %2643 = vmatpush1.msra.mxu0 %v1266
        %2644 = vmatprep.subr.mxu0 0.0
        %2645 = vmatpush1.msra.mxu0 %v1265
        %2646 = vmatprep.subr.mxu0 0.0
        %2647 = vmatpush1.msra.mxu0 %v1264
        %2648 = vmatprep.subr.mxu0 0.0
        %2649 = vmatpush1.msra.mxu0 %v1263
        %2650 = vmatprep.subr.mxu0 0.0
        %2651 = vmatpush2.msra.mxu0 0.0
        %2652 = vmatprep.subr.mxu0 0.0
        %2653 = vmatpush2.msra.mxu0 0.0
        %2654 = vmatprep.subr.mxu0 0.0
        %2655 = vmatpush2.msra.mxu0 0.0
        %2656 = vmatprep.subr.mxu0 0.0
        %2657 = vmatpush2.msra.mxu0 0.0
        %2658 = vmatprep.subr.mxu0 0.0
        %2659 = vmatpush2.msra.mxu0 0.0
        %2660 = vmatprep.subr.mxu0 0.0
        %2661 = vmatpush2.msra.mxu0 0.0
        %2662 = vmatprep.subr.mxu0 0.0
        %2663 = vmatpush2.msra.mxu0 0.0
        %2664 = vmatprep.subr.mxu0 0.0
        %2665 = vmatpush2.msra.mxu0 0.0
        %2666 = vmatprep.subr.mxu0 0.0
        %2667 = vmatpush2.msra.mxu0 0.0
        %2668 = vmatprep.subr.mxu0 0.0
        %2669 = vmatpush2.msra.mxu0 0.0
        %2670 = vmatprep.subr.mxu0 0.0
        %2671 = vmatpush2.msra.mxu0 0.0
        %2672 = vmatprep.subr.mxu0 0.0
        %2673 = vmatpush2.msra.mxu0 0.0
        %2674 = vmatprep.subr.mxu0 0.0
        %2675 = vmatpush2.msra.mxu0 0.0
        %2676 = vmatprep.subr.mxu0 0.0
        %2677 = vmatpush2.msra.mxu0 0.0
        %2678 = vmatprep.subr.mxu0 0.0
        %2679 = vmatpush2.msra.mxu0 0.0
        %2680 = vmatprep.subr.mxu0 0.0
        %2681 = vmatpush2.msra.mxu0 0.0
        %2682 = vmatprep.mubr.f32.mxu0 0.0
        %2683 = vmatmul.mubr.f32.gmra.mxu0 %v2616
        %v2684 = vpop.f32.mrf.mxu0
        %v2685 = vadd.f32 %v2598, %v2684
        %v2686 = vpop.f32.mrf.mxu0
        %2687 = vdwg.mxu0
        %v2688 = vadd.f32 %v2685, %v1438
        %2689 = vmatprep.subr.mxu0 0.0
        %2690 = vmatpush1.msra.mxu0 0.0
        %2691 = vmatprep.subr.mxu0 0.0
        %2692 = vmatpush1.msra.mxu0 0.0
        %2693 = vmatprep.subr.mxu0 0.0
        %2694 = vmatpush1.msra.mxu0 0.0
        %2695 = vmatprep.subr.mxu0 0.0
        %2696 = vmatpush1.msra.mxu0 0.0
        %2697 = vmatprep.subr.mxu0 0.0
        %2698 = vmatpush1.msra.mxu0 0.0
        %2699 = vmatprep.subr.mxu0 0.0
        %2700 = vmatpush1.msra.mxu0 0.0
        %2701 = vmatprep.subr.mxu0 0.0
        %2702 = vmatpush1.msra.mxu0 0.0
        %2703 = vmatprep.subr.mxu0 0.0
        %2704 = vmatpush1.msra.mxu0 0.0
        %2705 = vmatprep.subr.mxu0 0.0
        %2706 = vmatpush1.msra.mxu0 0.0
        %2707 = vmatprep.subr.mxu0 0.0
        %2708 = vmatpush1.msra.mxu0 0.0
        %2709 = vmatprep.subr.mxu0 0.0
        %2710 = vmatpush1.msra.mxu0 0.0
        %2711 = vmatprep.subr.mxu0 0.0
        %2712 = vmatpush1.msra.mxu0 0.0
        %2713 = vmatprep.subr.mxu0 0.0
        %2714 = vmatpush1.msra.mxu0 %v1444
        %2715 = vmatprep.subr.mxu0 0.0
        %2716 = vmatpush1.msra.mxu0 %v1443
        %2717 = vmatprep.subr.mxu0 0.0
        %2718 = vmatpush1.msra.mxu0 %v1442
        %2719 = vmatprep.subr.mxu0 0.0
        %2720 = vmatpush1.msra.mxu0 %v1441
        %2721 = vmatprep.subr.mxu0 0.0
        %2722 = vmatpush2.msra.mxu0 0.0
        %2723 = vmatprep.subr.mxu0 0.0
        %2724 = vmatpush2.msra.mxu0 0.0
        %2725 = vmatprep.subr.mxu0 0.0
        %2726 = vmatpush2.msra.mxu0 0.0
        %2727 = vmatprep.subr.mxu0 0.0
        %2728 = vmatpush2.msra.mxu0 0.0
        %2729 = vmatprep.subr.mxu0 0.0
        %2730 = vmatpush2.msra.mxu0 0.0
        %2731 = vmatprep.subr.mxu0 0.0
        %2732 = vmatpush2.msra.mxu0 0.0
        %2733 = vmatprep.subr.mxu0 0.0
        %2734 = vmatpush2.msra.mxu0 0.0
        %2735 = vmatprep.subr.mxu0 0.0
        %2736 = vmatpush2.msra.mxu0 0.0
        %2737 = vmatprep.subr.mxu0 0.0
        %2738 = vmatpush2.msra.mxu0 0.0
        %2739 = vmatprep.subr.mxu0 0.0
        %2740 = vmatpush2.msra.mxu0 0.0
        %2741 = vmatprep.subr.mxu0 0.0
        %2742 = vmatpush2.msra.mxu0 0.0
        %2743 = vmatprep.subr.mxu0 0.0
        %2744 = vmatpush2.msra.mxu0 0.0
        %2745 = vmatprep.subr.mxu0 0.0
        %2746 = vmatpush2.msra.mxu0 0.0
        %2747 = vmatprep.subr.mxu0 0.0
        %2748 = vmatpush2.msra.mxu0 0.0
        %2749 = vmatprep.subr.mxu0 0.0
        %2750 = vmatpush2.msra.mxu0 0.0
        %2751 = vmatprep.subr.mxu0 0.0
        %2752 = vmatpush2.msra.mxu0 0.0
        %2753 = vmatprep.mubr.f32.mxu0 0.0
        %2754 = vmatmul.mubr.f32.gmra.mxu0 %v1568
        %v2755 = vpop.f32.mrf.mxu0
        %v2756 = vadd.f32 %v1450, %v2755
        %v2757 = vpop.f32.mrf.mxu0
        %2758 = vdwg.mxu0
        %v2759 = vadd.f32 %v2688, %v2756
        %v2760 = vxor.u32 %v2759, 2147483648
        %v2761 = vmul.f32 %v2760, 1.442695
        %v2762 = vpow.pop %v2761
        %v2763 = vadd.f32 %v2762, 1.0
        %v2764 = vrcp.pop %v2763
        %v2765 = vmul.f32 1.0, %v2764
        %2767 = vrot.lane.b32.xlu0 %v2756, 64
        %v2768 = vpop.permute.xlu0 %2767
        %v2770 = vmul.f32 %v2765, %v2768
        %2772 = vrot.lane.b32.xlu0 %v2770, 64
        %v2773 = vpop.permute.xlu0 %2772
        %v2775 = vadd.f32 %v2688, %v2773
        %v2776 = vtanh.pop %v2775
        %v2777 = vsub.f32 %v1553, %v2776
        %2779 = vrot.lane.b32.xlu0 %v2777, 96
        %v2780 = vpop.permute.xlu0 %2779
        %v2782 = vmul.f32 %v2765, %v2780
        %2784 = vrot.lane.b32.xlu0 %v2782, 32
        %v2785 = vpop.permute.xlu0 %2784
        %v2787 = vadd.f32 %v2776, %v2785
        %2789 = vrot.lane.b32.xlu0 %v2787, 64
        %v2790 = vpop.permute.xlu0 %2789
        %v2791 = vsel %vm1206, %v2790, 0
        %2793 = vmatprep.subr.mxu0 0.0
        %2794 = vmatpush1.msra.mxu0 0.0
        %2795 = vmatprep.subr.mxu0 0.0
        %2796 = vmatpush1.msra.mxu0 0.0
        %2797 = vmatprep.subr.mxu0 0.0
        %2798 = vmatpush1.msra.mxu0 0.0
        %2799 = vmatprep.subr.mxu0 0.0
        %2800 = vmatpush1.msra.mxu0 0.0
        %2801 = vmatprep.subr.mxu0 0.0
        %2802 = vmatpush1.msra.mxu0 0.0
        %2803 = vmatprep.subr.mxu0 0.0
        %2804 = vmatpush1.msra.mxu0 0.0
        %2805 = vmatprep.subr.mxu0 0.0
        %2806 = vmatpush1.msra.mxu0 0.0
        %2807 = vmatprep.subr.mxu0 0.0
        %2808 = vmatpush1.msra.mxu0 0.0
        %2809 = vmatprep.subr.mxu0 0.0
        %2810 = vmatpush1.msra.mxu0 0.0
        %2811 = vmatprep.subr.mxu0 0.0
        %2812 = vmatpush1.msra.mxu0 0.0
        %2813 = vmatprep.subr.mxu0 0.0
        %2814 = vmatpush1.msra.mxu0 0.0
        %2815 = vmatprep.subr.mxu0 0.0
        %2816 = vmatpush1.msra.mxu0 0.0
        %2817 = vmatprep.subr.mxu0 0.0
        %2818 = vmatpush1.msra.mxu0 %v1557
        %2819 = vmatprep.subr.mxu0 0.0
        %2820 = vmatpush1.msra.mxu0 %v1556
        %2821 = vmatprep.subr.mxu0 0.0
        %2822 = vmatpush1.msra.mxu0 %v1555
        %2823 = vmatprep.subr.mxu0 0.0
        %2824 = vmatpush1.msra.mxu0 %v1554
        %2825 = vmatprep.subr.mxu0 0.0
        %2826 = vmatpush2.msra.mxu0 0.0
        %2827 = vmatprep.subr.mxu0 0.0
        %2828 = vmatpush2.msra.mxu0 0.0
        %2829 = vmatprep.subr.mxu0 0.0
        %2830 = vmatpush2.msra.mxu0 0.0
        %2831 = vmatprep.subr.mxu0 0.0
        %2832 = vmatpush2.msra.mxu0 0.0
        %2833 = vmatprep.subr.mxu0 0.0
        %2834 = vmatpush2.msra.mxu0 0.0
        %2835 = vmatprep.subr.mxu0 0.0
        %2836 = vmatpush2.msra.mxu0 0.0
        %2837 = vmatprep.subr.mxu0 0.0
        %2838 = vmatpush2.msra.mxu0 0.0
        %2839 = vmatprep.subr.mxu0 0.0
        %2840 = vmatpush2.msra.mxu0 0.0
        %2841 = vmatprep.subr.mxu0 0.0
        %2842 = vmatpush2.msra.mxu0 0.0
        %2843 = vmatprep.subr.mxu0 0.0
        %2844 = vmatpush2.msra.mxu0 0.0
        %2845 = vmatprep.subr.mxu0 0.0
        %2846 = vmatpush2.msra.mxu0 0.0
        %2847 = vmatprep.subr.mxu0 0.0
        %2848 = vmatpush2.msra.mxu0 0.0
        %2849 = vmatprep.subr.mxu0 0.0
        %2850 = vmatpush2.msra.mxu0 0.0
        %2851 = vmatprep.subr.mxu0 0.0
        %2852 = vmatpush2.msra.mxu0 0.0
        %2853 = vmatprep.subr.mxu0 0.0
        %2854 = vmatpush2.msra.mxu0 0.0
        %2855 = vmatprep.subr.mxu0 0.0
        %2856 = vmatpush2.msra.mxu0 0.0
        %2857 = vmatprep.mubr.f32.mxu0 0.0
        %2858 = vmatmul.mubr.f32.gmra.mxu0 %v2791
        %v2859 = vpop.f32.mrf.mxu0
        %v2860 = vadd.f32 %v1563, %v2859
        %v2861 = vpop.f32.mrf.mxu0
        %2862 = vdwg.mxu0
        %2863 = vmatprep.subr.mxu0 0.0
        %2864 = vmatpush1.msra.mxu0 0.0
        %2865 = vmatprep.subr.mxu0 0.0
        %2866 = vmatpush1.msra.mxu0 0.0
        %2867 = vmatprep.subr.mxu0 0.0
        %2868 = vmatpush1.msra.mxu0 0.0
        %2869 = vmatprep.subr.mxu0 0.0
        %2870 = vmatpush1.msra.mxu0 0.0
        %2871 = vmatprep.subr.mxu0 0.0
        %2872 = vmatpush1.msra.mxu0 0.0
        %2873 = vmatprep.subr.mxu0 0.0
        %2874 = vmatpush1.msra.mxu0 0.0
        %2875 = vmatprep.subr.mxu0 0.0
        %2876 = vmatpush1.msra.mxu0 0.0
        %2877 = vmatprep.subr.mxu0 0.0
        %2878 = vmatpush1.msra.mxu0 0.0
        %2879 = vmatprep.subr.mxu0 0.0
        %2880 = vmatpush1.msra.mxu0 0.0
        %2881 = vmatprep.subr.mxu0 0.0
        %2882 = vmatpush1.msra.mxu0 0.0
        %2883 = vmatprep.subr.mxu0 0.0
        %2884 = vmatpush1.msra.mxu0 0.0
        %2885 = vmatprep.subr.mxu0 0.0
        %2886 = vmatpush1.msra.mxu0 0.0
        %2887 = vmatprep.subr.mxu0 0.0
        %2888 = vmatpush1.msra.mxu0 %v1643
        %2889 = vmatprep.subr.mxu0 0.0
        %2890 = vmatpush1.msra.mxu0 %v1642
        %2891 = vmatprep.subr.mxu0 0.0
        %2892 = vmatpush1.msra.mxu0 %v1641
        %2893 = vmatprep.subr.mxu0 0.0
        %2894 = vmatpush1.msra.mxu0 %v1640
        %2895 = vmatprep.subr.mxu0 0.0
        %2896 = vmatpush2.msra.mxu0 0.0
        %2897 = vmatprep.subr.mxu0 0.0
        %2898 = vmatpush2.msra.mxu0 0.0
        %2899 = vmatprep.subr.mxu0 0.0
        %2900 = vmatpush2.msra.mxu0 0.0
        %2901 = vmatprep.subr.mxu0 0.0
        %2902 = vmatpush2.msra.mxu0 0.0
        %2903 = vmatprep.subr.mxu0 0.0
        %2904 = vmatpush2.msra.mxu0 0.0
        %2905 = vmatprep.subr.mxu0 0.0
        %2906 = vmatpush2.msra.mxu0 0.0
        %2907 = vmatprep.subr.mxu0 0.0
        %2908 = vmatpush2.msra.mxu0 0.0
        %2909 = vmatprep.subr.mxu0 0.0
        %2910 = vmatpush2.msra.mxu0 0.0
        %2911 = vmatprep.subr.mxu0 0.0
        %2912 = vmatpush2.msra.mxu0 0.0
        %2913 = vmatprep.subr.mxu0 0.0
        %2914 = vmatpush2.msra.mxu0 0.0
        %2915 = vmatprep.subr.mxu0 0.0
        %2916 = vmatpush2.msra.mxu0 0.0
        %2917 = vmatprep.subr.mxu0 0.0
        %2918 = vmatpush2.msra.mxu0 0.0
        %2919 = vmatprep.subr.mxu0 0.0
        %2920 = vmatpush2.msra.mxu0 0.0
        %2921 = vmatprep.subr.mxu0 0.0
        %2922 = vmatpush2.msra.mxu0 0.0
        %2923 = vmatprep.subr.mxu0 0.0
        %2924 = vmatpush2.msra.mxu0 0.0
        %2925 = vmatprep.subr.mxu0 0.0
        %2926 = vmatpush2.msra.mxu0 0.0
        %2927 = vmatprep.mubr.f32.mxu0 0.0
        %2928 = vmatmul.mubr.f32.gmra.mxu0 %v1764
        %v2929 = vpop.f32.mrf.mxu0
        %v2930 = vadd.f32 %v1649, %v2929
        %v2931 = vpop.f32.mrf.mxu0
        %2932 = vdwg.mxu0
        %v2933 = vadd.f32 %v2860, %v2930
        %v2934 = vxor.u32 %v2933, 2147483648
        %v2935 = vmul.f32 %v2934, 1.442695
        %v2936 = vpow.pop %v2935
        %v2937 = vadd.f32 %v2936, 1.0
        %v2938 = vrcp.pop %v2937
        %v2939 = vmul.f32 1.0, %v2938
        %2941 = vrot.lane.b32.xlu0 %v2930, 64
        %v2942 = vpop.permute.xlu0 %2941
        %v2944 = vmul.f32 %v2939, %v2942
        %2946 = vrot.lane.b32.xlu0 %v2944, 64
        %v2947 = vpop.permute.xlu0 %2946
        %v2949 = vadd.f32 %v2860, %v2947
        %v2950 = vtanh.pop %v2949
        %v2951 = vsub.f32 %v1749, %v2950
        %2953 = vrot.lane.b32.xlu0 %v2951, 96
        %v2954 = vpop.permute.xlu0 %2953
        %v2956 = vmul.f32 %v2939, %v2954
        %2958 = vrot.lane.b32.xlu0 %v2956, 32
        %v2959 = vpop.permute.xlu0 %2958
        %v2961 = vadd.f32 %v2950, %v2959
        %2963 = vrot.lane.b32.xlu0 %v2961, 64
        %v2964 = vpop.permute.xlu0 %2963
        %v2965 = vsel %vm1206, %v2964, 0
        %2967 = vmatprep.subr.mxu0 0.0
        %2968 = vmatpush1.msra.mxu0 0.0
        %2969 = vmatprep.subr.mxu0 0.0
        %2970 = vmatpush1.msra.mxu0 0.0
        %2971 = vmatprep.subr.mxu0 0.0
        %2972 = vmatpush1.msra.mxu0 0.0
        %2973 = vmatprep.subr.mxu0 0.0
        %2974 = vmatpush1.msra.mxu0 0.0
        %2975 = vmatprep.subr.mxu0 0.0
        %2976 = vmatpush1.msra.mxu0 0.0
        %2977 = vmatprep.subr.mxu0 0.0
        %2978 = vmatpush1.msra.mxu0 0.0
        %2979 = vmatprep.subr.mxu0 0.0
        %2980 = vmatpush1.msra.mxu0 0.0
        %2981 = vmatprep.subr.mxu0 0.0
        %2982 = vmatpush1.msra.mxu0 0.0
        %2983 = vmatprep.subr.mxu0 0.0
        %2984 = vmatpush1.msra.mxu0 0.0
        %2985 = vmatprep.subr.mxu0 0.0
        %2986 = vmatpush1.msra.mxu0 0.0
        %2987 = vmatprep.subr.mxu0 0.0
        %2988 = vmatpush1.msra.mxu0 0.0
        %2989 = vmatprep.subr.mxu0 0.0
        %2990 = vmatpush1.msra.mxu0 0.0
        %2991 = vmatprep.subr.mxu0 0.0
        %2992 = vmatpush1.msra.mxu0 %v1753
        %2993 = vmatprep.subr.mxu0 0.0
        %2994 = vmatpush1.msra.mxu0 %v1752
        %2995 = vmatprep.subr.mxu0 0.0
        %2996 = vmatpush1.msra.mxu0 %v1751
        %2997 = vmatprep.subr.mxu0 0.0
        %2998 = vmatpush1.msra.mxu0 %v1750
        %2999 = vmatprep.subr.mxu0 0.0
        %3000 = vmatpush2.msra.mxu0 0.0
        %3001 = vmatprep.subr.mxu0 0.0
        %3002 = vmatpush2.msra.mxu0 0.0
        %3003 = vmatprep.subr.mxu0 0.0
        %3004 = vmatpush2.msra.mxu0 0.0
        %3005 = vmatprep.subr.mxu0 0.0
        %3006 = vmatpush2.msra.mxu0 0.0
        %3007 = vmatprep.subr.mxu0 0.0
        %3008 = vmatpush2.msra.mxu0 0.0
        %3009 = vmatprep.subr.mxu0 0.0
        %3010 = vmatpush2.msra.mxu0 0.0
        %3011 = vmatprep.subr.mxu0 0.0
        %3012 = vmatpush2.msra.mxu0 0.0
        %3013 = vmatprep.subr.mxu0 0.0
        %3014 = vmatpush2.msra.mxu0 0.0
        %3015 = vmatprep.subr.mxu0 0.0
        %3016 = vmatpush2.msra.mxu0 0.0
        %3017 = vmatprep.subr.mxu0 0.0
        %3018 = vmatpush2.msra.mxu0 0.0
        %3019 = vmatprep.subr.mxu0 0.0
        %3020 = vmatpush2.msra.mxu0 0.0
        %3021 = vmatprep.subr.mxu0 0.0
        %3022 = vmatpush2.msra.mxu0 0.0
        %3023 = vmatprep.subr.mxu0 0.0
        %3024 = vmatpush2.msra.mxu0 0.0
        %3025 = vmatprep.subr.mxu0 0.0
        %3026 = vmatpush2.msra.mxu0 0.0
        %3027 = vmatprep.subr.mxu0 0.0
        %3028 = vmatpush2.msra.mxu0 0.0
        %3029 = vmatprep.subr.mxu0 0.0
        %3030 = vmatpush2.msra.mxu0 0.0
        %3031 = vmatprep.mubr.f32.mxu0 0.0
        %3032 = vmatmul.mubr.f32.gmra.mxu0 %v2965
        %v3033 = vpop.f32.mrf.mxu0
        %v3034 = vadd.f32 %v1759, %v3033
        %v3035 = vpop.f32.mrf.mxu0
        %3036 = vdwg.mxu0
        %v3037 = vtanh.pop %v3034
        %3038 = vst.msk [vmem:[%s566] sm:$0xff] %vm763, %v3037
        %s3039 = sand.u32 %s423, 1
        %s3040 = scalar_lea.sflag [#allocation3], %s3039
        %s3041 = sand.u32 %s423, 1
        %s3042 = smul.addr %s3041, 8
        %s3043 = scalar_lea.vmem [#allocation2], %s3042
        // Predicated region
        $region93: #{simple_gru_forward.1} parent=91 // pred_check
          %p3044 = pneg %p433
        $region94: #{simple_gru_forward.1} parent=91 // pred_check_branch
          %3046 = sbr.rel (%p3044) target = $region96
        $region95: #{simple_gru_forward.1} parent=91 // pred_region
          %s3048 = ssub.s32 128, 128
          %3049 = vsyncadd %s3040, %s3048
          %s3050 = smul.addr %s32, 128
          %s3051 = scalar_lea.hbm %s18, %s3050
          %s3053 = sshll.u32 %s3043, 4
          %s3054 = int_to_ptr.vmem [resolvable:$true] %s3053
          %3056 = dma.vmem_to_hbm [thread:$0]  %s3054, 128, %s3051, %s3040
        $region96: #{simple_gru_forward.1} parent=91 // pred_fallthru
          _
      $region92: #{simple_gru_forward.1} parent=5 // pred_fallthru
        _
      %p3057 = scmp.le.s32.totalorder 2, %s27
      // Predicated region
      $region97: #{simple_gru_forward.1} parent=5 // pred_check
        %p3058 = pneg %p3057
      $region98: #{simple_gru_forward.1} parent=5 // pred_check_branch
        %3060 = sbr.rel (%p3058) target = $region100
      $region99: #{simple_gru_forward.1} parent=5 // pred_region
        %s3061 = ssub.s32 %s27, 2
        // Predicated region
        $region101: #{simple_gru_forward.1} parent=99 // pred_check
          %p3062 = pneg %p439
        $region102: #{simple_gru_forward.1} parent=99 // pred_check_branch
          %3064 = sbr.rel (%p3062) target = $region104
        $region103: #{simple_gru_forward.1} parent=99 // pred_region
          %s3065 = sand.u32 %s424, 1
          %s3066 = scalar_lea.sflag [#allocation3], %s3065
          %s3067 = sand.u32 %s424, 1
          %s3068 = smul.addr %s3067, 8
          %s3069 = scalar_lea.vmem [#allocation2], %s3068
          %3070 = dma.done %s3066, 128
        $region104: #{simple_gru_forward.1} parent=99 // pred_fallthru
          _
      $region100: #{simple_gru_forward.1} parent=5 // pred_fallthru
        _
    $region6: #{simple_gru_forward.1} parent=1 // loop_footer
      %s31 = sadd.s32 1, %s27
    $region7: #{simple_gru_forward.1} parent=1 // loop_footer_branch
      %26 = sbr.rel target = $region3
    $region8: #{simple_gru_forward.1} parent=1 // loop_exit
      _
    %3071 = vsyncpa [#allocation3], 1
    %s3072 = scalar_lea.sflag [#allocation3], 1
    %3073 = vsyncpa %s3072, 1

</llo_original>
